<compile_context>
chip_gen: v5e
topology: v5e:2x2
jax: 0.10.0
libtpu: 0.0.40
codegen_flags: <defaults>
</compile_context>

<pallas_src>
import jax
import jax.numpy as jnp
from jax.experimental import pallas as pl
from jax.experimental.pallas import tpu as pltpu

_LANE = 1024                     # lane-dense last dim (multiple of 128)
_TILE_BYTES = 6 * 1024 * 1024    # ~6 MiB per block; 2x(in+out) bufs ~ 24 MiB VMEM
_VMEM_LIMIT = 48 * 1024 * 1024   # explicit scoped-VMEM budget (< v7x 64 MiB phys)
_SMALL_FALLBACK = 64 * 1024      # elements; below this, launch overhead dominates


def _sigmoid_kernel(x_ref, o_ref):
    # Compute in f32 (safe on all generations incl. v5e); exp lands on the EUP
    # slot; single downcast on store.  Math micro-opts are pointless here:
    # the kernel is HBM-bound.
    x = x_ref[...].astype(jnp.float32)
    o_ref[...] = (1.0 / (1.0 + jnp.exp(-x))).astype(o_ref.dtype)


def _default_block_rows(itemsize: int) -> int:
    # Keep bytes-per-grid-step ~constant across dtypes (bf16 gets 2x rows).
    rows = _TILE_BYTES // (_LANE * itemsize)
    return max(8, (rows // 8) * 8)


def sjm_forward(x_nchw: jax.Array, block_rows: int | None = None) -> jax.Array:
    """Elementwise sigmoid matching SJM.forward semantics (any shape/dtype)."""
    orig_shape = x_nchw.shape
    dtype = x_nchw.dtype
    total = x_nchw.size

    # Fallback path: tiny inputs, or totals that don't form a lane-dense
    # (rows, 1024) view.  XLA's fused sigmoid is one read + one write at HBM
    # roofline, so this avoids *all* wrapper-side pad/slice/concat passes and
    # the pallas_call fixed cost.
    if total < _SMALL_FALLBACK or total % _LANE != 0:
        return jax.nn.sigmoid(x_nchw)

    itemsize = jnp.dtype(dtype).itemsize
    rows = total // _LANE
    if block_rows is None:
        block_rows = _default_block_rows(itemsize)
    block_rows = min(block_rows, rows)   # single full-extent block if small

    # Contiguous reshape: pure metadata change, no HBM traffic.
    flat2d = x_nchw.reshape(rows, _LANE)

    grid = (pl.cdiv(rows, block_rows),)  # ragged final block handled by Pallas

    out2d = pl.pallas_call(
        _sigmoid_kernel,
        out_shape=jax.ShapeDtypeStruct((rows, _LANE), dtype),
        grid=grid,
        in_specs=[pl.BlockSpec((block_rows, _LANE), lambda i: (i, 0))],
        out_specs=pl.BlockSpec((block_rows, _LANE), lambda i: (i, 0)),
        compiler_params=pltpu.CompilerParams(
            # Row-blocks are independent -> shard across TensorCores on v7x;
            # harmless on single-core v5e/v6e.
            dimension_semantics=("parallel",),
            # Explicit budget so the larger tiles don't trip v5e's 16 MiB /
            # v7x's 32 MiB scoped-VMEM defaults.
            vmem_limit_bytes=_VMEM_LIMIT,
        ),
        cost_estimate=pl.CostEstimate(
            flops=4 * total,
            transcendentals=total,
            bytes_accessed=2 * total * itemsize,
        ),
    )(flat2d)

    return out2d.reshape(orig_shape)


if __name__ == "__main__":
    key = jax.random.PRNGKey(0)
    k0, k1, k2 = jax.random.split(key, 3)

    # Main case: NCHW input shaped like torch.reshape(input, (-1, 1, 2, 2)).
    # 262144 elements -> (256, 1024) lane-dense view, single-block kernel path.
    x = jax.random.normal(k0, (65536, 1, 2, 2), dtype=jnp.float32)
    y = jax.block_until_ready(sjm_forward(x))
    assert y.shape == x.shape and y.dtype == x.dtype
    assert jnp.allclose(y, jax.nn.sigmoid(x), atol=1e-6, rtol=1e-6)

    # Multi-block + ragged-final-block path (no padding; OOB stores dropped):
    # force small row-blocks so grid > 1 without needing a large tensor.
    y_multi = jax.block_until_ready(sjm_forward(x, block_rows=96))
    assert jnp.allclose(y_multi, jax.nn.sigmoid(x), atol=1e-6, rtol=1e-6)

    # Awkward total (not a multiple of 1024 lanes) -> roofline JAX fallback,
    # no pad/slice/concat extra passes.
    x_odd = jax.random.normal(k1, (16385, 1, 2, 2), dtype=jnp.float32)
    y_odd = jax.block_until_ready(sjm_forward(x_odd))
    assert jnp.allclose(y_odd, jax.nn.sigmoid(x_odd), atol=1e-6, rtol=1e-6)

    # Tiny case (like the reference's 32-element preamble): size-gated fallback.
    x_tiny = jax.random.normal(k2, (8, 1, 2, 2), dtype=jnp.float32)
    y_tiny = jax.block_until_ready(sjm_forward(x_tiny))
    assert jnp.allclose(y_tiny, jax.nn.sigmoid(x_tiny), atol=1e-6, rtol=1e-6)

    # bf16 case: doubled block_rows (constant bytes/step), f32 compute inside
    # the kernel, downcast only on store.
    x_bf16 = x.astype(jnp.bfloat16)
    y_bf16 = jax.block_until_ready(sjm_forward(x_bf16))
    assert y_bf16.shape == x_bf16.shape and y_bf16.dtype == jnp.bfloat16
    assert jnp.allclose(
        y_bf16.astype(jnp.float32),
        jax.nn.sigmoid(x_bf16.astype(jnp.float32)),
        atol=2e-2, rtol=2e-2,
    )

    print("KERNEL_OK")
</pallas_src>

<mosaic_0001>
module attributes {stable_mosaic.version = 11 : i64} {
  func.func @_sigmoid_kernel(%arg0: i32, %arg1: memref<256x1024xf32, #tpu.memory_space<vmem>>, %arg2: memref<256x1024xf32, #tpu.memory_space<vmem>>) attributes {dimension_semantics = [#tpu.dimension_semantics<parallel>], iteration_bounds = array<i64: 1>, scalar_prefetch = 0 : i64, scratch_operands = 0 : i64, tpu.core_type = #tpu.core_type<tc>, window_params = [{transform_indices = @transform_0, window_bounds = array<i64: 256, 1024>}, {transform_indices = @transform_1, window_bounds = array<i64: 256, 1024>}]} {
    %c0 = arith.constant 0 : index
    %c0_0 = arith.constant 0 : index
    %0 = vector.load %arg1[%c0, %c0_0] : memref<256x1024xf32, #tpu.memory_space<vmem>>, vector<256x1024xf32>
    %cst = arith.constant 0.000000e+00 : f32
    %1 = vector.broadcast %cst : f32 to vector<256x1024xf32>
    %2 = arith.subf %1, %0 : vector<256x1024xf32>
    %3 = math.exp %2 : vector<256x1024xf32>
    %cst_1 = arith.constant 1.000000e+00 : f32
    %4 = vector.broadcast %cst_1 : f32 to vector<256x1024xf32>
    %5 = arith.addf %4, %3 : vector<256x1024xf32>
    %cst_2 = arith.constant 1.000000e+00 : f32
    %6 = vector.broadcast %cst_2 : f32 to vector<256x1024xf32>
    %7 = arith.divf %6, %5 : vector<256x1024xf32>
    %c0_3 = arith.constant 0 : index
    %c0_4 = arith.constant 0 : index
    %8 = vector.load %arg2[%c0_3, %c0_4] : memref<256x1024xf32, #tpu.memory_space<vmem>>, vector<256x1024xf32>
    tpu.vector_store %arg2[%c0_3, %c0_4], %7 {strides = array<i32>} : memref<256x1024xf32, #tpu.memory_space<vmem>>, vector<256x1024xf32>,
    return
  }
  func.func @transform_0(%arg0: i32) -> (i32, i32) {
    %c0_i32 = arith.constant 0 : i32
    %c0_i32_0 = arith.constant 0 : i32
    return %arg0, %c0_i32 : i32, i32
  }
  func.func @transform_1(%arg0: i32) -> (i32, i32) {
    %c0_i32 = arith.constant 0 : i32
    %c0_i32_0 = arith.constant 0 : i32
    return %arg0, %c0_i32 : i32, i32
  }
}

</mosaic_0001>

<llo_original>
// kernel: tpu_custom_call.1
$region0: #{tpu_custom_call.1}
  #allocation0 [shape = 'u32[]', space=smem, size = 0x4, offset = 0x4, fixed_abs, tag = 'smem constant byte address 0x4 - core index']
  #allocation1 [shape = 'u32[72,128]{1,0:T(1,128)}', space=vmem, size = 0x9000, scoped, tag = 'internal scratch']
  %s0 = inlined_call_operand.hbm [shape: f32[256,1024], index: 0, kind: input, shape index: {}]
  %s1 = inlined_call_operand.hbm [shape: f32[256,1024], index: 1, kind: output, shape index: {}]
  %s2 = sld [smem:[#allocation0]]
  $region18: #{tpu_custom_call.1} parent=0
    _
  %s4 = ssub.s32 1, %s2
  %s5 = scalar_select 0, %s4, %s2
  $region1: #{tpu_custom_call.1} parent=0
    #allocation2 [shape = 'u8[1048576]{0}', space=vmem, size = 0x100000, scoped, tag = 'input window, operand 0, single buffered']
    #allocation3 [shape = 's32[1]{0}', space=sflag, size = 0x4, scoped, tag = 'scoped memory for tpu_custom_call.1']
    #allocation4 [shape = 's32[1]{0}', space=sflag, size = 0x4, scoped, tag = 'scoped memory for tpu_custom_call.1']
    #allocation5 [shape = 'u8[1048576]{0}', space=vmem, size = 0x100000, scoped, tag = 'output window, operand 0, single buffered']
    %6 = vsyncpa [#allocation3], 0
    %7 = vsyncpa [#allocation4], 0
    // Predicated region
    $region2: #{tpu_custom_call.1} parent=1 // pred_check
      _
    $region3: #{tpu_custom_call.1} parent=1 // pred_check_branch
      %9 = sbr.rel (0) target = $region5
    $region4: #{tpu_custom_call.1} parent=1 // pred_region
      %11 = vsyncadd [#allocation3], 0
      %s12 = sshll.u32 %s0, 4
      %s13 = int_to_ptr.hbm [resolvable:$true] %s12
      %s14 = sshll.u32 [#allocation2], 4
      %s15 = int_to_ptr.vmem [resolvable:$true] %s14
      %20 = dma.hbm_to_vmem [thread:$0]  %s13, 32768, %s15, [#allocation3], 1024, 1024, 64
    $region5: #{tpu_custom_call.1} parent=1 // pred_fallthru
      _
    // Predicated region
    $region6: #{tpu_custom_call.1} parent=1 // pred_check
      _
    $region7: #{tpu_custom_call.1} parent=1 // pred_check_branch
      %22 = sbr.rel (0) target = $region9
    $region8: #{tpu_custom_call.1} parent=1 // pred_region
      %24 = dma.done [#allocation3], 32768
    $region9: #{tpu_custom_call.1} parent=1 // pred_fallthru
      _
    %v25 = vld [vmem:[#allocation2] sm:$0xff]
    %v26 = vld [vmem:[#allocation2 + $0x8] sm:$0xff]
    %v27 = vld [vmem:[#allocation2 + $0x10] sm:$0xff]
    %v28 = vld [vmem:[#allocation2 + $0x18] sm:$0xff]
    %v29 = vld [vmem:[#allocation2 + $0x20] sm:$0xff]
    %v30 = vld [vmem:[#allocation2 + $0x28] sm:$0xff]
    %v31 = vld [vmem:[#allocation2 + $0x30] sm:$0xff]
    %v32 = vld [vmem:[#allocation2 + $0x38] sm:$0xff]
    %v33 = vld [vmem:[#allocation2 + $0x40] sm:$0xff]
    %v34 = vld [vmem:[#allocation2 + $0x48] sm:$0xff]
    %v35 = vld [vmem:[#allocation2 + $0x50] sm:$0xff]
    %v36 = vld [vmem:[#allocation2 + $0x58] sm:$0xff]
    %v37 = vld [vmem:[#allocation2 + $0x60] sm:$0xff]
    %v38 = vld [vmem:[#allocation2 + $0x68] sm:$0xff]
    %v39 = vld [vmem:[#allocation2 + $0x70] sm:$0xff]
    %v40 = vld [vmem:[#allocation2 + $0x78] sm:$0xff]
    %v41 = vld [vmem:[#allocation2 + $0x80] sm:$0xff]
    %v42 = vld [vmem:[#allocation2 + $0x88] sm:$0xff]
    %v43 = vld [vmem:[#allocation2 + $0x90] sm:$0xff]
    %v44 = vld [vmem:[#allocation2 + $0x98] sm:$0xff]
    %v45 = vld [vmem:[#allocation2 + $0xa0] sm:$0xff]
    %v46 = vld [vmem:[#allocation2 + $0xa8] sm:$0xff]
    %v47 = vld [vmem:[#allocation2 + $0xb0] sm:$0xff]
    %v48 = vld [vmem:[#allocation2 + $0xb8] sm:$0xff]
    %v49 = vld [vmem:[#allocation2 + $0xc0] sm:$0xff]
    %v50 = vld [vmem:[#allocation2 + $0xc8] sm:$0xff]
    %v51 = vld [vmem:[#allocation2 + $0xd0] sm:$0xff]
    %v52 = vld [vmem:[#allocation2 + $0xd8] sm:$0xff]
    %v53 = vld [vmem:[#allocation2 + $0xe0] sm:$0xff]
    %v54 = vld [vmem:[#allocation2 + $0xe8] sm:$0xff]
    %v55 = vld [vmem:[#allocation2 + $0xf0] sm:$0xff]
    %v56 = vld [vmem:[#allocation2 + $0xf8] sm:$0xff]
    %v57 = vld [vmem:[#allocation2 + $0x100] sm:$0xff]
    %v58 = vld [vmem:[#allocation2 + $0x108] sm:$0xff]
    %v59 = vld [vmem:[#allocation2 + $0x110] sm:$0xff]
    %v60 = vld [vmem:[#allocation2 + $0x118] sm:$0xff]
    %v61 = vld [vmem:[#allocation2 + $0x120] sm:$0xff]
    %v62 = vld [vmem:[#allocation2 + $0x128] sm:$0xff]
    %v63 = vld [vmem:[#allocation2 + $0x130] sm:$0xff]
    %v64 = vld [vmem:[#allocation2 + $0x138] sm:$0xff]
    %v65 = vld [vmem:[#allocation2 + $0x140] sm:$0xff]
    %v66 = vld [vmem:[#allocation2 + $0x148] sm:$0xff]
    %v67 = vld [vmem:[#allocation2 + $0x150] sm:$0xff]
    %v68 = vld [vmem:[#allocation2 + $0x158] sm:$0xff]
    %v69 = vld [vmem:[#allocation2 + $0x160] sm:$0xff]
    %v70 = vld [vmem:[#allocation2 + $0x168] sm:$0xff]
    %v71 = vld [vmem:[#allocation2 + $0x170] sm:$0xff]
    %v72 = vld [vmem:[#allocation2 + $0x178] sm:$0xff]
    %v73 = vld [vmem:[#allocation2 + $0x180] sm:$0xff]
    %v74 = vld [vmem:[#allocation2 + $0x188] sm:$0xff]
    %v75 = vld [vmem:[#allocation2 + $0x190] sm:$0xff]
    %v76 = vld [vmem:[#allocation2 + $0x198] sm:$0xff]
    %v77 = vld [vmem:[#allocation2 + $0x1a0] sm:$0xff]
    %v78 = vld [vmem:[#allocation2 + $0x1a8] sm:$0xff]
    %v79 = vld [vmem:[#allocation2 + $0x1b0] sm:$0xff]
    %v80 = vld [vmem:[#allocation2 + $0x1b8] sm:$0xff]
    %v81 = vld [vmem:[#allocation2 + $0x1c0] sm:$0xff]
    %v82 = vld [vmem:[#allocation2 + $0x1c8] sm:$0xff]
    %v83 = vld [vmem:[#allocation2 + $0x1d0] sm:$0xff]
    %v84 = vld [vmem:[#allocation2 + $0x1d8] sm:$0xff]
    %v85 = vld [vmem:[#allocation2 + $0x1e0] sm:$0xff]
    %v86 = vld [vmem:[#allocation2 + $0x1e8] sm:$0xff]
    %v87 = vld [vmem:[#allocation2 + $0x1f0] sm:$0xff]
    %v88 = vld [vmem:[#allocation2 + $0x1f8] sm:$0xff]
    %v89 = vld [vmem:[#allocation2 + $0x200] sm:$0xff]
    %v90 = vld [vmem:[#allocation2 + $0x208] sm:$0xff]
    %v91 = vld [vmem:[#allocation2 + $0x210] sm:$0xff]
    %v92 = vld [vmem:[#allocation2 + $0x218] sm:$0xff]
    %v93 = vld [vmem:[#allocation2 + $0x220] sm:$0xff]
    %v94 = vld [vmem:[#allocation2 + $0x228] sm:$0xff]
    %v95 = vld [vmem:[#allocation2 + $0x230] sm:$0xff]
    %v96 = vld [vmem:[#allocation2 + $0x238] sm:$0xff]
    %v97 = vld [vmem:[#allocation2 + $0x240] sm:$0xff]
    %v98 = vld [vmem:[#allocation2 + $0x248] sm:$0xff]
    %v99 = vld [vmem:[#allocation2 + $0x250] sm:$0xff]
    %v100 = vld [vmem:[#allocation2 + $0x258] sm:$0xff]
    %v101 = vld [vmem:[#allocation2 + $0x260] sm:$0xff]
    %v102 = vld [vmem:[#allocation2 + $0x268] sm:$0xff]
    %v103 = vld [vmem:[#allocation2 + $0x270] sm:$0xff]
    %v104 = vld [vmem:[#allocation2 + $0x278] sm:$0xff]
    %v105 = vld [vmem:[#allocation2 + $0x280] sm:$0xff]
    %v106 = vld [vmem:[#allocation2 + $0x288] sm:$0xff]
    %v107 = vld [vmem:[#allocation2 + $0x290] sm:$0xff]
    %v108 = vld [vmem:[#allocation2 + $0x298] sm:$0xff]
    %v109 = vld [vmem:[#allocation2 + $0x2a0] sm:$0xff]
    %v110 = vld [vmem:[#allocation2 + $0x2a8] sm:$0xff]
    %v111 = vld [vmem:[#allocation2 + $0x2b0] sm:$0xff]
    %v112 = vld [vmem:[#allocation2 + $0x2b8] sm:$0xff]
    %v113 = vld [vmem:[#allocation2 + $0x2c0] sm:$0xff]
    %v114 = vld [vmem:[#allocation2 + $0x2c8] sm:$0xff]
    %v115 = vld [vmem:[#allocation2 + $0x2d0] sm:$0xff]
    %v116 = vld [vmem:[#allocation2 + $0x2d8] sm:$0xff]
    %v117 = vld [vmem:[#allocation2 + $0x2e0] sm:$0xff]
    %v118 = vld [vmem:[#allocation2 + $0x2e8] sm:$0xff]
    %v119 = vld [vmem:[#allocation2 + $0x2f0] sm:$0xff]
    %v120 = vld [vmem:[#allocation2 + $0x2f8] sm:$0xff]
    %v121 = vld [vmem:[#allocation2 + $0x300] sm:$0xff]
    %v122 = vld [vmem:[#allocation2 + $0x308] sm:$0xff]
    %v123 = vld [vmem:[#allocation2 + $0x310] sm:$0xff]
    %v124 = vld [vmem:[#allocation2 + $0x318] sm:$0xff]
    %v125 = vld [vmem:[#allocation2 + $0x320] sm:$0xff]
    %v126 = vld [vmem:[#allocation2 + $0x328] sm:$0xff]
    %v127 = vld [vmem:[#allocation2 + $0x330] sm:$0xff]
    %v128 = vld [vmem:[#allocation2 + $0x338] sm:$0xff]
    %v129 = vld [vmem:[#allocation2 + $0x340] sm:$0xff]
    %v130 = vld [vmem:[#allocation2 + $0x348] sm:$0xff]
    %v131 = vld [vmem:[#allocation2 + $0x350] sm:$0xff]
    %v132 = vld [vmem:[#allocation2 + $0x358] sm:$0xff]
    %v133 = vld [vmem:[#allocation2 + $0x360] sm:$0xff]
    %v134 = vld [vmem:[#allocation2 + $0x368] sm:$0xff]
    %v135 = vld [vmem:[#allocation2 + $0x370] sm:$0xff]
    %v136 = vld [vmem:[#allocation2 + $0x378] sm:$0xff]
    %v137 = vld [vmem:[#allocation2 + $0x380] sm:$0xff]
    %v138 = vld [vmem:[#allocation2 + $0x388] sm:$0xff]
    %v139 = vld [vmem:[#allocation2 + $0x390] sm:$0xff]
    %v140 = vld [vmem:[#allocation2 + $0x398] sm:$0xff]
    %v141 = vld [vmem:[#allocation2 + $0x3a0] sm:$0xff]
    %v142 = vld [vmem:[#allocation2 + $0x3a8] sm:$0xff]
    %v143 = vld [vmem:[#allocation2 + $0x3b0] sm:$0xff]
    %v144 = vld [vmem:[#allocation2 + $0x3b8] sm:$0xff]
    %v145 = vld [vmem:[#allocation2 + $0x3c0] sm:$0xff]
    %v146 = vld [vmem:[#allocation2 + $0x3c8] sm:$0xff]
    %v147 = vld [vmem:[#allocation2 + $0x3d0] sm:$0xff]
    %v148 = vld [vmem:[#allocation2 + $0x3d8] sm:$0xff]
    %v149 = vld [vmem:[#allocation2 + $0x3e0] sm:$0xff]
    %v150 = vld [vmem:[#allocation2 + $0x3e8] sm:$0xff]
    %v151 = vld [vmem:[#allocation2 + $0x3f0] sm:$0xff]
    %v152 = vld [vmem:[#allocation2 + $0x3f8] sm:$0xff]
    %v153 = vld [vmem:[#allocation2 + $0x400] sm:$0xff]
    %v154 = vld [vmem:[#allocation2 + $0x408] sm:$0xff]
    %v155 = vld [vmem:[#allocation2 + $0x410] sm:$0xff]
    %v156 = vld [vmem:[#allocation2 + $0x418] sm:$0xff]
    %v157 = vld [vmem:[#allocation2 + $0x420] sm:$0xff]
    %v158 = vld [vmem:[#allocation2 + $0x428] sm:$0xff]
    %v159 = vld [vmem:[#allocation2 + $0x430] sm:$0xff]
    %v160 = vld [vmem:[#allocation2 + $0x438] sm:$0xff]
    %v161 = vld [vmem:[#allocation2 + $0x440] sm:$0xff]
    %v162 = vld [vmem:[#allocation2 + $0x448] sm:$0xff]
    %v163 = vld [vmem:[#allocation2 + $0x450] sm:$0xff]
    %v164 = vld [vmem:[#allocation2 + $0x458] sm:$0xff]
    %v165 = vld [vmem:[#allocation2 + $0x460] sm:$0xff]
    %v166 = vld [vmem:[#allocation2 + $0x468] sm:$0xff]
    %v167 = vld [vmem:[#allocation2 + $0x470] sm:$0xff]
    %v168 = vld [vmem:[#allocation2 + $0x478] sm:$0xff]
    %v169 = vld [vmem:[#allocation2 + $0x480] sm:$0xff]
    %v170 = vld [vmem:[#allocation2 + $0x488] sm:$0xff]
    %v171 = vld [vmem:[#allocation2 + $0x490] sm:$0xff]
    %v172 = vld [vmem:[#allocation2 + $0x498] sm:$0xff]
    %v173 = vld [vmem:[#allocation2 + $0x4a0] sm:$0xff]
    %v174 = vld [vmem:[#allocation2 + $0x4a8] sm:$0xff]
    %v175 = vld [vmem:[#allocation2 + $0x4b0] sm:$0xff]
    %v176 = vld [vmem:[#allocation2 + $0x4b8] sm:$0xff]
    %v177 = vld [vmem:[#allocation2 + $0x4c0] sm:$0xff]
    %v178 = vld [vmem:[#allocation2 + $0x4c8] sm:$0xff]
    %v179 = vld [vmem:[#allocation2 + $0x4d0] sm:$0xff]
    %v180 = vld [vmem:[#allocation2 + $0x4d8] sm:$0xff]
    %v181 = vld [vmem:[#allocation2 + $0x4e0] sm:$0xff]
    %v182 = vld [vmem:[#allocation2 + $0x4e8] sm:$0xff]
    %v183 = vld [vmem:[#allocation2 + $0x4f0] sm:$0xff]
    %v184 = vld [vmem:[#allocation2 + $0x4f8] sm:$0xff]
    %v185 = vld [vmem:[#allocation2 + $0x500] sm:$0xff]
    %v186 = vld [vmem:[#allocation2 + $0x508] sm:$0xff]
    %v187 = vld [vmem:[#allocation2 + $0x510] sm:$0xff]
    %v188 = vld [vmem:[#allocation2 + $0x518] sm:$0xff]
    %v189 = vld [vmem:[#allocation2 + $0x520] sm:$0xff]
    %v190 = vld [vmem:[#allocation2 + $0x528] sm:$0xff]
    %v191 = vld [vmem:[#allocation2 + $0x530] sm:$0xff]
    %v192 = vld [vmem:[#allocation2 + $0x538] sm:$0xff]
    %v193 = vld [vmem:[#allocation2 + $0x540] sm:$0xff]
    %v194 = vld [vmem:[#allocation2 + $0x548] sm:$0xff]
    %v195 = vld [vmem:[#allocation2 + $0x550] sm:$0xff]
    %v196 = vld [vmem:[#allocation2 + $0x558] sm:$0xff]
    %v197 = vld [vmem:[#allocation2 + $0x560] sm:$0xff]
    %v198 = vld [vmem:[#allocation2 + $0x568] sm:$0xff]
    %v199 = vld [vmem:[#allocation2 + $0x570] sm:$0xff]
    %v200 = vld [vmem:[#allocation2 + $0x578] sm:$0xff]
    %v201 = vld [vmem:[#allocation2 + $0x580] sm:$0xff]
    %v202 = vld [vmem:[#allocation2 + $0x588] sm:$0xff]
    %v203 = vld [vmem:[#allocation2 + $0x590] sm:$0xff]
    %v204 = vld [vmem:[#allocation2 + $0x598] sm:$0xff]
    %v205 = vld [vmem:[#allocation2 + $0x5a0] sm:$0xff]
    %v206 = vld [vmem:[#allocation2 + $0x5a8] sm:$0xff]
    %v207 = vld [vmem:[#allocation2 + $0x5b0] sm:$0xff]
    %v208 = vld [vmem:[#allocation2 + $0x5b8] sm:$0xff]
    %v209 = vld [vmem:[#allocation2 + $0x5c0] sm:$0xff]
    %v210 = vld [vmem:[#allocation2 + $0x5c8] sm:$0xff]
    %v211 = vld [vmem:[#allocation2 + $0x5d0] sm:$0xff]
    %v212 = vld [vmem:[#allocation2 + $0x5d8] sm:$0xff]
    %v213 = vld [vmem:[#allocation2 + $0x5e0] sm:$0xff]
    %v214 = vld [vmem:[#allocation2 + $0x5e8] sm:$0xff]
    %v215 = vld [vmem:[#allocation2 + $0x5f0] sm:$0xff]
    %v216 = vld [vmem:[#allocation2 + $0x5f8] sm:$0xff]
    %v217 = vld [vmem:[#allocation2 + $0x600] sm:$0xff]
    %v218 = vld [vmem:[#allocation2 + $0x608] sm:$0xff]
    %v219 = vld [vmem:[#allocation2 + $0x610] sm:$0xff]
    %v220 = vld [vmem:[#allocation2 + $0x618] sm:$0xff]
    %v221 = vld [vmem:[#allocation2 + $0x620] sm:$0xff]
    %v222 = vld [vmem:[#allocation2 + $0x628] sm:$0xff]
    %v223 = vld [vmem:[#allocation2 + $0x630] sm:$0xff]
    %v224 = vld [vmem:[#allocation2 + $0x638] sm:$0xff]
    %v225 = vld [vmem:[#allocation2 + $0x640] sm:$0xff]
    %v226 = vld [vmem:[#allocation2 + $0x648] sm:$0xff]
    %v227 = vld [vmem:[#allocation2 + $0x650] sm:$0xff]
    %v228 = vld [vmem:[#allocation2 + $0x658] sm:$0xff]
    %v229 = vld [vmem:[#allocation2 + $0x660] sm:$0xff]
    %v230 = vld [vmem:[#allocation2 + $0x668] sm:$0xff]
    %v231 = vld [vmem:[#allocation2 + $0x670] sm:$0xff]
    %v232 = vld [vmem:[#allocation2 + $0x678] sm:$0xff]
    %v233 = vld [vmem:[#allocation2 + $0x680] sm:$0xff]
    %v234 = vld [vmem:[#allocation2 + $0x688] sm:$0xff]
    %v235 = vld [vmem:[#allocation2 + $0x690] sm:$0xff]
    %v236 = vld [vmem:[#allocation2 + $0x698] sm:$0xff]
    %v237 = vld [vmem:[#allocation2 + $0x6a0] sm:$0xff]
    %v238 = vld [vmem:[#allocation2 + $0x6a8] sm:$0xff]
    %v239 = vld [vmem:[#allocation2 + $0x6b0] sm:$0xff]
    %v240 = vld [vmem:[#allocation2 + $0x6b8] sm:$0xff]
    %v241 = vld [vmem:[#allocation2 + $0x6c0] sm:$0xff]
    %v242 = vld [vmem:[#allocation2 + $0x6c8] sm:$0xff]
    %v243 = vld [vmem:[#allocation2 + $0x6d0] sm:$0xff]
    %v244 = vld [vmem:[#allocation2 + $0x6d8] sm:$0xff]
    %v245 = vld [vmem:[#allocation2 + $0x6e0] sm:$0xff]
    %v246 = vld [vmem:[#allocation2 + $0x6e8] sm:$0xff]
    %v247 = vld [vmem:[#allocation2 + $0x6f0] sm:$0xff]
    %v248 = vld [vmem:[#allocation2 + $0x6f8] sm:$0xff]
    %v249 = vld [vmem:[#allocation2 + $0x700] sm:$0xff]
    %v250 = vld [vmem:[#allocation2 + $0x708] sm:$0xff]
    %v251 = vld [vmem:[#allocation2 + $0x710] sm:$0xff]
    %v252 = vld [vmem:[#allocation2 + $0x718] sm:$0xff]
    %v253 = vld [vmem:[#allocation2 + $0x720] sm:$0xff]
    %v254 = vld [vmem:[#allocation2 + $0x728] sm:$0xff]
    %v255 = vld [vmem:[#allocation2 + $0x730] sm:$0xff]
    %v256 = vld [vmem:[#allocation2 + $0x738] sm:$0xff]
    %v257 = vld [vmem:[#allocation2 + $0x740] sm:$0xff]
    %v258 = vld [vmem:[#allocation2 + $0x748] sm:$0xff]
    %v259 = vld [vmem:[#allocation2 + $0x750] sm:$0xff]
    %v260 = vld [vmem:[#allocation2 + $0x758] sm:$0xff]
    %v261 = vld [vmem:[#allocation2 + $0x760] sm:$0xff]
    %v262 = vld [vmem:[#allocation2 + $0x768] sm:$0xff]
    %v263 = vld [vmem:[#allocation2 + $0x770] sm:$0xff]
    %v264 = vld [vmem:[#allocation2 + $0x778] sm:$0xff]
    %v265 = vld [vmem:[#allocation2 + $0x780] sm:$0xff]
    %v266 = vld [vmem:[#allocation2 + $0x788] sm:$0xff]
    %v267 = vld [vmem:[#allocation2 + $0x790] sm:$0xff]
    %v268 = vld [vmem:[#allocation2 + $0x798] sm:$0xff]
    %v269 = vld [vmem:[#allocation2 + $0x7a0] sm:$0xff]
    %v270 = vld [vmem:[#allocation2 + $0x7a8] sm:$0xff]
    %v271 = vld [vmem:[#allocation2 + $0x7b0] sm:$0xff]
    %v272 = vld [vmem:[#allocation2 + $0x7b8] sm:$0xff]
    %v273 = vld [vmem:[#allocation2 + $0x7c0] sm:$0xff]
    %v274 = vld [vmem:[#allocation2 + $0x7c8] sm:$0xff]
    %v275 = vld [vmem:[#allocation2 + $0x7d0] sm:$0xff]
    %v276 = vld [vmem:[#allocation2 + $0x7d8] sm:$0xff]
    %v277 = vld [vmem:[#allocation2 + $0x7e0] sm:$0xff]
    %v278 = vld [vmem:[#allocation2 + $0x7e8] sm:$0xff]
    %v279 = vld [vmem:[#allocation2 + $0x7f0] sm:$0xff]
    %v280 = vld [vmem:[#allocation2 + $0x7f8] sm:$0xff]
    %v281 = vsub.f32 0.0, %v25
    %v282 = vsub.f32 0.0, %v26
    %v283 = vsub.f32 0.0, %v27
    %v284 = vsub.f32 0.0, %v28
    %v285 = vsub.f32 0.0, %v29
    %v286 = vsub.f32 0.0, %v30
    %v287 = vsub.f32 0.0, %v31
    %v288 = vsub.f32 0.0, %v32
    %v289 = vsub.f32 0.0, %v33
    %v290 = vsub.f32 0.0, %v34
    %v291 = vsub.f32 0.0, %v35
    %v292 = vsub.f32 0.0, %v36
    %v293 = vsub.f32 0.0, %v37
    %v294 = vsub.f32 0.0, %v38
    %v295 = vsub.f32 0.0, %v39
    %v296 = vsub.f32 0.0, %v40
    %v297 = vsub.f32 0.0, %v41
    %v298 = vsub.f32 0.0, %v42
    %v299 = vsub.f32 0.0, %v43
    %v300 = vsub.f32 0.0, %v44
    %v301 = vsub.f32 0.0, %v45
    %v302 = vsub.f32 0.0, %v46
    %v303 = vsub.f32 0.0, %v47
    %v304 = vsub.f32 0.0, %v48
    %v305 = vsub.f32 0.0, %v49
    %v306 = vsub.f32 0.0, %v50
    %v307 = vsub.f32 0.0, %v51
    %v308 = vsub.f32 0.0, %v52
    %v309 = vsub.f32 0.0, %v53
    %v310 = vsub.f32 0.0, %v54
    %v311 = vsub.f32 0.0, %v55
    %v312 = vsub.f32 0.0, %v56
    %v313 = vsub.f32 0.0, %v57
    %v314 = vsub.f32 0.0, %v58
    %v315 = vsub.f32 0.0, %v59
    %v316 = vsub.f32 0.0, %v60
    %v317 = vsub.f32 0.0, %v61
    %v318 = vsub.f32 0.0, %v62
    %v319 = vsub.f32 0.0, %v63
    %v320 = vsub.f32 0.0, %v64
    %v321 = vsub.f32 0.0, %v65
    %v322 = vsub.f32 0.0, %v66
    %v323 = vsub.f32 0.0, %v67
    %v324 = vsub.f32 0.0, %v68
    %v325 = vsub.f32 0.0, %v69
    %v326 = vsub.f32 0.0, %v70
    %v327 = vsub.f32 0.0, %v71
    %v328 = vsub.f32 0.0, %v72
    %v329 = vsub.f32 0.0, %v73
    %v330 = vsub.f32 0.0, %v74
    %v331 = vsub.f32 0.0, %v75
    %v332 = vsub.f32 0.0, %v76
    %v333 = vsub.f32 0.0, %v77
    %v334 = vsub.f32 0.0, %v78
    %v335 = vsub.f32 0.0, %v79
    %v336 = vsub.f32 0.0, %v80
    %v337 = vsub.f32 0.0, %v81
    %v338 = vsub.f32 0.0, %v82
    %v339 = vsub.f32 0.0, %v83
    %v340 = vsub.f32 0.0, %v84
    %v341 = vsub.f32 0.0, %v85
    %v342 = vsub.f32 0.0, %v86
    %v343 = vsub.f32 0.0, %v87
    %v344 = vsub.f32 0.0, %v88
    %v345 = vsub.f32 0.0, %v89
    %v346 = vsub.f32 0.0, %v90
    %v347 = vsub.f32 0.0, %v91
    %v348 = vsub.f32 0.0, %v92
    %v349 = vsub.f32 0.0, %v93
    %v350 = vsub.f32 0.0, %v94
    %v351 = vsub.f32 0.0, %v95
    %v352 = vsub.f32 0.0, %v96
    %v353 = vsub.f32 0.0, %v97
    %v354 = vsub.f32 0.0, %v98
    %v355 = vsub.f32 0.0, %v99
    %v356 = vsub.f32 0.0, %v100
    %v357 = vsub.f32 0.0, %v101
    %v358 = vsub.f32 0.0, %v102
    %v359 = vsub.f32 0.0, %v103
    %v360 = vsub.f32 0.0, %v104
    %v361 = vsub.f32 0.0, %v105
    %v362 = vsub.f32 0.0, %v106
    %v363 = vsub.f32 0.0, %v107
    %v364 = vsub.f32 0.0, %v108
    %v365 = vsub.f32 0.0, %v109
    %v366 = vsub.f32 0.0, %v110
    %v367 = vsub.f32 0.0, %v111
    %v368 = vsub.f32 0.0, %v112
    %v369 = vsub.f32 0.0, %v113
    %v370 = vsub.f32 0.0, %v114
    %v371 = vsub.f32 0.0, %v115
    %v372 = vsub.f32 0.0, %v116
    %v373 = vsub.f32 0.0, %v117
    %v374 = vsub.f32 0.0, %v118
    %v375 = vsub.f32 0.0, %v119
    %v376 = vsub.f32 0.0, %v120
    %v377 = vsub.f32 0.0, %v121
    %v378 = vsub.f32 0.0, %v122
    %v379 = vsub.f32 0.0, %v123
    %v380 = vsub.f32 0.0, %v124
    %v381 = vsub.f32 0.0, %v125
    %v382 = vsub.f32 0.0, %v126
    %v383 = vsub.f32 0.0, %v127
    %v384 = vsub.f32 0.0, %v128
    %v385 = vsub.f32 0.0, %v129
    %v386 = vsub.f32 0.0, %v130
    %v387 = vsub.f32 0.0, %v131
    %v388 = vsub.f32 0.0, %v132
    %v389 = vsub.f32 0.0, %v133
    %v390 = vsub.f32 0.0, %v134
    %v391 = vsub.f32 0.0, %v135
    %v392 = vsub.f32 0.0, %v136
    %v393 = vsub.f32 0.0, %v137
    %v394 = vsub.f32 0.0, %v138
    %v395 = vsub.f32 0.0, %v139
    %v396 = vsub.f32 0.0, %v140
    %v397 = vsub.f32 0.0, %v141
    %v398 = vsub.f32 0.0, %v142
    %v399 = vsub.f32 0.0, %v143
    %v400 = vsub.f32 0.0, %v144
    %v401 = vsub.f32 0.0, %v145
    %v402 = vsub.f32 0.0, %v146
    %v403 = vsub.f32 0.0, %v147
    %v404 = vsub.f32 0.0, %v148
    %v405 = vsub.f32 0.0, %v149
    %v406 = vsub.f32 0.0, %v150
    %v407 = vsub.f32 0.0, %v151
    %v408 = vsub.f32 0.0, %v152
    %v409 = vsub.f32 0.0, %v153
    %v410 = vsub.f32 0.0, %v154
    %v411 = vsub.f32 0.0, %v155
    %v412 = vsub.f32 0.0, %v156
    %v413 = vsub.f32 0.0, %v157
    %v414 = vsub.f32 0.0, %v158
    %v415 = vsub.f32 0.0, %v159
    %v416 = vsub.f32 0.0, %v160
    %v417 = vsub.f32 0.0, %v161
    %v418 = vsub.f32 0.0, %v162
    %v419 = vsub.f32 0.0, %v163
    %v420 = vsub.f32 0.0, %v164
    %v421 = vsub.f32 0.0, %v165
    %v422 = vsub.f32 0.0, %v166
    %v423 = vsub.f32 0.0, %v167
    %v424 = vsub.f32 0.0, %v168
    %v425 = vsub.f32 0.0, %v169
    %v426 = vsub.f32 0.0, %v170
    %v427 = vsub.f32 0.0, %v171
    %v428 = vsub.f32 0.0, %v172
    %v429 = vsub.f32 0.0, %v173
    %v430 = vsub.f32 0.0, %v174
    %v431 = vsub.f32 0.0, %v175
    %v432 = vsub.f32 0.0, %v176
    %v433 = vsub.f32 0.0, %v177
    %v434 = vsub.f32 0.0, %v178
    %v435 = vsub.f32 0.0, %v179
    %v436 = vsub.f32 0.0, %v180
    %v437 = vsub.f32 0.0, %v181
    %v438 = vsub.f32 0.0, %v182
    %v439 = vsub.f32 0.0, %v183
    %v440 = vsub.f32 0.0, %v184
    %v441 = vsub.f32 0.0, %v185
    %v442 = vsub.f32 0.0, %v186
    %v443 = vsub.f32 0.0, %v187
    %v444 = vsub.f32 0.0, %v188
    %v445 = vsub.f32 0.0, %v189
    %v446 = vsub.f32 0.0, %v190
    %v447 = vsub.f32 0.0, %v191
    %v448 = vsub.f32 0.0, %v192
    %v449 = vsub.f32 0.0, %v193
    %v450 = vsub.f32 0.0, %v194
    %v451 = vsub.f32 0.0, %v195
    %v452 = vsub.f32 0.0, %v196
    %v453 = vsub.f32 0.0, %v197
    %v454 = vsub.f32 0.0, %v198
    %v455 = vsub.f32 0.0, %v199
    %v456 = vsub.f32 0.0, %v200
    %v457 = vsub.f32 0.0, %v201
    %v458 = vsub.f32 0.0, %v202
    %v459 = vsub.f32 0.0, %v203
    %v460 = vsub.f32 0.0, %v204
    %v461 = vsub.f32 0.0, %v205
    %v462 = vsub.f32 0.0, %v206
    %v463 = vsub.f32 0.0, %v207
    %v464 = vsub.f32 0.0, %v208
    %v465 = vsub.f32 0.0, %v209
    %v466 = vsub.f32 0.0, %v210
    %v467 = vsub.f32 0.0, %v211
    %v468 = vsub.f32 0.0, %v212
    %v469 = vsub.f32 0.0, %v213
    %v470 = vsub.f32 0.0, %v214
    %v471 = vsub.f32 0.0, %v215
    %v472 = vsub.f32 0.0, %v216
    %v473 = vsub.f32 0.0, %v217
    %v474 = vsub.f32 0.0, %v218
    %v475 = vsub.f32 0.0, %v219
    %v476 = vsub.f32 0.0, %v220
    %v477 = vsub.f32 0.0, %v221
    %v478 = vsub.f32 0.0, %v222
    %v479 = vsub.f32 0.0, %v223
    %v480 = vsub.f32 0.0, %v224
    %v481 = vsub.f32 0.0, %v225
    %v482 = vsub.f32 0.0, %v226
    %v483 = vsub.f32 0.0, %v227
    %v484 = vsub.f32 0.0, %v228
    %v485 = vsub.f32 0.0, %v229
    %v486 = vsub.f32 0.0, %v230
    %v487 = vsub.f32 0.0, %v231
    %v488 = vsub.f32 0.0, %v232
    %v489 = vsub.f32 0.0, %v233
    %v490 = vsub.f32 0.0, %v234
    %v491 = vsub.f32 0.0, %v235
    %v492 = vsub.f32 0.0, %v236
    %v493 = vsub.f32 0.0, %v237
    %v494 = vsub.f32 0.0, %v238
    %v495 = vsub.f32 0.0, %v239
    %v496 = vsub.f32 0.0, %v240
    %v497 = vsub.f32 0.0, %v241
    %v498 = vsub.f32 0.0, %v242
    %v499 = vsub.f32 0.0, %v243
    %v500 = vsub.f32 0.0, %v244
    %v501 = vsub.f32 0.0, %v245
    %v502 = vsub.f32 0.0, %v246
    %v503 = vsub.f32 0.0, %v247
    %v504 = vsub.f32 0.0, %v248
    %v505 = vsub.f32 0.0, %v249
    %v506 = vsub.f32 0.0, %v250
    %v507 = vsub.f32 0.0, %v251
    %v508 = vsub.f32 0.0, %v252
    %v509 = vsub.f32 0.0, %v253
    %v510 = vsub.f32 0.0, %v254
    %v511 = vsub.f32 0.0, %v255
    %v512 = vsub.f32 0.0, %v256
    %v513 = vsub.f32 0.0, %v257
    %v514 = vsub.f32 0.0, %v258
    %v515 = vsub.f32 0.0, %v259
    %v516 = vsub.f32 0.0, %v260
    %v517 = vsub.f32 0.0, %v261
    %v518 = vsub.f32 0.0, %v262
    %v519 = vsub.f32 0.0, %v263
    %v520 = vsub.f32 0.0, %v264
    %v521 = vsub.f32 0.0, %v265
    %v522 = vsub.f32 0.0, %v266
    %v523 = vsub.f32 0.0, %v267
    %v524 = vsub.f32 0.0, %v268
    %v525 = vsub.f32 0.0, %v269
    %v526 = vsub.f32 0.0, %v270
    %v527 = vsub.f32 0.0, %v271
    %v528 = vsub.f32 0.0, %v272
    %v529 = vsub.f32 0.0, %v273
    %v530 = vsub.f32 0.0, %v274
    %v531 = vsub.f32 0.0, %v275
    %v532 = vsub.f32 0.0, %v276
    %v533 = vsub.f32 0.0, %v277
    %v534 = vsub.f32 0.0, %v278
    %v535 = vsub.f32 0.0, %v279
    %v536 = vsub.f32 0.0, %v280
    %v537 = vmul.f32 %v281, 1.442695
    %v538 = vpow.pop %v537
    %v539 = vmul.f32 %v282, 1.442695
    %v540 = vpow.pop %v539
    %v541 = vmul.f32 %v283, 1.442695
    %v542 = vpow.pop %v541
    %v543 = vmul.f32 %v284, 1.442695
    %v544 = vpow.pop %v543
    %v545 = vmul.f32 %v285, 1.442695
    %v546 = vpow.pop %v545
    %v547 = vmul.f32 %v286, 1.442695
    %v548 = vpow.pop %v547
    %v549 = vmul.f32 %v287, 1.442695
    %v550 = vpow.pop %v549
    %v551 = vmul.f32 %v288, 1.442695
    %v552 = vpow.pop %v551
    %v553 = vmul.f32 %v289, 1.442695
    %v554 = vpow.pop %v553
    %v555 = vmul.f32 %v290, 1.442695
    %v556 = vpow.pop %v555
    %v557 = vmul.f32 %v291, 1.442695
    %v558 = vpow.pop %v557
    %v559 = vmul.f32 %v292, 1.442695
    %v560 = vpow.pop %v559
    %v561 = vmul.f32 %v293, 1.442695
    %v562 = vpow.pop %v561
    %v563 = vmul.f32 %v294, 1.442695
    %v564 = vpow.pop %v563
    %v565 = vmul.f32 %v295, 1.442695
    %v566 = vpow.pop %v565
    %v567 = vmul.f32 %v296, 1.442695
    %v568 = vpow.pop %v567
    %v569 = vmul.f32 %v297, 1.442695
    %v570 = vpow.pop %v569
    %v571 = vmul.f32 %v298, 1.442695
    %v572 = vpow.pop %v571
    %v573 = vmul.f32 %v299, 1.442695
    %v574 = vpow.pop %v573
    %v575 = vmul.f32 %v300, 1.442695
    %v576 = vpow.pop %v575
    %v577 = vmul.f32 %v301, 1.442695
    %v578 = vpow.pop %v577
    %v579 = vmul.f32 %v302, 1.442695
    %v580 = vpow.pop %v579
    %v581 = vmul.f32 %v303, 1.442695
    %v582 = vpow.pop %v581
    %v583 = vmul.f32 %v304, 1.442695
    %v584 = vpow.pop %v583
    %v585 = vmul.f32 %v305, 1.442695
    %v586 = vpow.pop %v585
    %v587 = vmul.f32 %v306, 1.442695
    %v588 = vpow.pop %v587
    %v589 = vmul.f32 %v307, 1.442695
    %v590 = vpow.pop %v589
    %v591 = vmul.f32 %v308, 1.442695
    %v592 = vpow.pop %v591
    %v593 = vmul.f32 %v309, 1.442695
    %v594 = vpow.pop %v593
    %v595 = vmul.f32 %v310, 1.442695
    %v596 = vpow.pop %v595
    %v597 = vmul.f32 %v311, 1.442695
    %v598 = vpow.pop %v597
    %v599 = vmul.f32 %v312, 1.442695
    %v600 = vpow.pop %v599
    %v601 = vmul.f32 %v313, 1.442695
    %v602 = vpow.pop %v601
    %v603 = vmul.f32 %v314, 1.442695
    %v604 = vpow.pop %v603
    %v605 = vmul.f32 %v315, 1.442695
    %v606 = vpow.pop %v605
    %v607 = vmul.f32 %v316, 1.442695
    %v608 = vpow.pop %v607
    %v609 = vmul.f32 %v317, 1.442695
    %v610 = vpow.pop %v609
    %v611 = vmul.f32 %v318, 1.442695
    %v612 = vpow.pop %v611
    %v613 = vmul.f32 %v319, 1.442695
    %v614 = vpow.pop %v613
    %v615 = vmul.f32 %v320, 1.442695
    %v616 = vpow.pop %v615
    %v617 = vmul.f32 %v321, 1.442695
    %v618 = vpow.pop %v617
    %v619 = vmul.f32 %v322, 1.442695
    %v620 = vpow.pop %v619
    %v621 = vmul.f32 %v323, 1.442695
    %v622 = vpow.pop %v621
    %v623 = vmul.f32 %v324, 1.442695
    %v624 = vpow.pop %v623
    %v625 = vmul.f32 %v325, 1.442695
    %v626 = vpow.pop %v625
    %v627 = vmul.f32 %v326, 1.442695
    %v628 = vpow.pop %v627
    %v629 = vmul.f32 %v327, 1.442695
    %v630 = vpow.pop %v629
    %v631 = vmul.f32 %v328, 1.442695
    %v632 = vpow.pop %v631
    %v633 = vmul.f32 %v329, 1.442695
    %v634 = vpow.pop %v633
    %v635 = vmul.f32 %v330, 1.442695
    %v636 = vpow.pop %v635
    %v637 = vmul.f32 %v331, 1.442695
    %v638 = vpow.pop %v637
    %v639 = vmul.f32 %v332, 1.442695
    %v640 = vpow.pop %v639
    %v641 = vmul.f32 %v333, 1.442695
    %v642 = vpow.pop %v641
    %v643 = vmul.f32 %v334, 1.442695
    %v644 = vpow.pop %v643
    %v645 = vmul.f32 %v335, 1.442695
    %v646 = vpow.pop %v645
    %v647 = vmul.f32 %v336, 1.442695
    %v648 = vpow.pop %v647
    %v649 = vmul.f32 %v337, 1.442695
    %v650 = vpow.pop %v649
    %v651 = vmul.f32 %v338, 1.442695
    %v652 = vpow.pop %v651
    %v653 = vmul.f32 %v339, 1.442695
    %v654 = vpow.pop %v653
    %v655 = vmul.f32 %v340, 1.442695
    %v656 = vpow.pop %v655
    %v657 = vmul.f32 %v341, 1.442695
    %v658 = vpow.pop %v657
    %v659 = vmul.f32 %v342, 1.442695
    %v660 = vpow.pop %v659
    %v661 = vmul.f32 %v343, 1.442695
    %v662 = vpow.pop %v661
    %v663 = vmul.f32 %v344, 1.442695
    %v664 = vpow.pop %v663
    %v665 = vmul.f32 %v345, 1.442695
    %v666 = vpow.pop %v665
    %v667 = vmul.f32 %v346, 1.442695
    %v668 = vpow.pop %v667
    %v669 = vmul.f32 %v347, 1.442695
    %v670 = vpow.pop %v669
    %v671 = vmul.f32 %v348, 1.442695
    %v672 = vpow.pop %v671
    %v673 = vmul.f32 %v349, 1.442695
    %v674 = vpow.pop %v673
    %v675 = vmul.f32 %v350, 1.442695
    %v676 = vpow.pop %v675
    %v677 = vmul.f32 %v351, 1.442695
    %v678 = vpow.pop %v677
    %v679 = vmul.f32 %v352, 1.442695
    %v680 = vpow.pop %v679
    %v681 = vmul.f32 %v353, 1.442695
    %v682 = vpow.pop %v681
    %v683 = vmul.f32 %v354, 1.442695
    %v684 = vpow.pop %v683
    %v685 = vmul.f32 %v355, 1.442695
    %v686 = vpow.pop %v685
    %v687 = vmul.f32 %v356, 1.442695
    %v688 = vpow.pop %v687
    %v689 = vmul.f32 %v357, 1.442695
    %v690 = vpow.pop %v689
    %v691 = vmul.f32 %v358, 1.442695
    %v692 = vpow.pop %v691
    %v693 = vmul.f32 %v359, 1.442695
    %v694 = vpow.pop %v693
    %v695 = vmul.f32 %v360, 1.442695
    %v696 = vpow.pop %v695
    %v697 = vmul.f32 %v361, 1.442695
    %v698 = vpow.pop %v697
    %v699 = vmul.f32 %v362, 1.442695
    %v700 = vpow.pop %v699
    %v701 = vmul.f32 %v363, 1.442695
    %v702 = vpow.pop %v701
    %v703 = vmul.f32 %v364, 1.442695
    %v704 = vpow.pop %v703
    %v705 = vmul.f32 %v365, 1.442695
    %v706 = vpow.pop %v705
    %v707 = vmul.f32 %v366, 1.442695
    %v708 = vpow.pop %v707
    %v709 = vmul.f32 %v367, 1.442695
    %v710 = vpow.pop %v709
    %v711 = vmul.f32 %v368, 1.442695
    %v712 = vpow.pop %v711
    %v713 = vmul.f32 %v369, 1.442695
    %v714 = vpow.pop %v713
    %v715 = vmul.f32 %v370, 1.442695
    %v716 = vpow.pop %v715
    %v717 = vmul.f32 %v371, 1.442695
    %v718 = vpow.pop %v717
    %v719 = vmul.f32 %v372, 1.442695
    %v720 = vpow.pop %v719
    %v721 = vmul.f32 %v373, 1.442695
    %v722 = vpow.pop %v721
    %v723 = vmul.f32 %v374, 1.442695
    %v724 = vpow.pop %v723
    %v725 = vmul.f32 %v375, 1.442695
    %v726 = vpow.pop %v725
    %v727 = vmul.f32 %v376, 1.442695
    %v728 = vpow.pop %v727
    %v729 = vmul.f32 %v377, 1.442695
    %v730 = vpow.pop %v729
    %v731 = vmul.f32 %v378, 1.442695
    %v732 = vpow.pop %v731
    %v733 = vmul.f32 %v379, 1.442695
    %v734 = vpow.pop %v733
    %v735 = vmul.f32 %v380, 1.442695
    %v736 = vpow.pop %v735
    %v737 = vmul.f32 %v381, 1.442695
    %v738 = vpow.pop %v737
    %v739 = vmul.f32 %v382, 1.442695
    %v740 = vpow.pop %v739
    %v741 = vmul.f32 %v383, 1.442695
    %v742 = vpow.pop %v741
    %v743 = vmul.f32 %v384, 1.442695
    %v744 = vpow.pop %v743
    %v745 = vmul.f32 %v385, 1.442695
    %v746 = vpow.pop %v745
    %v747 = vmul.f32 %v386, 1.442695
    %v748 = vpow.pop %v747
    %v749 = vmul.f32 %v387, 1.442695
    %v750 = vpow.pop %v749
    %v751 = vmul.f32 %v388, 1.442695
    %v752 = vpow.pop %v751
    %v753 = vmul.f32 %v389, 1.442695
    %v754 = vpow.pop %v753
    %v755 = vmul.f32 %v390, 1.442695
    %v756 = vpow.pop %v755
    %v757 = vmul.f32 %v391, 1.442695
    %v758 = vpow.pop %v757
    %v759 = vmul.f32 %v392, 1.442695
    %v760 = vpow.pop %v759
    %v761 = vmul.f32 %v393, 1.442695
    %v762 = vpow.pop %v761
    %v763 = vmul.f32 %v394, 1.442695
    %v764 = vpow.pop %v763
    %v765 = vmul.f32 %v395, 1.442695
    %v766 = vpow.pop %v765
    %v767 = vmul.f32 %v396, 1.442695
    %v768 = vpow.pop %v767
    %v769 = vmul.f32 %v397, 1.442695
    %v770 = vpow.pop %v769
    %v771 = vmul.f32 %v398, 1.442695
    %v772 = vpow.pop %v771
    %v773 = vmul.f32 %v399, 1.442695
    %v774 = vpow.pop %v773
    %v775 = vmul.f32 %v400, 1.442695
    %v776 = vpow.pop %v775
    %v777 = vmul.f32 %v401, 1.442695
    %v778 = vpow.pop %v777
    %v779 = vmul.f32 %v402, 1.442695
    %v780 = vpow.pop %v779
    %v781 = vmul.f32 %v403, 1.442695
    %v782 = vpow.pop %v781
    %v783 = vmul.f32 %v404, 1.442695
    %v784 = vpow.pop %v783
    %v785 = vmul.f32 %v405, 1.442695
    %v786 = vpow.pop %v785
    %v787 = vmul.f32 %v406, 1.442695
    %v788 = vpow.pop %v787
    %v789 = vmul.f32 %v407, 1.442695
    %v790 = vpow.pop %v789
    %v791 = vmul.f32 %v408, 1.442695
    %v792 = vpow.pop %v791
    %v793 = vmul.f32 %v409, 1.442695
    %v794 = vpow.pop %v793
    %v795 = vmul.f32 %v410, 1.442695
    %v796 = vpow.pop %v795
    %v797 = vmul.f32 %v411, 1.442695
    %v798 = vpow.pop %v797
    %v799 = vmul.f32 %v412, 1.442695
    %v800 = vpow.pop %v799
    %v801 = vmul.f32 %v413, 1.442695
    %v802 = vpow.pop %v801
    %v803 = vmul.f32 %v414, 1.442695
    %v804 = vpow.pop %v803
    %v805 = vmul.f32 %v415, 1.442695
    %v806 = vpow.pop %v805
    %v807 = vmul.f32 %v416, 1.442695
    %v808 = vpow.pop %v807
    %v809 = vmul.f32 %v417, 1.442695
    %v810 = vpow.pop %v809
    %v811 = vmul.f32 %v418, 1.442695
    %v812 = vpow.pop %v811
    %v813 = vmul.f32 %v419, 1.442695
    %v814 = vpow.pop %v813
    %v815 = vmul.f32 %v420, 1.442695
    %v816 = vpow.pop %v815
    %v817 = vmul.f32 %v421, 1.442695
    %v818 = vpow.pop %v817
    %v819 = vmul.f32 %v422, 1.442695
    %v820 = vpow.pop %v819
    %v821 = vmul.f32 %v423, 1.442695
    %v822 = vpow.pop %v821
    %v823 = vmul.f32 %v424, 1.442695
    %v824 = vpow.pop %v823
    %v825 = vmul.f32 %v425, 1.442695
    %v826 = vpow.pop %v825
    %v827 = vmul.f32 %v426, 1.442695
    %v828 = vpow.pop %v827
    %v829 = vmul.f32 %v427, 1.442695
    %v830 = vpow.pop %v829
    %v831 = vmul.f32 %v428, 1.442695
    %v832 = vpow.pop %v831
    %v833 = vmul.f32 %v429, 1.442695
    %v834 = vpow.pop %v833
    %v835 = vmul.f32 %v430, 1.442695
    %v836 = vpow.pop %v835
    %v837 = vmul.f32 %v431, 1.442695
    %v838 = vpow.pop %v837
    %v839 = vmul.f32 %v432, 1.442695
    %v840 = vpow.pop %v839
    %v841 = vmul.f32 %v433, 1.442695
    %v842 = vpow.pop %v841
    %v843 = vmul.f32 %v434, 1.442695
    %v844 = vpow.pop %v843
    %v845 = vmul.f32 %v435, 1.442695
    %v846 = vpow.pop %v845
    %v847 = vmul.f32 %v436, 1.442695
    %v848 = vpow.pop %v847
    %v849 = vmul.f32 %v437, 1.442695
    %v850 = vpow.pop %v849
    %v851 = vmul.f32 %v438, 1.442695
    %v852 = vpow.pop %v851
    %v853 = vmul.f32 %v439, 1.442695
    %v854 = vpow.pop %v853
    %v855 = vmul.f32 %v440, 1.442695
    %v856 = vpow.pop %v855
    %v857 = vmul.f32 %v441, 1.442695
    %v858 = vpow.pop %v857
    %v859 = vmul.f32 %v442, 1.442695
    %v860 = vpow.pop %v859
    %v861 = vmul.f32 %v443, 1.442695
    %v862 = vpow.pop %v861
    %v863 = vmul.f32 %v444, 1.442695
    %v864 = vpow.pop %v863
    %v865 = vmul.f32 %v445, 1.442695
    %v866 = vpow.pop %v865
    %v867 = vmul.f32 %v446, 1.442695
    %v868 = vpow.pop %v867
    %v869 = vmul.f32 %v447, 1.442695
    %v870 = vpow.pop %v869
    %v871 = vmul.f32 %v448, 1.442695
    %v872 = vpow.pop %v871
    %v873 = vmul.f32 %v449, 1.442695
    %v874 = vpow.pop %v873
    %v875 = vmul.f32 %v450, 1.442695
    %v876 = vpow.pop %v875
    %v877 = vmul.f32 %v451, 1.442695
    %v878 = vpow.pop %v877
    %v879 = vmul.f32 %v452, 1.442695
    %v880 = vpow.pop %v879
    %v881 = vmul.f32 %v453, 1.442695
    %v882 = vpow.pop %v881
    %v883 = vmul.f32 %v454, 1.442695
    %v884 = vpow.pop %v883
    %v885 = vmul.f32 %v455, 1.442695
    %v886 = vpow.pop %v885
    %v887 = vmul.f32 %v456, 1.442695
    %v888 = vpow.pop %v887
    %v889 = vmul.f32 %v457, 1.442695
    %v890 = vpow.pop %v889
    %v891 = vmul.f32 %v458, 1.442695
    %v892 = vpow.pop %v891
    %v893 = vmul.f32 %v459, 1.442695
    %v894 = vpow.pop %v893
    %v895 = vmul.f32 %v460, 1.442695
    %v896 = vpow.pop %v895
    %v897 = vmul.f32 %v461, 1.442695
    %v898 = vpow.pop %v897
    %v899 = vmul.f32 %v462, 1.442695
    %v900 = vpow.pop %v899
    %v901 = vmul.f32 %v463, 1.442695
    %v902 = vpow.pop %v901
    %v903 = vmul.f32 %v464, 1.442695
    %v904 = vpow.pop %v903
    %v905 = vmul.f32 %v465, 1.442695
    %v906 = vpow.pop %v905
    %v907 = vmul.f32 %v466, 1.442695
    %v908 = vpow.pop %v907
    %v909 = vmul.f32 %v467, 1.442695
    %v910 = vpow.pop %v909
    %v911 = vmul.f32 %v468, 1.442695
    %v912 = vpow.pop %v911
    %v913 = vmul.f32 %v469, 1.442695
    %v914 = vpow.pop %v913
    %v915 = vmul.f32 %v470, 1.442695
    %v916 = vpow.pop %v915
    %v917 = vmul.f32 %v471, 1.442695
    %v918 = vpow.pop %v917
    %v919 = vmul.f32 %v472, 1.442695
    %v920 = vpow.pop %v919
    %v921 = vmul.f32 %v473, 1.442695
    %v922 = vpow.pop %v921
    %v923 = vmul.f32 %v474, 1.442695
    %v924 = vpow.pop %v923
    %v925 = vmul.f32 %v475, 1.442695
    %v926 = vpow.pop %v925
    %v927 = vmul.f32 %v476, 1.442695
    %v928 = vpow.pop %v927
    %v929 = vmul.f32 %v477, 1.442695
    %v930 = vpow.pop %v929
    %v931 = vmul.f32 %v478, 1.442695
    %v932 = vpow.pop %v931
    %v933 = vmul.f32 %v479, 1.442695
    %v934 = vpow.pop %v933
    %v935 = vmul.f32 %v480, 1.442695
    %v936 = vpow.pop %v935
    %v937 = vmul.f32 %v481, 1.442695
    %v938 = vpow.pop %v937
    %v939 = vmul.f32 %v482, 1.442695
    %v940 = vpow.pop %v939
    %v941 = vmul.f32 %v483, 1.442695
    %v942 = vpow.pop %v941
    %v943 = vmul.f32 %v484, 1.442695
    %v944 = vpow.pop %v943
    %v945 = vmul.f32 %v485, 1.442695
    %v946 = vpow.pop %v945
    %v947 = vmul.f32 %v486, 1.442695
    %v948 = vpow.pop %v947
    %v949 = vmul.f32 %v487, 1.442695
    %v950 = vpow.pop %v949
    %v951 = vmul.f32 %v488, 1.442695
    %v952 = vpow.pop %v951
    %v953 = vmul.f32 %v489, 1.442695
    %v954 = vpow.pop %v953
    %v955 = vmul.f32 %v490, 1.442695
    %v956 = vpow.pop %v955
    %v957 = vmul.f32 %v491, 1.442695
    %v958 = vpow.pop %v957
    %v959 = vmul.f32 %v492, 1.442695
    %v960 = vpow.pop %v959
    %v961 = vmul.f32 %v493, 1.442695
    %v962 = vpow.pop %v961
    %v963 = vmul.f32 %v494, 1.442695
    %v964 = vpow.pop %v963
    %v965 = vmul.f32 %v495, 1.442695
    %v966 = vpow.pop %v965
    %v967 = vmul.f32 %v496, 1.442695
    %v968 = vpow.pop %v967
    %v969 = vmul.f32 %v497, 1.442695
    %v970 = vpow.pop %v969
    %v971 = vmul.f32 %v498, 1.442695
    %v972 = vpow.pop %v971
    %v973 = vmul.f32 %v499, 1.442695
    %v974 = vpow.pop %v973
    %v975 = vmul.f32 %v500, 1.442695
    %v976 = vpow.pop %v975
    %v977 = vmul.f32 %v501, 1.442695
    %v978 = vpow.pop %v977
    %v979 = vmul.f32 %v502, 1.442695
    %v980 = vpow.pop %v979
    %v981 = vmul.f32 %v503, 1.442695
    %v982 = vpow.pop %v981
    %v983 = vmul.f32 %v504, 1.442695
    %v984 = vpow.pop %v983
    %v985 = vmul.f32 %v505, 1.442695
    %v986 = vpow.pop %v985
    %v987 = vmul.f32 %v506, 1.442695
    %v988 = vpow.pop %v987
    %v989 = vmul.f32 %v507, 1.442695
    %v990 = vpow.pop %v989
    %v991 = vmul.f32 %v508, 1.442695
    %v992 = vpow.pop %v991
    %v993 = vmul.f32 %v509, 1.442695
    %v994 = vpow.pop %v993
    %v995 = vmul.f32 %v510, 1.442695
    %v996 = vpow.pop %v995
    %v997 = vmul.f32 %v511, 1.442695
    %v998 = vpow.pop %v997
    %v999 = vmul.f32 %v512, 1.442695
    %v1000 = vpow.pop %v999
    %v1001 = vmul.f32 %v513, 1.442695
    %v1002 = vpow.pop %v1001
    %v1003 = vmul.f32 %v514, 1.442695
    %v1004 = vpow.pop %v1003
    %v1005 = vmul.f32 %v515, 1.442695
    %v1006 = vpow.pop %v1005
    %v1007 = vmul.f32 %v516, 1.442695
    %v1008 = vpow.pop %v1007
    %v1009 = vmul.f32 %v517, 1.442695
    %v1010 = vpow.pop %v1009
    %v1011 = vmul.f32 %v518, 1.442695
    %v1012 = vpow.pop %v1011
    %v1013 = vmul.f32 %v519, 1.442695
    %v1014 = vpow.pop %v1013
    %v1015 = vmul.f32 %v520, 1.442695
    %v1016 = vpow.pop %v1015
    %v1017 = vmul.f32 %v521, 1.442695
    %v1018 = vpow.pop %v1017
    %v1019 = vmul.f32 %v522, 1.442695
    %v1020 = vpow.pop %v1019
    %v1021 = vmul.f32 %v523, 1.442695
    %v1022 = vpow.pop %v1021
    %v1023 = vmul.f32 %v524, 1.442695
    %v1024 = vpow.pop %v1023
    %v1025 = vmul.f32 %v525, 1.442695
    %v1026 = vpow.pop %v1025
    %v1027 = vmul.f32 %v526, 1.442695
    %v1028 = vpow.pop %v1027
    %v1029 = vmul.f32 %v527, 1.442695
    %v1030 = vpow.pop %v1029
    %v1031 = vmul.f32 %v528, 1.442695
    %v1032 = vpow.pop %v1031
    %v1033 = vmul.f32 %v529, 1.442695
    %v1034 = vpow.pop %v1033
    %v1035 = vmul.f32 %v530, 1.442695
    %v1036 = vpow.pop %v1035
    %v1037 = vmul.f32 %v531, 1.442695
    %v1038 = vpow.pop %v1037
    %v1039 = vmul.f32 %v532, 1.442695
    %v1040 = vpow.pop %v1039
    %v1041 = vmul.f32 %v533, 1.442695
    %v1042 = vpow.pop %v1041
    %v1043 = vmul.f32 %v534, 1.442695
    %v1044 = vpow.pop %v1043
    %v1045 = vmul.f32 %v535, 1.442695
    %v1046 = vpow.pop %v1045
    %v1047 = vmul.f32 %v536, 1.442695
    %v1048 = vpow.pop %v1047
    %v1049 = vadd.f32 %v538, 1.0
    %v1050 = vadd.f32 %v540, 1.0
    %v1051 = vadd.f32 %v542, 1.0
    %v1052 = vadd.f32 %v544, 1.0
    %v1053 = vadd.f32 %v546, 1.0
    %v1054 = vadd.f32 %v548, 1.0
    %v1055 = vadd.f32 %v550, 1.0
    %v1056 = vadd.f32 %v552, 1.0
    %v1057 = vadd.f32 %v554, 1.0
    %v1058 = vadd.f32 %v556, 1.0
    %v1059 = vadd.f32 %v558, 1.0
    %v1060 = vadd.f32 %v560, 1.0
    %v1061 = vadd.f32 %v562, 1.0
    %v1062 = vadd.f32 %v564, 1.0
    %v1063 = vadd.f32 %v566, 1.0
    %v1064 = vadd.f32 %v568, 1.0
    %v1065 = vadd.f32 %v570, 1.0
    %v1066 = vadd.f32 %v572, 1.0
    %v1067 = vadd.f32 %v574, 1.0
    %v1068 = vadd.f32 %v576, 1.0
    %v1069 = vadd.f32 %v578, 1.0
    %v1070 = vadd.f32 %v580, 1.0
    %v1071 = vadd.f32 %v582, 1.0
    %v1072 = vadd.f32 %v584, 1.0
    %v1073 = vadd.f32 %v586, 1.0
    %v1074 = vadd.f32 %v588, 1.0
    %v1075 = vadd.f32 %v590, 1.0
    %v1076 = vadd.f32 %v592, 1.0
    %v1077 = vadd.f32 %v594, 1.0
    %v1078 = vadd.f32 %v596, 1.0
    %v1079 = vadd.f32 %v598, 1.0
    %v1080 = vadd.f32 %v600, 1.0
    %v1081 = vadd.f32 %v602, 1.0
    %v1082 = vadd.f32 %v604, 1.0
    %v1083 = vadd.f32 %v606, 1.0
    %v1084 = vadd.f32 %v608, 1.0
    %v1085 = vadd.f32 %v610, 1.0
    %v1086 = vadd.f32 %v612, 1.0
    %v1087 = vadd.f32 %v614, 1.0
    %v1088 = vadd.f32 %v616, 1.0
    %v1089 = vadd.f32 %v618, 1.0
    %v1090 = vadd.f32 %v620, 1.0
    %v1091 = vadd.f32 %v622, 1.0
    %v1092 = vadd.f32 %v624, 1.0
    %v1093 = vadd.f32 %v626, 1.0
    %v1094 = vadd.f32 %v628, 1.0
    %v1095 = vadd.f32 %v630, 1.0
    %v1096 = vadd.f32 %v632, 1.0
    %v1097 = vadd.f32 %v634, 1.0
    %v1098 = vadd.f32 %v636, 1.0
    %v1099 = vadd.f32 %v638, 1.0
    %v1100 = vadd.f32 %v640, 1.0
    %v1101 = vadd.f32 %v642, 1.0
    %v1102 = vadd.f32 %v644, 1.0
    %v1103 = vadd.f32 %v646, 1.0
    %v1104 = vadd.f32 %v648, 1.0
    %v1105 = vadd.f32 %v650, 1.0
    %v1106 = vadd.f32 %v652, 1.0
    %v1107 = vadd.f32 %v654, 1.0
    %v1108 = vadd.f32 %v656, 1.0
    %v1109 = vadd.f32 %v658, 1.0
    %v1110 = vadd.f32 %v660, 1.0
    %v1111 = vadd.f32 %v662, 1.0
    %v1112 = vadd.f32 %v664, 1.0
    %v1113 = vadd.f32 %v666, 1.0
    %v1114 = vadd.f32 %v668, 1.0
    %v1115 = vadd.f32 %v670, 1.0
    %v1116 = vadd.f32 %v672, 1.0
    %v1117 = vadd.f32 %v674, 1.0
    %v1118 = vadd.f32 %v676, 1.0
    %v1119 = vadd.f32 %v678, 1.0
    %v1120 = vadd.f32 %v680, 1.0
    %v1121 = vadd.f32 %v682, 1.0
    %v1122 = vadd.f32 %v684, 1.0
    %v1123 = vadd.f32 %v686, 1.0
    %v1124 = vadd.f32 %v688, 1.0
    %v1125 = vadd.f32 %v690, 1.0
    %v1126 = vadd.f32 %v692, 1.0
    %v1127 = vadd.f32 %v694, 1.0
    %v1128 = vadd.f32 %v696, 1.0
    %v1129 = vadd.f32 %v698, 1.0
    %v1130 = vadd.f32 %v700, 1.0
    %v1131 = vadd.f32 %v702, 1.0
    %v1132 = vadd.f32 %v704, 1.0
    %v1133 = vadd.f32 %v706, 1.0
    %v1134 = vadd.f32 %v708, 1.0
    %v1135 = vadd.f32 %v710, 1.0
    %v1136 = vadd.f32 %v712, 1.0
    %v1137 = vadd.f32 %v714, 1.0
    %v1138 = vadd.f32 %v716, 1.0
    %v1139 = vadd.f32 %v718, 1.0
    %v1140 = vadd.f32 %v720, 1.0
    %v1141 = vadd.f32 %v722, 1.0
    %v1142 = vadd.f32 %v724, 1.0
    %v1143 = vadd.f32 %v726, 1.0
    %v1144 = vadd.f32 %v728, 1.0
    %v1145 = vadd.f32 %v730, 1.0
    %v1146 = vadd.f32 %v732, 1.0
    %v1147 = vadd.f32 %v734, 1.0
    %v1148 = vadd.f32 %v736, 1.0
    %v1149 = vadd.f32 %v738, 1.0
    %v1150 = vadd.f32 %v740, 1.0
    %v1151 = vadd.f32 %v742, 1.0
    %v1152 = vadd.f32 %v744, 1.0
    %v1153 = vadd.f32 %v746, 1.0
    %v1154 = vadd.f32 %v748, 1.0
    %v1155 = vadd.f32 %v750, 1.0
    %v1156 = vadd.f32 %v752, 1.0
    %v1157 = vadd.f32 %v754, 1.0
    %v1158 = vadd.f32 %v756, 1.0
    %v1159 = vadd.f32 %v758, 1.0
    %v1160 = vadd.f32 %v760, 1.0
    %v1161 = vadd.f32 %v762, 1.0
    %v1162 = vadd.f32 %v764, 1.0
    %v1163 = vadd.f32 %v766, 1.0
    %v1164 = vadd.f32 %v768, 1.0
    %v1165 = vadd.f32 %v770, 1.0
    %v1166 = vadd.f32 %v772, 1.0
    %v1167 = vadd.f32 %v774, 1.0
    %v1168 = vadd.f32 %v776, 1.0
    %v1169 = vadd.f32 %v778, 1.0
    %v1170 = vadd.f32 %v780, 1.0
    %v1171 = vadd.f32 %v782, 1.0
    %v1172 = vadd.f32 %v784, 1.0
    %v1173 = vadd.f32 %v786, 1.0
    %v1174 = vadd.f32 %v788, 1.0
    %v1175 = vadd.f32 %v790, 1.0
    %v1176 = vadd.f32 %v792, 1.0
    %v1177 = vadd.f32 %v794, 1.0
    %v1178 = vadd.f32 %v796, 1.0
    %v1179 = vadd.f32 %v798, 1.0
    %v1180 = vadd.f32 %v800, 1.0
    %v1181 = vadd.f32 %v802, 1.0
    %v1182 = vadd.f32 %v804, 1.0
    %v1183 = vadd.f32 %v806, 1.0
    %v1184 = vadd.f32 %v808, 1.0
    %v1185 = vadd.f32 %v810, 1.0
    %v1186 = vadd.f32 %v812, 1.0
    %v1187 = vadd.f32 %v814, 1.0
    %v1188 = vadd.f32 %v816, 1.0
    %v1189 = vadd.f32 %v818, 1.0
    %v1190 = vadd.f32 %v820, 1.0
    %v1191 = vadd.f32 %v822, 1.0
    %v1192 = vadd.f32 %v824, 1.0
    %v1193 = vadd.f32 %v826, 1.0
    %v1194 = vadd.f32 %v828, 1.0
    %v1195 = vadd.f32 %v830, 1.0
    %v1196 = vadd.f32 %v832, 1.0
    %v1197 = vadd.f32 %v834, 1.0
    %v1198 = vadd.f32 %v836, 1.0
    %v1199 = vadd.f32 %v838, 1.0
    %v1200 = vadd.f32 %v840, 1.0
    %v1201 = vadd.f32 %v842, 1.0
    %v1202 = vadd.f32 %v844, 1.0
    %v1203 = vadd.f32 %v846, 1.0
    %v1204 = vadd.f32 %v848, 1.0
    %v1205 = vadd.f32 %v850, 1.0
    %v1206 = vadd.f32 %v852, 1.0
    %v1207 = vadd.f32 %v854, 1.0
    %v1208 = vadd.f32 %v856, 1.0
    %v1209 = vadd.f32 %v858, 1.0
    %v1210 = vadd.f32 %v860, 1.0
    %v1211 = vadd.f32 %v862, 1.0
    %v1212 = vadd.f32 %v864, 1.0
    %v1213 = vadd.f32 %v866, 1.0
    %v1214 = vadd.f32 %v868, 1.0
    %v1215 = vadd.f32 %v870, 1.0
    %v1216 = vadd.f32 %v872, 1.0
    %v1217 = vadd.f32 %v874, 1.0
    %v1218 = vadd.f32 %v876, 1.0
    %v1219 = vadd.f32 %v878, 1.0
    %v1220 = vadd.f32 %v880, 1.0
    %v1221 = vadd.f32 %v882, 1.0
    %v1222 = vadd.f32 %v884, 1.0
    %v1223 = vadd.f32 %v886, 1.0
    %v1224 = vadd.f32 %v888, 1.0
    %v1225 = vadd.f32 %v890, 1.0
    %v1226 = vadd.f32 %v892, 1.0
    %v1227 = vadd.f32 %v894, 1.0
    %v1228 = vadd.f32 %v896, 1.0
    %v1229 = vadd.f32 %v898, 1.0
    %v1230 = vadd.f32 %v900, 1.0
    %v1231 = vadd.f32 %v902, 1.0
    %v1232 = vadd.f32 %v904, 1.0
    %v1233 = vadd.f32 %v906, 1.0
    %v1234 = vadd.f32 %v908, 1.0
    %v1235 = vadd.f32 %v910, 1.0
    %v1236 = vadd.f32 %v912, 1.0
    %v1237 = vadd.f32 %v914, 1.0
    %v1238 = vadd.f32 %v916, 1.0
    %v1239 = vadd.f32 %v918, 1.0
    %v1240 = vadd.f32 %v920, 1.0
    %v1241 = vadd.f32 %v922, 1.0
    %v1242 = vadd.f32 %v924, 1.0
    %v1243 = vadd.f32 %v926, 1.0
    %v1244 = vadd.f32 %v928, 1.0
    %v1245 = vadd.f32 %v930, 1.0
    %v1246 = vadd.f32 %v932, 1.0
    %v1247 = vadd.f32 %v934, 1.0
    %v1248 = vadd.f32 %v936, 1.0
    %v1249 = vadd.f32 %v938, 1.0
    %v1250 = vadd.f32 %v940, 1.0
    %v1251 = vadd.f32 %v942, 1.0
    %v1252 = vadd.f32 %v944, 1.0
    %v1253 = vadd.f32 %v946, 1.0
    %v1254 = vadd.f32 %v948, 1.0
    %v1255 = vadd.f32 %v950, 1.0
    %v1256 = vadd.f32 %v952, 1.0
    %v1257 = vadd.f32 %v954, 1.0
    %v1258 = vadd.f32 %v956, 1.0
    %v1259 = vadd.f32 %v958, 1.0
    %v1260 = vadd.f32 %v960, 1.0
    %v1261 = vadd.f32 %v962, 1.0
    %v1262 = vadd.f32 %v964, 1.0
    %v1263 = vadd.f32 %v966, 1.0
    %v1264 = vadd.f32 %v968, 1.0
    %v1265 = vadd.f32 %v970, 1.0
    %v1266 = vadd.f32 %v972, 1.0
    %v1267 = vadd.f32 %v974, 1.0
    %v1268 = vadd.f32 %v976, 1.0
    %v1269 = vadd.f32 %v978, 1.0
    %v1270 = vadd.f32 %v980, 1.0
    %v1271 = vadd.f32 %v982, 1.0
    %v1272 = vadd.f32 %v984, 1.0
    %v1273 = vadd.f32 %v986, 1.0
    %v1274 = vadd.f32 %v988, 1.0
    %v1275 = vadd.f32 %v990, 1.0
    %v1276 = vadd.f32 %v992, 1.0
    %v1277 = vadd.f32 %v994, 1.0
    %v1278 = vadd.f32 %v996, 1.0
    %v1279 = vadd.f32 %v998, 1.0
    %v1280 = vadd.f32 %v1000, 1.0
    %v1281 = vadd.f32 %v1002, 1.0
    %v1282 = vadd.f32 %v1004, 1.0
    %v1283 = vadd.f32 %v1006, 1.0
    %v1284 = vadd.f32 %v1008, 1.0
    %v1285 = vadd.f32 %v1010, 1.0
    %v1286 = vadd.f32 %v1012, 1.0
    %v1287 = vadd.f32 %v1014, 1.0
    %v1288 = vadd.f32 %v1016, 1.0
    %v1289 = vadd.f32 %v1018, 1.0
    %v1290 = vadd.f32 %v1020, 1.0
    %v1291 = vadd.f32 %v1022, 1.0
    %v1292 = vadd.f32 %v1024, 1.0
    %v1293 = vadd.f32 %v1026, 1.0
    %v1294 = vadd.f32 %v1028, 1.0
    %v1295 = vadd.f32 %v1030, 1.0
    %v1296 = vadd.f32 %v1032, 1.0
    %v1297 = vadd.f32 %v1034, 1.0
    %v1298 = vadd.f32 %v1036, 1.0
    %v1299 = vadd.f32 %v1038, 1.0
    %v1300 = vadd.f32 %v1040, 1.0
    %v1301 = vadd.f32 %v1042, 1.0
    %v1302 = vadd.f32 %v1044, 1.0
    %v1303 = vadd.f32 %v1046, 1.0
    %v1304 = vadd.f32 %v1048, 1.0
    %v1305 = vrcp.pop %v1049
    %v1306 = vmul.f32 %v1049, %v1305
    %v1307 = vsub.f32 1.0, %v1306
    %v1308 = vmul.f32 %v1305, %v1307
    %v1309 = vadd.f32 %v1305, %v1308
    %vm1310 = vweird.f32 %v1049
    %vm1311 = vweird.f32 %v1305
    %vm1312 = vmor %vm1310, %vm1311
    %v1313 = vsel %vm1312, %v1305, %v1309
    %v1314 = vand.u32 2147483647, %v1049
    %vm1315 = vcmp.eq.f32.partialorder %v1314, 8.507059e+37
    %v1316 = vand.u32 %v1049, 2147483648
    %v1317 = vor.u32 1.1754944e-38, %v1316
    %v1318 = vsel %vm1315, %v1317, %v1313
    %v1319 = vmul.f32 1.0, %v1318
    %v1320 = vrcp.pop %v1050
    %v1321 = vmul.f32 %v1050, %v1320
    %v1322 = vsub.f32 1.0, %v1321
    %v1323 = vmul.f32 %v1320, %v1322
    %v1324 = vadd.f32 %v1320, %v1323
    %vm1325 = vweird.f32 %v1050
    %vm1326 = vweird.f32 %v1320
    %vm1327 = vmor %vm1325, %vm1326
    %v1328 = vsel %vm1327, %v1320, %v1324
    %v1329 = vand.u32 2147483647, %v1050
    %vm1330 = vcmp.eq.f32.partialorder %v1329, 8.507059e+37
    %v1331 = vand.u32 %v1050, 2147483648
    %v1332 = vor.u32 1.1754944e-38, %v1331
    %v1333 = vsel %vm1330, %v1332, %v1328
    %v1334 = vmul.f32 1.0, %v1333
    %v1335 = vrcp.pop %v1051
    %v1336 = vmul.f32 %v1051, %v1335
    %v1337 = vsub.f32 1.0, %v1336
    %v1338 = vmul.f32 %v1335, %v1337
    %v1339 = vadd.f32 %v1335, %v1338
    %vm1340 = vweird.f32 %v1051
    %vm1341 = vweird.f32 %v1335
    %vm1342 = vmor %vm1340, %vm1341
    %v1343 = vsel %vm1342, %v1335, %v1339
    %v1344 = vand.u32 2147483647, %v1051
    %vm1345 = vcmp.eq.f32.partialorder %v1344, 8.507059e+37
    %v1346 = vand.u32 %v1051, 2147483648
    %v1347 = vor.u32 1.1754944e-38, %v1346
    %v1348 = vsel %vm1345, %v1347, %v1343
    %v1349 = vmul.f32 1.0, %v1348
    %v1350 = vrcp.pop %v1052
    %v1351 = vmul.f32 %v1052, %v1350
    %v1352 = vsub.f32 1.0, %v1351
    %v1353 = vmul.f32 %v1350, %v1352
    %v1354 = vadd.f32 %v1350, %v1353
    %vm1355 = vweird.f32 %v1052
    %vm1356 = vweird.f32 %v1350
    %vm1357 = vmor %vm1355, %vm1356
    %v1358 = vsel %vm1357, %v1350, %v1354
    %v1359 = vand.u32 2147483647, %v1052
    %vm1360 = vcmp.eq.f32.partialorder %v1359, 8.507059e+37
    %v1361 = vand.u32 %v1052, 2147483648
    %v1362 = vor.u32 1.1754944e-38, %v1361
    %v1363 = vsel %vm1360, %v1362, %v1358
    %v1364 = vmul.f32 1.0, %v1363
    %v1365 = vrcp.pop %v1053
    %v1366 = vmul.f32 %v1053, %v1365
    %v1367 = vsub.f32 1.0, %v1366
    %v1368 = vmul.f32 %v1365, %v1367
    %v1369 = vadd.f32 %v1365, %v1368
    %vm1370 = vweird.f32 %v1053
    %vm1371 = vweird.f32 %v1365
    %vm1372 = vmor %vm1370, %vm1371
    %v1373 = vsel %vm1372, %v1365, %v1369
    %v1374 = vand.u32 2147483647, %v1053
    %vm1375 = vcmp.eq.f32.partialorder %v1374, 8.507059e+37
    %v1376 = vand.u32 %v1053, 2147483648
    %v1377 = vor.u32 1.1754944e-38, %v1376
    %v1378 = vsel %vm1375, %v1377, %v1373
    %v1379 = vmul.f32 1.0, %v1378
    %v1380 = vrcp.pop %v1054
    %v1381 = vmul.f32 %v1054, %v1380
    %v1382 = vsub.f32 1.0, %v1381
    %v1383 = vmul.f32 %v1380, %v1382
    %v1384 = vadd.f32 %v1380, %v1383
    %vm1385 = vweird.f32 %v1054
    %vm1386 = vweird.f32 %v1380
    %vm1387 = vmor %vm1385, %vm1386
    %v1388 = vsel %vm1387, %v1380, %v1384
    %v1389 = vand.u32 2147483647, %v1054
    %vm1390 = vcmp.eq.f32.partialorder %v1389, 8.507059e+37
    %v1391 = vand.u32 %v1054, 2147483648
    %v1392 = vor.u32 1.1754944e-38, %v1391
    %v1393 = vsel %vm1390, %v1392, %v1388
    %v1394 = vmul.f32 1.0, %v1393
    %v1395 = vrcp.pop %v1055
    %v1396 = vmul.f32 %v1055, %v1395
    %v1397 = vsub.f32 1.0, %v1396
    %v1398 = vmul.f32 %v1395, %v1397
    %v1399 = vadd.f32 %v1395, %v1398
    %vm1400 = vweird.f32 %v1055
    %vm1401 = vweird.f32 %v1395
    %vm1402 = vmor %vm1400, %vm1401
    %v1403 = vsel %vm1402, %v1395, %v1399
    %v1404 = vand.u32 2147483647, %v1055
    %vm1405 = vcmp.eq.f32.partialorder %v1404, 8.507059e+37
    %v1406 = vand.u32 %v1055, 2147483648
    %v1407 = vor.u32 1.1754944e-38, %v1406
    %v1408 = vsel %vm1405, %v1407, %v1403
    %v1409 = vmul.f32 1.0, %v1408
    %v1410 = vrcp.pop %v1056
    %v1411 = vmul.f32 %v1056, %v1410
    %v1412 = vsub.f32 1.0, %v1411
    %v1413 = vmul.f32 %v1410, %v1412
    %v1414 = vadd.f32 %v1410, %v1413
    %vm1415 = vweird.f32 %v1056
    %vm1416 = vweird.f32 %v1410
    %vm1417 = vmor %vm1415, %vm1416
    %v1418 = vsel %vm1417, %v1410, %v1414
    %v1419 = vand.u32 2147483647, %v1056
    %vm1420 = vcmp.eq.f32.partialorder %v1419, 8.507059e+37
    %v1421 = vand.u32 %v1056, 2147483648
    %v1422 = vor.u32 1.1754944e-38, %v1421
    %v1423 = vsel %vm1420, %v1422, %v1418
    %v1424 = vmul.f32 1.0, %v1423
    %v1425 = vrcp.pop %v1057
    %v1426 = vmul.f32 %v1057, %v1425
    %v1427 = vsub.f32 1.0, %v1426
    %v1428 = vmul.f32 %v1425, %v1427
    %v1429 = vadd.f32 %v1425, %v1428
    %vm1430 = vweird.f32 %v1057
    %vm1431 = vweird.f32 %v1425
    %vm1432 = vmor %vm1430, %vm1431
    %v1433 = vsel %vm1432, %v1425, %v1429
    %v1434 = vand.u32 2147483647, %v1057
    %vm1435 = vcmp.eq.f32.partialorder %v1434, 8.507059e+37
    %v1436 = vand.u32 %v1057, 2147483648
    %v1437 = vor.u32 1.1754944e-38, %v1436
    %v1438 = vsel %vm1435, %v1437, %v1433
    %v1439 = vmul.f32 1.0, %v1438
    %v1440 = vrcp.pop %v1058
    %v1441 = vmul.f32 %v1058, %v1440
    %v1442 = vsub.f32 1.0, %v1441
    %v1443 = vmul.f32 %v1440, %v1442
    %v1444 = vadd.f32 %v1440, %v1443
    %vm1445 = vweird.f32 %v1058
    %vm1446 = vweird.f32 %v1440
    %vm1447 = vmor %vm1445, %vm1446
    %v1448 = vsel %vm1447, %v1440, %v1444
    %v1449 = vand.u32 2147483647, %v1058
    %vm1450 = vcmp.eq.f32.partialorder %v1449, 8.507059e+37
    %v1451 = vand.u32 %v1058, 2147483648
    %v1452 = vor.u32 1.1754944e-38, %v1451
    %v1453 = vsel %vm1450, %v1452, %v1448
    %v1454 = vmul.f32 1.0, %v1453
    %v1455 = vrcp.pop %v1059
    %v1456 = vmul.f32 %v1059, %v1455
    %v1457 = vsub.f32 1.0, %v1456
    %v1458 = vmul.f32 %v1455, %v1457
    %v1459 = vadd.f32 %v1455, %v1458
    %vm1460 = vweird.f32 %v1059
    %vm1461 = vweird.f32 %v1455
    %vm1462 = vmor %vm1460, %vm1461
    %v1463 = vsel %vm1462, %v1455, %v1459
    %v1464 = vand.u32 2147483647, %v1059
    %vm1465 = vcmp.eq.f32.partialorder %v1464, 8.507059e+37
    %v1466 = vand.u32 %v1059, 2147483648
    %v1467 = vor.u32 1.1754944e-38, %v1466
    %v1468 = vsel %vm1465, %v1467, %v1463
    %v1469 = vmul.f32 1.0, %v1468
    %v1470 = vrcp.pop %v1060
    %v1471 = vmul.f32 %v1060, %v1470
    %v1472 = vsub.f32 1.0, %v1471
    %v1473 = vmul.f32 %v1470, %v1472
    %v1474 = vadd.f32 %v1470, %v1473
    %vm1475 = vweird.f32 %v1060
    %vm1476 = vweird.f32 %v1470
    %vm1477 = vmor %vm1475, %vm1476
    %v1478 = vsel %vm1477, %v1470, %v1474
    %v1479 = vand.u32 2147483647, %v1060
    %vm1480 = vcmp.eq.f32.partialorder %v1479, 8.507059e+37
    %v1481 = vand.u32 %v1060, 2147483648
    %v1482 = vor.u32 1.1754944e-38, %v1481
    %v1483 = vsel %vm1480, %v1482, %v1478
    %v1484 = vmul.f32 1.0, %v1483
    %v1485 = vrcp.pop %v1061
    %v1486 = vmul.f32 %v1061, %v1485
    %v1487 = vsub.f32 1.0, %v1486
    %v1488 = vmul.f32 %v1485, %v1487
    %v1489 = vadd.f32 %v1485, %v1488
    %vm1490 = vweird.f32 %v1061
    %vm1491 = vweird.f32 %v1485
    %vm1492 = vmor %vm1490, %vm1491
    %v1493 = vsel %vm1492, %v1485, %v1489
    %v1494 = vand.u32 2147483647, %v1061
    %vm1495 = vcmp.eq.f32.partialorder %v1494, 8.507059e+37
    %v1496 = vand.u32 %v1061, 2147483648
    %v1497 = vor.u32 1.1754944e-38, %v1496
    %v1498 = vsel %vm1495, %v1497, %v1493
    %v1499 = vmul.f32 1.0, %v1498
    %v1500 = vrcp.pop %v1062
    %v1501 = vmul.f32 %v1062, %v1500
    %v1502 = vsub.f32 1.0, %v1501
    %v1503 = vmul.f32 %v1500, %v1502
    %v1504 = vadd.f32 %v1500, %v1503
    %vm1505 = vweird.f32 %v1062
    %vm1506 = vweird.f32 %v1500
    %vm1507 = vmor %vm1505, %vm1506
    %v1508 = vsel %vm1507, %v1500, %v1504
    %v1509 = vand.u32 2147483647, %v1062
    %vm1510 = vcmp.eq.f32.partialorder %v1509, 8.507059e+37
    %v1511 = vand.u32 %v1062, 2147483648
    %v1512 = vor.u32 1.1754944e-38, %v1511
    %v1513 = vsel %vm1510, %v1512, %v1508
    %v1514 = vmul.f32 1.0, %v1513
    %v1515 = vrcp.pop %v1063
    %v1516 = vmul.f32 %v1063, %v1515
    %v1517 = vsub.f32 1.0, %v1516
    %v1518 = vmul.f32 %v1515, %v1517
    %v1519 = vadd.f32 %v1515, %v1518
    %vm1520 = vweird.f32 %v1063
    %vm1521 = vweird.f32 %v1515
    %vm1522 = vmor %vm1520, %vm1521
    %v1523 = vsel %vm1522, %v1515, %v1519
    %v1524 = vand.u32 2147483647, %v1063
    %vm1525 = vcmp.eq.f32.partialorder %v1524, 8.507059e+37
    %v1526 = vand.u32 %v1063, 2147483648
    %v1527 = vor.u32 1.1754944e-38, %v1526
    %v1528 = vsel %vm1525, %v1527, %v1523
    %v1529 = vmul.f32 1.0, %v1528
    %v1530 = vrcp.pop %v1064
    %v1531 = vmul.f32 %v1064, %v1530
    %v1532 = vsub.f32 1.0, %v1531
    %v1533 = vmul.f32 %v1530, %v1532
    %v1534 = vadd.f32 %v1530, %v1533
    %vm1535 = vweird.f32 %v1064
    %vm1536 = vweird.f32 %v1530
    %vm1537 = vmor %vm1535, %vm1536
    %v1538 = vsel %vm1537, %v1530, %v1534
    %v1539 = vand.u32 2147483647, %v1064
    %vm1540 = vcmp.eq.f32.partialorder %v1539, 8.507059e+37
    %v1541 = vand.u32 %v1064, 2147483648
    %v1542 = vor.u32 1.1754944e-38, %v1541
    %v1543 = vsel %vm1540, %v1542, %v1538
    %v1544 = vmul.f32 1.0, %v1543
    %v1545 = vrcp.pop %v1065
    %v1546 = vmul.f32 %v1065, %v1545
    %v1547 = vsub.f32 1.0, %v1546
    %v1548 = vmul.f32 %v1545, %v1547
    %v1549 = vadd.f32 %v1545, %v1548
    %vm1550 = vweird.f32 %v1065
    %vm1551 = vweird.f32 %v1545
    %vm1552 = vmor %vm1550, %vm1551
    %v1553 = vsel %vm1552, %v1545, %v1549
    %v1554 = vand.u32 2147483647, %v1065
    %vm1555 = vcmp.eq.f32.partialorder %v1554, 8.507059e+37
    %v1556 = vand.u32 %v1065, 2147483648
    %v1557 = vor.u32 1.1754944e-38, %v1556
    %v1558 = vsel %vm1555, %v1557, %v1553
    %v1559 = vmul.f32 1.0, %v1558
    %v1560 = vrcp.pop %v1066
    %v1561 = vmul.f32 %v1066, %v1560
    %v1562 = vsub.f32 1.0, %v1561
    %v1563 = vmul.f32 %v1560, %v1562
    %v1564 = vadd.f32 %v1560, %v1563
    %vm1565 = vweird.f32 %v1066
    %vm1566 = vweird.f32 %v1560
    %vm1567 = vmor %vm1565, %vm1566
    %v1568 = vsel %vm1567, %v1560, %v1564
    %v1569 = vand.u32 2147483647, %v1066
    %vm1570 = vcmp.eq.f32.partialorder %v1569, 8.507059e+37
    %v1571 = vand.u32 %v1066, 2147483648
    %v1572 = vor.u32 1.1754944e-38, %v1571
    %v1573 = vsel %vm1570, %v1572, %v1568
    %v1574 = vmul.f32 1.0, %v1573
    %v1575 = vrcp.pop %v1067
    %v1576 = vmul.f32 %v1067, %v1575
    %v1577 = vsub.f32 1.0, %v1576
    %v1578 = vmul.f32 %v1575, %v1577
    %v1579 = vadd.f32 %v1575, %v1578
    %vm1580 = vweird.f32 %v1067
    %vm1581 = vweird.f32 %v1575
    %vm1582 = vmor %vm1580, %vm1581
    %v1583 = vsel %vm1582, %v1575, %v1579
    %v1584 = vand.u32 2147483647, %v1067
    %vm1585 = vcmp.eq.f32.partialorder %v1584, 8.507059e+37
    %v1586 = vand.u32 %v1067, 2147483648
    %v1587 = vor.u32 1.1754944e-38, %v1586
    %v1588 = vsel %vm1585, %v1587, %v1583
    %v1589 = vmul.f32 1.0, %v1588
    %v1590 = vrcp.pop %v1068
    %v1591 = vmul.f32 %v1068, %v1590
    %v1592 = vsub.f32 1.0, %v1591
    %v1593 = vmul.f32 %v1590, %v1592
    %v1594 = vadd.f32 %v1590, %v1593
    %vm1595 = vweird.f32 %v1068
    %vm1596 = vweird.f32 %v1590
    %vm1597 = vmor %vm1595, %vm1596
    %v1598 = vsel %vm1597, %v1590, %v1594
    %v1599 = vand.u32 2147483647, %v1068
    %vm1600 = vcmp.eq.f32.partialorder %v1599, 8.507059e+37
    %v1601 = vand.u32 %v1068, 2147483648
    %v1602 = vor.u32 1.1754944e-38, %v1601
    %v1603 = vsel %vm1600, %v1602, %v1598
    %v1604 = vmul.f32 1.0, %v1603
    %v1605 = vrcp.pop %v1069
    %v1606 = vmul.f32 %v1069, %v1605
    %v1607 = vsub.f32 1.0, %v1606
    %v1608 = vmul.f32 %v1605, %v1607
    %v1609 = vadd.f32 %v1605, %v1608
    %vm1610 = vweird.f32 %v1069
    %vm1611 = vweird.f32 %v1605
    %vm1612 = vmor %vm1610, %vm1611
    %v1613 = vsel %vm1612, %v1605, %v1609
    %v1614 = vand.u32 2147483647, %v1069
    %vm1615 = vcmp.eq.f32.partialorder %v1614, 8.507059e+37
    %v1616 = vand.u32 %v1069, 2147483648
    %v1617 = vor.u32 1.1754944e-38, %v1616
    %v1618 = vsel %vm1615, %v1617, %v1613
    %v1619 = vmul.f32 1.0, %v1618
    %v1620 = vrcp.pop %v1070
    %v1621 = vmul.f32 %v1070, %v1620
    %v1622 = vsub.f32 1.0, %v1621
    %v1623 = vmul.f32 %v1620, %v1622
    %v1624 = vadd.f32 %v1620, %v1623
    %vm1625 = vweird.f32 %v1070
    %vm1626 = vweird.f32 %v1620
    %vm1627 = vmor %vm1625, %vm1626
    %v1628 = vsel %vm1627, %v1620, %v1624
    %v1629 = vand.u32 2147483647, %v1070
    %vm1630 = vcmp.eq.f32.partialorder %v1629, 8.507059e+37
    %v1631 = vand.u32 %v1070, 2147483648
    %v1632 = vor.u32 1.1754944e-38, %v1631
    %v1633 = vsel %vm1630, %v1632, %v1628
    %v1634 = vmul.f32 1.0, %v1633
    %v1635 = vrcp.pop %v1071
    %v1636 = vmul.f32 %v1071, %v1635
    %v1637 = vsub.f32 1.0, %v1636
    %v1638 = vmul.f32 %v1635, %v1637
    %v1639 = vadd.f32 %v1635, %v1638
    %vm1640 = vweird.f32 %v1071
    %vm1641 = vweird.f32 %v1635
    %vm1642 = vmor %vm1640, %vm1641
    %v1643 = vsel %vm1642, %v1635, %v1639
    %v1644 = vand.u32 2147483647, %v1071
    %vm1645 = vcmp.eq.f32.partialorder %v1644, 8.507059e+37
    %v1646 = vand.u32 %v1071, 2147483648
    %v1647 = vor.u32 1.1754944e-38, %v1646
    %v1648 = vsel %vm1645, %v1647, %v1643
    %v1649 = vmul.f32 1.0, %v1648
    %v1650 = vrcp.pop %v1072
    %v1651 = vmul.f32 %v1072, %v1650
    %v1652 = vsub.f32 1.0, %v1651
    %v1653 = vmul.f32 %v1650, %v1652
    %v1654 = vadd.f32 %v1650, %v1653
    %vm1655 = vweird.f32 %v1072
    %vm1656 = vweird.f32 %v1650
    %vm1657 = vmor %vm1655, %vm1656
    %v1658 = vsel %vm1657, %v1650, %v1654
    %v1659 = vand.u32 2147483647, %v1072
    %vm1660 = vcmp.eq.f32.partialorder %v1659, 8.507059e+37
    %v1661 = vand.u32 %v1072, 2147483648
    %v1662 = vor.u32 1.1754944e-38, %v1661
    %v1663 = vsel %vm1660, %v1662, %v1658
    %v1664 = vmul.f32 1.0, %v1663
    %v1665 = vrcp.pop %v1073
    %v1666 = vmul.f32 %v1073, %v1665
    %v1667 = vsub.f32 1.0, %v1666
    %v1668 = vmul.f32 %v1665, %v1667
    %v1669 = vadd.f32 %v1665, %v1668
    %vm1670 = vweird.f32 %v1073
    %vm1671 = vweird.f32 %v1665
    %vm1672 = vmor %vm1670, %vm1671
    %v1673 = vsel %vm1672, %v1665, %v1669
    %v1674 = vand.u32 2147483647, %v1073
    %vm1675 = vcmp.eq.f32.partialorder %v1674, 8.507059e+37
    %v1676 = vand.u32 %v1073, 2147483648
    %v1677 = vor.u32 1.1754944e-38, %v1676
    %v1678 = vsel %vm1675, %v1677, %v1673
    %v1679 = vmul.f32 1.0, %v1678
    %v1680 = vrcp.pop %v1074
    %v1681 = vmul.f32 %v1074, %v1680
    %v1682 = vsub.f32 1.0, %v1681
    %v1683 = vmul.f32 %v1680, %v1682
    %v1684 = vadd.f32 %v1680, %v1683
    %vm1685 = vweird.f32 %v1074
    %vm1686 = vweird.f32 %v1680
    %vm1687 = vmor %vm1685, %vm1686
    %v1688 = vsel %vm1687, %v1680, %v1684
    %v1689 = vand.u32 2147483647, %v1074
    %vm1690 = vcmp.eq.f32.partialorder %v1689, 8.507059e+37
    %v1691 = vand.u32 %v1074, 2147483648
    %v1692 = vor.u32 1.1754944e-38, %v1691
    %v1693 = vsel %vm1690, %v1692, %v1688
    %v1694 = vmul.f32 1.0, %v1693
    %v1695 = vrcp.pop %v1075
    %v1696 = vmul.f32 %v1075, %v1695
    %v1697 = vsub.f32 1.0, %v1696
    %v1698 = vmul.f32 %v1695, %v1697
    %v1699 = vadd.f32 %v1695, %v1698
    %vm1700 = vweird.f32 %v1075
    %vm1701 = vweird.f32 %v1695
    %vm1702 = vmor %vm1700, %vm1701
    %v1703 = vsel %vm1702, %v1695, %v1699
    %v1704 = vand.u32 2147483647, %v1075
    %vm1705 = vcmp.eq.f32.partialorder %v1704, 8.507059e+37
    %v1706 = vand.u32 %v1075, 2147483648
    %v1707 = vor.u32 1.1754944e-38, %v1706
    %v1708 = vsel %vm1705, %v1707, %v1703
    %v1709 = vmul.f32 1.0, %v1708
    %v1710 = vrcp.pop %v1076
    %v1711 = vmul.f32 %v1076, %v1710
    %v1712 = vsub.f32 1.0, %v1711
    %v1713 = vmul.f32 %v1710, %v1712
    %v1714 = vadd.f32 %v1710, %v1713
    %vm1715 = vweird.f32 %v1076
    %vm1716 = vweird.f32 %v1710
    %vm1717 = vmor %vm1715, %vm1716
    %v1718 = vsel %vm1717, %v1710, %v1714
    %v1719 = vand.u32 2147483647, %v1076
    %vm1720 = vcmp.eq.f32.partialorder %v1719, 8.507059e+37
    %v1721 = vand.u32 %v1076, 2147483648
    %v1722 = vor.u32 1.1754944e-38, %v1721
    %v1723 = vsel %vm1720, %v1722, %v1718
    %v1724 = vmul.f32 1.0, %v1723
    %v1725 = vrcp.pop %v1077
    %v1726 = vmul.f32 %v1077, %v1725
    %v1727 = vsub.f32 1.0, %v1726
    %v1728 = vmul.f32 %v1725, %v1727
    %v1729 = vadd.f32 %v1725, %v1728
    %vm1730 = vweird.f32 %v1077
    %vm1731 = vweird.f32 %v1725
    %vm1732 = vmor %vm1730, %vm1731
    %v1733 = vsel %vm1732, %v1725, %v1729
    %v1734 = vand.u32 2147483647, %v1077
    %vm1735 = vcmp.eq.f32.partialorder %v1734, 8.507059e+37
    %v1736 = vand.u32 %v1077, 2147483648
    %v1737 = vor.u32 1.1754944e-38, %v1736
    %v1738 = vsel %vm1735, %v1737, %v1733
    %v1739 = vmul.f32 1.0, %v1738
    %v1740 = vrcp.pop %v1078
    %v1741 = vmul.f32 %v1078, %v1740
    %v1742 = vsub.f32 1.0, %v1741
    %v1743 = vmul.f32 %v1740, %v1742
    %v1744 = vadd.f32 %v1740, %v1743
    %vm1745 = vweird.f32 %v1078
    %vm1746 = vweird.f32 %v1740
    %vm1747 = vmor %vm1745, %vm1746
    %v1748 = vsel %vm1747, %v1740, %v1744
    %v1749 = vand.u32 2147483647, %v1078
    %vm1750 = vcmp.eq.f32.partialorder %v1749, 8.507059e+37
    %v1751 = vand.u32 %v1078, 2147483648
    %v1752 = vor.u32 1.1754944e-38, %v1751
    %v1753 = vsel %vm1750, %v1752, %v1748
    %v1754 = vmul.f32 1.0, %v1753
    %v1755 = vrcp.pop %v1079
    %v1756 = vmul.f32 %v1079, %v1755
    %v1757 = vsub.f32 1.0, %v1756
    %v1758 = vmul.f32 %v1755, %v1757
    %v1759 = vadd.f32 %v1755, %v1758
    %vm1760 = vweird.f32 %v1079
    %vm1761 = vweird.f32 %v1755
    %vm1762 = vmor %vm1760, %vm1761
    %v1763 = vsel %vm1762, %v1755, %v1759
    %v1764 = vand.u32 2147483647, %v1079
    %vm1765 = vcmp.eq.f32.partialorder %v1764, 8.507059e+37
    %v1766 = vand.u32 %v1079, 2147483648
    %v1767 = vor.u32 1.1754944e-38, %v1766
    %v1768 = vsel %vm1765, %v1767, %v1763
    %v1769 = vmul.f32 1.0, %v1768
    %v1770 = vrcp.pop %v1080
    %v1771 = vmul.f32 %v1080, %v1770
    %v1772 = vsub.f32 1.0, %v1771
    %v1773 = vmul.f32 %v1770, %v1772
    %v1774 = vadd.f32 %v1770, %v1773
    %vm1775 = vweird.f32 %v1080
    %vm1776 = vweird.f32 %v1770
    %vm1777 = vmor %vm1775, %vm1776
    %v1778 = vsel %vm1777, %v1770, %v1774
    %v1779 = vand.u32 2147483647, %v1080
    %vm1780 = vcmp.eq.f32.partialorder %v1779, 8.507059e+37
    %v1781 = vand.u32 %v1080, 2147483648
    %v1782 = vor.u32 1.1754944e-38, %v1781
    %v1783 = vsel %vm1780, %v1782, %v1778
    %v1784 = vmul.f32 1.0, %v1783
    %v1785 = vrcp.pop %v1081
    %v1786 = vmul.f32 %v1081, %v1785
    %v1787 = vsub.f32 1.0, %v1786
    %v1788 = vmul.f32 %v1785, %v1787
    %v1789 = vadd.f32 %v1785, %v1788
    %vm1790 = vweird.f32 %v1081
    %vm1791 = vweird.f32 %v1785
    %vm1792 = vmor %vm1790, %vm1791
    %v1793 = vsel %vm1792, %v1785, %v1789
    %v1794 = vand.u32 2147483647, %v1081
    %vm1795 = vcmp.eq.f32.partialorder %v1794, 8.507059e+37
    %v1796 = vand.u32 %v1081, 2147483648
    %v1797 = vor.u32 1.1754944e-38, %v1796
    %v1798 = vsel %vm1795, %v1797, %v1793
    %v1799 = vmul.f32 1.0, %v1798
    %v1800 = vrcp.pop %v1082
    %v1801 = vmul.f32 %v1082, %v1800
    %v1802 = vsub.f32 1.0, %v1801
    %v1803 = vmul.f32 %v1800, %v1802
    %v1804 = vadd.f32 %v1800, %v1803
    %vm1805 = vweird.f32 %v1082
    %vm1806 = vweird.f32 %v1800
    %vm1807 = vmor %vm1805, %vm1806
    %v1808 = vsel %vm1807, %v1800, %v1804
    %v1809 = vand.u32 2147483647, %v1082
    %vm1810 = vcmp.eq.f32.partialorder %v1809, 8.507059e+37
    %v1811 = vand.u32 %v1082, 2147483648
    %v1812 = vor.u32 1.1754944e-38, %v1811
    %v1813 = vsel %vm1810, %v1812, %v1808
    %v1814 = vmul.f32 1.0, %v1813
    %v1815 = vrcp.pop %v1083
    %v1816 = vmul.f32 %v1083, %v1815
    %v1817 = vsub.f32 1.0, %v1816
    %v1818 = vmul.f32 %v1815, %v1817
    %v1819 = vadd.f32 %v1815, %v1818
    %vm1820 = vweird.f32 %v1083
    %vm1821 = vweird.f32 %v1815
    %vm1822 = vmor %vm1820, %vm1821
    %v1823 = vsel %vm1822, %v1815, %v1819
    %v1824 = vand.u32 2147483647, %v1083
    %vm1825 = vcmp.eq.f32.partialorder %v1824, 8.507059e+37
    %v1826 = vand.u32 %v1083, 2147483648
    %v1827 = vor.u32 1.1754944e-38, %v1826
    %v1828 = vsel %vm1825, %v1827, %v1823
    %v1829 = vmul.f32 1.0, %v1828
    %v1830 = vrcp.pop %v1084
    %v1831 = vmul.f32 %v1084, %v1830
    %v1832 = vsub.f32 1.0, %v1831
    %v1833 = vmul.f32 %v1830, %v1832
    %v1834 = vadd.f32 %v1830, %v1833
    %vm1835 = vweird.f32 %v1084
    %vm1836 = vweird.f32 %v1830
    %vm1837 = vmor %vm1835, %vm1836
    %v1838 = vsel %vm1837, %v1830, %v1834
    %v1839 = vand.u32 2147483647, %v1084
    %vm1840 = vcmp.eq.f32.partialorder %v1839, 8.507059e+37
    %v1841 = vand.u32 %v1084, 2147483648
    %v1842 = vor.u32 1.1754944e-38, %v1841
    %v1843 = vsel %vm1840, %v1842, %v1838
    %v1844 = vmul.f32 1.0, %v1843
    %v1845 = vrcp.pop %v1085
    %v1846 = vmul.f32 %v1085, %v1845
    %v1847 = vsub.f32 1.0, %v1846
    %v1848 = vmul.f32 %v1845, %v1847
    %v1849 = vadd.f32 %v1845, %v1848
    %vm1850 = vweird.f32 %v1085
    %vm1851 = vweird.f32 %v1845
    %vm1852 = vmor %vm1850, %vm1851
    %v1853 = vsel %vm1852, %v1845, %v1849
    %v1854 = vand.u32 2147483647, %v1085
    %vm1855 = vcmp.eq.f32.partialorder %v1854, 8.507059e+37
    %v1856 = vand.u32 %v1085, 2147483648
    %v1857 = vor.u32 1.1754944e-38, %v1856
    %v1858 = vsel %vm1855, %v1857, %v1853
    %v1859 = vmul.f32 1.0, %v1858
    %v1860 = vrcp.pop %v1086
    %v1861 = vmul.f32 %v1086, %v1860
    %v1862 = vsub.f32 1.0, %v1861
    %v1863 = vmul.f32 %v1860, %v1862
    %v1864 = vadd.f32 %v1860, %v1863
    %vm1865 = vweird.f32 %v1086
    %vm1866 = vweird.f32 %v1860
    %vm1867 = vmor %vm1865, %vm1866
    %v1868 = vsel %vm1867, %v1860, %v1864
    %v1869 = vand.u32 2147483647, %v1086
    %vm1870 = vcmp.eq.f32.partialorder %v1869, 8.507059e+37
    %v1871 = vand.u32 %v1086, 2147483648
    %v1872 = vor.u32 1.1754944e-38, %v1871
    %v1873 = vsel %vm1870, %v1872, %v1868
    %v1874 = vmul.f32 1.0, %v1873
    %v1875 = vrcp.pop %v1087
    %v1876 = vmul.f32 %v1087, %v1875
    %v1877 = vsub.f32 1.0, %v1876
    %v1878 = vmul.f32 %v1875, %v1877
    %v1879 = vadd.f32 %v1875, %v1878
    %vm1880 = vweird.f32 %v1087
    %vm1881 = vweird.f32 %v1875
    %vm1882 = vmor %vm1880, %vm1881
    %v1883 = vsel %vm1882, %v1875, %v1879
    %v1884 = vand.u32 2147483647, %v1087
    %vm1885 = vcmp.eq.f32.partialorder %v1884, 8.507059e+37
    %v1886 = vand.u32 %v1087, 2147483648
    %v1887 = vor.u32 1.1754944e-38, %v1886
    %v1888 = vsel %vm1885, %v1887, %v1883
    %v1889 = vmul.f32 1.0, %v1888
    %v1890 = vrcp.pop %v1088
    %v1891 = vmul.f32 %v1088, %v1890
    %v1892 = vsub.f32 1.0, %v1891
    %v1893 = vmul.f32 %v1890, %v1892
    %v1894 = vadd.f32 %v1890, %v1893
    %vm1895 = vweird.f32 %v1088
    %vm1896 = vweird.f32 %v1890
    %vm1897 = vmor %vm1895, %vm1896
    %v1898 = vsel %vm1897, %v1890, %v1894
    %v1899 = vand.u32 2147483647, %v1088
    %vm1900 = vcmp.eq.f32.partialorder %v1899, 8.507059e+37
    %v1901 = vand.u32 %v1088, 2147483648
    %v1902 = vor.u32 1.1754944e-38, %v1901
    %v1903 = vsel %vm1900, %v1902, %v1898
    %v1904 = vmul.f32 1.0, %v1903
    %v1905 = vrcp.pop %v1089
    %v1906 = vmul.f32 %v1089, %v1905
    %v1907 = vsub.f32 1.0, %v1906
    %v1908 = vmul.f32 %v1905, %v1907
    %v1909 = vadd.f32 %v1905, %v1908
    %vm1910 = vweird.f32 %v1089
    %vm1911 = vweird.f32 %v1905
    %vm1912 = vmor %vm1910, %vm1911
    %v1913 = vsel %vm1912, %v1905, %v1909
    %v1914 = vand.u32 2147483647, %v1089
    %vm1915 = vcmp.eq.f32.partialorder %v1914, 8.507059e+37
    %v1916 = vand.u32 %v1089, 2147483648
    %v1917 = vor.u32 1.1754944e-38, %v1916
    %v1918 = vsel %vm1915, %v1917, %v1913
    %v1919 = vmul.f32 1.0, %v1918
    %v1920 = vrcp.pop %v1090
    %v1921 = vmul.f32 %v1090, %v1920
    %v1922 = vsub.f32 1.0, %v1921
    %v1923 = vmul.f32 %v1920, %v1922
    %v1924 = vadd.f32 %v1920, %v1923
    %vm1925 = vweird.f32 %v1090
    %vm1926 = vweird.f32 %v1920
    %vm1927 = vmor %vm1925, %vm1926
    %v1928 = vsel %vm1927, %v1920, %v1924
    %v1929 = vand.u32 2147483647, %v1090
    %vm1930 = vcmp.eq.f32.partialorder %v1929, 8.507059e+37
    %v1931 = vand.u32 %v1090, 2147483648
    %v1932 = vor.u32 1.1754944e-38, %v1931
    %v1933 = vsel %vm1930, %v1932, %v1928
    %v1934 = vmul.f32 1.0, %v1933
    %v1935 = vrcp.pop %v1091
    %v1936 = vmul.f32 %v1091, %v1935
    %v1937 = vsub.f32 1.0, %v1936
    %v1938 = vmul.f32 %v1935, %v1937
    %v1939 = vadd.f32 %v1935, %v1938
    %vm1940 = vweird.f32 %v1091
    %vm1941 = vweird.f32 %v1935
    %vm1942 = vmor %vm1940, %vm1941
    %v1943 = vsel %vm1942, %v1935, %v1939
    %v1944 = vand.u32 2147483647, %v1091
    %vm1945 = vcmp.eq.f32.partialorder %v1944, 8.507059e+37
    %v1946 = vand.u32 %v1091, 2147483648
    %v1947 = vor.u32 1.1754944e-38, %v1946
    %v1948 = vsel %vm1945, %v1947, %v1943
    %v1949 = vmul.f32 1.0, %v1948
    %v1950 = vrcp.pop %v1092
    %v1951 = vmul.f32 %v1092, %v1950
    %v1952 = vsub.f32 1.0, %v1951
    %v1953 = vmul.f32 %v1950, %v1952
    %v1954 = vadd.f32 %v1950, %v1953
    %vm1955 = vweird.f32 %v1092
    %vm1956 = vweird.f32 %v1950
    %vm1957 = vmor %vm1955, %vm1956
    %v1958 = vsel %vm1957, %v1950, %v1954
    %v1959 = vand.u32 2147483647, %v1092
    %vm1960 = vcmp.eq.f32.partialorder %v1959, 8.507059e+37
    %v1961 = vand.u32 %v1092, 2147483648
    %v1962 = vor.u32 1.1754944e-38, %v1961
    %v1963 = vsel %vm1960, %v1962, %v1958
    %v1964 = vmul.f32 1.0, %v1963
    %v1965 = vrcp.pop %v1093
    %v1966 = vmul.f32 %v1093, %v1965
    %v1967 = vsub.f32 1.0, %v1966
    %v1968 = vmul.f32 %v1965, %v1967
    %v1969 = vadd.f32 %v1965, %v1968
    %vm1970 = vweird.f32 %v1093
    %vm1971 = vweird.f32 %v1965
    %vm1972 = vmor %vm1970, %vm1971
    %v1973 = vsel %vm1972, %v1965, %v1969
    %v1974 = vand.u32 2147483647, %v1093
    %vm1975 = vcmp.eq.f32.partialorder %v1974, 8.507059e+37
    %v1976 = vand.u32 %v1093, 2147483648
    %v1977 = vor.u32 1.1754944e-38, %v1976
    %v1978 = vsel %vm1975, %v1977, %v1973
    %v1979 = vmul.f32 1.0, %v1978
    %v1980 = vrcp.pop %v1094
    %v1981 = vmul.f32 %v1094, %v1980
    %v1982 = vsub.f32 1.0, %v1981
    %v1983 = vmul.f32 %v1980, %v1982
    %v1984 = vadd.f32 %v1980, %v1983
    %vm1985 = vweird.f32 %v1094
    %vm1986 = vweird.f32 %v1980
    %vm1987 = vmor %vm1985, %vm1986
    %v1988 = vsel %vm1987, %v1980, %v1984
    %v1989 = vand.u32 2147483647, %v1094
    %vm1990 = vcmp.eq.f32.partialorder %v1989, 8.507059e+37
    %v1991 = vand.u32 %v1094, 2147483648
    %v1992 = vor.u32 1.1754944e-38, %v1991
    %v1993 = vsel %vm1990, %v1992, %v1988
    %v1994 = vmul.f32 1.0, %v1993
    %v1995 = vrcp.pop %v1095
    %v1996 = vmul.f32 %v1095, %v1995
    %v1997 = vsub.f32 1.0, %v1996
    %v1998 = vmul.f32 %v1995, %v1997
    %v1999 = vadd.f32 %v1995, %v1998
    %vm2000 = vweird.f32 %v1095
    %vm2001 = vweird.f32 %v1995
    %vm2002 = vmor %vm2000, %vm2001
    %v2003 = vsel %vm2002, %v1995, %v1999
    %v2004 = vand.u32 2147483647, %v1095
    %vm2005 = vcmp.eq.f32.partialorder %v2004, 8.507059e+37
    %v2006 = vand.u32 %v1095, 2147483648
    %v2007 = vor.u32 1.1754944e-38, %v2006
    %v2008 = vsel %vm2005, %v2007, %v2003
    %v2009 = vmul.f32 1.0, %v2008
    %v2010 = vrcp.pop %v1096
    %v2011 = vmul.f32 %v1096, %v2010
    %v2012 = vsub.f32 1.0, %v2011
    %v2013 = vmul.f32 %v2010, %v2012
    %v2014 = vadd.f32 %v2010, %v2013
    %vm2015 = vweird.f32 %v1096
    %vm2016 = vweird.f32 %v2010
    %vm2017 = vmor %vm2015, %vm2016
    %v2018 = vsel %vm2017, %v2010, %v2014
    %v2019 = vand.u32 2147483647, %v1096
    %vm2020 = vcmp.eq.f32.partialorder %v2019, 8.507059e+37
    %v2021 = vand.u32 %v1096, 2147483648
    %v2022 = vor.u32 1.1754944e-38, %v2021
    %v2023 = vsel %vm2020, %v2022, %v2018
    %v2024 = vmul.f32 1.0, %v2023
    %v2025 = vrcp.pop %v1097
    %v2026 = vmul.f32 %v1097, %v2025
    %v2027 = vsub.f32 1.0, %v2026
    %v2028 = vmul.f32 %v2025, %v2027
    %v2029 = vadd.f32 %v2025, %v2028
    %vm2030 = vweird.f32 %v1097
    %vm2031 = vweird.f32 %v2025
    %vm2032 = vmor %vm2030, %vm2031
    %v2033 = vsel %vm2032, %v2025, %v2029
    %v2034 = vand.u32 2147483647, %v1097
    %vm2035 = vcmp.eq.f32.partialorder %v2034, 8.507059e+37
    %v2036 = vand.u32 %v1097, 2147483648
    %v2037 = vor.u32 1.1754944e-38, %v2036
    %v2038 = vsel %vm2035, %v2037, %v2033
    %v2039 = vmul.f32 1.0, %v2038
    %v2040 = vrcp.pop %v1098
    %v2041 = vmul.f32 %v1098, %v2040
    %v2042 = vsub.f32 1.0, %v2041
    %v2043 = vmul.f32 %v2040, %v2042
    %v2044 = vadd.f32 %v2040, %v2043
    %vm2045 = vweird.f32 %v1098
    %vm2046 = vweird.f32 %v2040
    %vm2047 = vmor %vm2045, %vm2046
    %v2048 = vsel %vm2047, %v2040, %v2044
    %v2049 = vand.u32 2147483647, %v1098
    %vm2050 = vcmp.eq.f32.partialorder %v2049, 8.507059e+37
    %v2051 = vand.u32 %v1098, 2147483648
    %v2052 = vor.u32 1.1754944e-38, %v2051
    %v2053 = vsel %vm2050, %v2052, %v2048
    %v2054 = vmul.f32 1.0, %v2053
    %v2055 = vrcp.pop %v1099
    %v2056 = vmul.f32 %v1099, %v2055
    %v2057 = vsub.f32 1.0, %v2056
    %v2058 = vmul.f32 %v2055, %v2057
    %v2059 = vadd.f32 %v2055, %v2058
    %vm2060 = vweird.f32 %v1099
    %vm2061 = vweird.f32 %v2055
    %vm2062 = vmor %vm2060, %vm2061
    %v2063 = vsel %vm2062, %v2055, %v2059
    %v2064 = vand.u32 2147483647, %v1099
    %vm2065 = vcmp.eq.f32.partialorder %v2064, 8.507059e+37
    %v2066 = vand.u32 %v1099, 2147483648
    %v2067 = vor.u32 1.1754944e-38, %v2066
    %v2068 = vsel %vm2065, %v2067, %v2063
    %v2069 = vmul.f32 1.0, %v2068
    %v2070 = vrcp.pop %v1100
    %v2071 = vmul.f32 %v1100, %v2070
    %v2072 = vsub.f32 1.0, %v2071
    %v2073 = vmul.f32 %v2070, %v2072
    %v2074 = vadd.f32 %v2070, %v2073
    %vm2075 = vweird.f32 %v1100
    %vm2076 = vweird.f32 %v2070
    %vm2077 = vmor %vm2075, %vm2076
    %v2078 = vsel %vm2077, %v2070, %v2074
    %v2079 = vand.u32 2147483647, %v1100
    %vm2080 = vcmp.eq.f32.partialorder %v2079, 8.507059e+37
    %v2081 = vand.u32 %v1100, 2147483648
    %v2082 = vor.u32 1.1754944e-38, %v2081
    %v2083 = vsel %vm2080, %v2082, %v2078
    %v2084 = vmul.f32 1.0, %v2083
    %v2085 = vrcp.pop %v1101
    %v2086 = vmul.f32 %v1101, %v2085
    %v2087 = vsub.f32 1.0, %v2086
    %v2088 = vmul.f32 %v2085, %v2087
    %v2089 = vadd.f32 %v2085, %v2088
    %vm2090 = vweird.f32 %v1101
    %vm2091 = vweird.f32 %v2085
    %vm2092 = vmor %vm2090, %vm2091
    %v2093 = vsel %vm2092, %v2085, %v2089
    %v2094 = vand.u32 2147483647, %v1101
    %vm2095 = vcmp.eq.f32.partialorder %v2094, 8.507059e+37
    %v2096 = vand.u32 %v1101, 2147483648
    %v2097 = vor.u32 1.1754944e-38, %v2096
    %v2098 = vsel %vm2095, %v2097, %v2093
    %v2099 = vmul.f32 1.0, %v2098
    %v2100 = vrcp.pop %v1102
    %v2101 = vmul.f32 %v1102, %v2100
    %v2102 = vsub.f32 1.0, %v2101
    %v2103 = vmul.f32 %v2100, %v2102
    %v2104 = vadd.f32 %v2100, %v2103
    %vm2105 = vweird.f32 %v1102
    %vm2106 = vweird.f32 %v2100
    %vm2107 = vmor %vm2105, %vm2106
    %v2108 = vsel %vm2107, %v2100, %v2104
    %v2109 = vand.u32 2147483647, %v1102
    %vm2110 = vcmp.eq.f32.partialorder %v2109, 8.507059e+37
    %v2111 = vand.u32 %v1102, 2147483648
    %v2112 = vor.u32 1.1754944e-38, %v2111
    %v2113 = vsel %vm2110, %v2112, %v2108
    %v2114 = vmul.f32 1.0, %v2113
    %v2115 = vrcp.pop %v1103
    %v2116 = vmul.f32 %v1103, %v2115
    %v2117 = vsub.f32 1.0, %v2116
    %v2118 = vmul.f32 %v2115, %v2117
    %v2119 = vadd.f32 %v2115, %v2118
    %vm2120 = vweird.f32 %v1103
    %vm2121 = vweird.f32 %v2115
    %vm2122 = vmor %vm2120, %vm2121
    %v2123 = vsel %vm2122, %v2115, %v2119
    %v2124 = vand.u32 2147483647, %v1103
    %vm2125 = vcmp.eq.f32.partialorder %v2124, 8.507059e+37
    %v2126 = vand.u32 %v1103, 2147483648
    %v2127 = vor.u32 1.1754944e-38, %v2126
    %v2128 = vsel %vm2125, %v2127, %v2123
    %v2129 = vmul.f32 1.0, %v2128
    %v2130 = vrcp.pop %v1104
    %v2131 = vmul.f32 %v1104, %v2130
    %v2132 = vsub.f32 1.0, %v2131
    %v2133 = vmul.f32 %v2130, %v2132
    %v2134 = vadd.f32 %v2130, %v2133
    %vm2135 = vweird.f32 %v1104
    %vm2136 = vweird.f32 %v2130
    %vm2137 = vmor %vm2135, %vm2136
    %v2138 = vsel %vm2137, %v2130, %v2134
    %v2139 = vand.u32 2147483647, %v1104
    %vm2140 = vcmp.eq.f32.partialorder %v2139, 8.507059e+37
    %v2141 = vand.u32 %v1104, 2147483648
    %v2142 = vor.u32 1.1754944e-38, %v2141
    %v2143 = vsel %vm2140, %v2142, %v2138
    %v2144 = vmul.f32 1.0, %v2143
    %v2145 = vrcp.pop %v1105
    %v2146 = vmul.f32 %v1105, %v2145
    %v2147 = vsub.f32 1.0, %v2146
    %v2148 = vmul.f32 %v2145, %v2147
    %v2149 = vadd.f32 %v2145, %v2148
    %vm2150 = vweird.f32 %v1105
    %vm2151 = vweird.f32 %v2145
    %vm2152 = vmor %vm2150, %vm2151
    %v2153 = vsel %vm2152, %v2145, %v2149
    %v2154 = vand.u32 2147483647, %v1105
    %vm2155 = vcmp.eq.f32.partialorder %v2154, 8.507059e+37
    %v2156 = vand.u32 %v1105, 2147483648
    %v2157 = vor.u32 1.1754944e-38, %v2156
    %v2158 = vsel %vm2155, %v2157, %v2153
    %v2159 = vmul.f32 1.0, %v2158
    %v2160 = vrcp.pop %v1106
    %v2161 = vmul.f32 %v1106, %v2160
    %v2162 = vsub.f32 1.0, %v2161
    %v2163 = vmul.f32 %v2160, %v2162
    %v2164 = vadd.f32 %v2160, %v2163
    %vm2165 = vweird.f32 %v1106
    %vm2166 = vweird.f32 %v2160
    %vm2167 = vmor %vm2165, %vm2166
    %v2168 = vsel %vm2167, %v2160, %v2164
    %v2169 = vand.u32 2147483647, %v1106
    %vm2170 = vcmp.eq.f32.partialorder %v2169, 8.507059e+37
    %v2171 = vand.u32 %v1106, 2147483648
    %v2172 = vor.u32 1.1754944e-38, %v2171
    %v2173 = vsel %vm2170, %v2172, %v2168
    %v2174 = vmul.f32 1.0, %v2173
    %v2175 = vrcp.pop %v1107
    %v2176 = vmul.f32 %v1107, %v2175
    %v2177 = vsub.f32 1.0, %v2176
    %v2178 = vmul.f32 %v2175, %v2177
    %v2179 = vadd.f32 %v2175, %v2178
    %vm2180 = vweird.f32 %v1107
    %vm2181 = vweird.f32 %v2175
    %vm2182 = vmor %vm2180, %vm2181
    %v2183 = vsel %vm2182, %v2175, %v2179
    %v2184 = vand.u32 2147483647, %v1107
    %vm2185 = vcmp.eq.f32.partialorder %v2184, 8.507059e+37
    %v2186 = vand.u32 %v1107, 2147483648
    %v2187 = vor.u32 1.1754944e-38, %v2186
    %v2188 = vsel %vm2185, %v2187, %v2183
    %v2189 = vmul.f32 1.0, %v2188
    %v2190 = vrcp.pop %v1108
    %v2191 = vmul.f32 %v1108, %v2190
    %v2192 = vsub.f32 1.0, %v2191
    %v2193 = vmul.f32 %v2190, %v2192
    %v2194 = vadd.f32 %v2190, %v2193
    %vm2195 = vweird.f32 %v1108
    %vm2196 = vweird.f32 %v2190
    %vm2197 = vmor %vm2195, %vm2196
    %v2198 = vsel %vm2197, %v2190, %v2194
    %v2199 = vand.u32 2147483647, %v1108
    %vm2200 = vcmp.eq.f32.partialorder %v2199, 8.507059e+37
    %v2201 = vand.u32 %v1108, 2147483648
    %v2202 = vor.u32 1.1754944e-38, %v2201
    %v2203 = vsel %vm2200, %v2202, %v2198
    %v2204 = vmul.f32 1.0, %v2203
    %v2205 = vrcp.pop %v1109
    %v2206 = vmul.f32 %v1109, %v2205
    %v2207 = vsub.f32 1.0, %v2206
    %v2208 = vmul.f32 %v2205, %v2207
    %v2209 = vadd.f32 %v2205, %v2208
    %vm2210 = vweird.f32 %v1109
    %vm2211 = vweird.f32 %v2205
    %vm2212 = vmor %vm2210, %vm2211
    %v2213 = vsel %vm2212, %v2205, %v2209
    %v2214 = vand.u32 2147483647, %v1109
    %vm2215 = vcmp.eq.f32.partialorder %v2214, 8.507059e+37
    %v2216 = vand.u32 %v1109, 2147483648
    %v2217 = vor.u32 1.1754944e-38, %v2216
    %v2218 = vsel %vm2215, %v2217, %v2213
    %v2219 = vmul.f32 1.0, %v2218
    %v2220 = vrcp.pop %v1110
    %v2221 = vmul.f32 %v1110, %v2220
    %v2222 = vsub.f32 1.0, %v2221
    %v2223 = vmul.f32 %v2220, %v2222
    %v2224 = vadd.f32 %v2220, %v2223
    %vm2225 = vweird.f32 %v1110
    %vm2226 = vweird.f32 %v2220
    %vm2227 = vmor %vm2225, %vm2226
    %v2228 = vsel %vm2227, %v2220, %v2224
    %v2229 = vand.u32 2147483647, %v1110
    %vm2230 = vcmp.eq.f32.partialorder %v2229, 8.507059e+37
    %v2231 = vand.u32 %v1110, 2147483648
    %v2232 = vor.u32 1.1754944e-38, %v2231
    %v2233 = vsel %vm2230, %v2232, %v2228
    %v2234 = vmul.f32 1.0, %v2233
    %v2235 = vrcp.pop %v1111
    %v2236 = vmul.f32 %v1111, %v2235
    %v2237 = vsub.f32 1.0, %v2236
    %v2238 = vmul.f32 %v2235, %v2237
    %v2239 = vadd.f32 %v2235, %v2238
    %vm2240 = vweird.f32 %v1111
    %vm2241 = vweird.f32 %v2235
    %vm2242 = vmor %vm2240, %vm2241
    %v2243 = vsel %vm2242, %v2235, %v2239
    %v2244 = vand.u32 2147483647, %v1111
    %vm2245 = vcmp.eq.f32.partialorder %v2244, 8.507059e+37
    %v2246 = vand.u32 %v1111, 2147483648
    %v2247 = vor.u32 1.1754944e-38, %v2246
    %v2248 = vsel %vm2245, %v2247, %v2243
    %v2249 = vmul.f32 1.0, %v2248
    %v2250 = vrcp.pop %v1112
    %v2251 = vmul.f32 %v1112, %v2250
    %v2252 = vsub.f32 1.0, %v2251
    %v2253 = vmul.f32 %v2250, %v2252
    %v2254 = vadd.f32 %v2250, %v2253
    %vm2255 = vweird.f32 %v1112
    %vm2256 = vweird.f32 %v2250
    %vm2257 = vmor %vm2255, %vm2256
    %v2258 = vsel %vm2257, %v2250, %v2254
    %v2259 = vand.u32 2147483647, %v1112
    %vm2260 = vcmp.eq.f32.partialorder %v2259, 8.507059e+37
    %v2261 = vand.u32 %v1112, 2147483648
    %v2262 = vor.u32 1.1754944e-38, %v2261
    %v2263 = vsel %vm2260, %v2262, %v2258
    %v2264 = vmul.f32 1.0, %v2263
    %v2265 = vrcp.pop %v1113
    %v2266 = vmul.f32 %v1113, %v2265
    %v2267 = vsub.f32 1.0, %v2266
    %v2268 = vmul.f32 %v2265, %v2267
    %v2269 = vadd.f32 %v2265, %v2268
    %vm2270 = vweird.f32 %v1113
    %vm2271 = vweird.f32 %v2265
    %vm2272 = vmor %vm2270, %vm2271
    %v2273 = vsel %vm2272, %v2265, %v2269
    %v2274 = vand.u32 2147483647, %v1113
    %vm2275 = vcmp.eq.f32.partialorder %v2274, 8.507059e+37
    %v2276 = vand.u32 %v1113, 2147483648
    %v2277 = vor.u32 1.1754944e-38, %v2276
    %v2278 = vsel %vm2275, %v2277, %v2273
    %v2279 = vmul.f32 1.0, %v2278
    %v2280 = vrcp.pop %v1114
    %v2281 = vmul.f32 %v1114, %v2280
    %v2282 = vsub.f32 1.0, %v2281
    %v2283 = vmul.f32 %v2280, %v2282
    %v2284 = vadd.f32 %v2280, %v2283
    %vm2285 = vweird.f32 %v1114
    %vm2286 = vweird.f32 %v2280
    %vm2287 = vmor %vm2285, %vm2286
    %v2288 = vsel %vm2287, %v2280, %v2284
    %v2289 = vand.u32 2147483647, %v1114
    %vm2290 = vcmp.eq.f32.partialorder %v2289, 8.507059e+37
    %v2291 = vand.u32 %v1114, 2147483648
    %v2292 = vor.u32 1.1754944e-38, %v2291
    %v2293 = vsel %vm2290, %v2292, %v2288
    %v2294 = vmul.f32 1.0, %v2293
    %v2295 = vrcp.pop %v1115
    %v2296 = vmul.f32 %v1115, %v2295
    %v2297 = vsub.f32 1.0, %v2296
    %v2298 = vmul.f32 %v2295, %v2297
    %v2299 = vadd.f32 %v2295, %v2298
    %vm2300 = vweird.f32 %v1115
    %vm2301 = vweird.f32 %v2295
    %vm2302 = vmor %vm2300, %vm2301
    %v2303 = vsel %vm2302, %v2295, %v2299
    %v2304 = vand.u32 2147483647, %v1115
    %vm2305 = vcmp.eq.f32.partialorder %v2304, 8.507059e+37
    %v2306 = vand.u32 %v1115, 2147483648
    %v2307 = vor.u32 1.1754944e-38, %v2306
    %v2308 = vsel %vm2305, %v2307, %v2303
    %v2309 = vmul.f32 1.0, %v2308
    %v2310 = vrcp.pop %v1116
    %v2311 = vmul.f32 %v1116, %v2310
    %v2312 = vsub.f32 1.0, %v2311
    %v2313 = vmul.f32 %v2310, %v2312
    %v2314 = vadd.f32 %v2310, %v2313
    %vm2315 = vweird.f32 %v1116
    %vm2316 = vweird.f32 %v2310
    %vm2317 = vmor %vm2315, %vm2316
    %v2318 = vsel %vm2317, %v2310, %v2314
    %v2319 = vand.u32 2147483647, %v1116
    %vm2320 = vcmp.eq.f32.partialorder %v2319, 8.507059e+37
    %v2321 = vand.u32 %v1116, 2147483648
    %v2322 = vor.u32 1.1754944e-38, %v2321
    %v2323 = vsel %vm2320, %v2322, %v2318
    %v2324 = vmul.f32 1.0, %v2323
    %v2325 = vrcp.pop %v1117
    %v2326 = vmul.f32 %v1117, %v2325
    %v2327 = vsub.f32 1.0, %v2326
    %v2328 = vmul.f32 %v2325, %v2327
    %v2329 = vadd.f32 %v2325, %v2328
    %vm2330 = vweird.f32 %v1117
    %vm2331 = vweird.f32 %v2325
    %vm2332 = vmor %vm2330, %vm2331
    %v2333 = vsel %vm2332, %v2325, %v2329
    %v2334 = vand.u32 2147483647, %v1117
    %vm2335 = vcmp.eq.f32.partialorder %v2334, 8.507059e+37
    %v2336 = vand.u32 %v1117, 2147483648
    %v2337 = vor.u32 1.1754944e-38, %v2336
    %v2338 = vsel %vm2335, %v2337, %v2333
    %v2339 = vmul.f32 1.0, %v2338
    %v2340 = vrcp.pop %v1118
    %v2341 = vmul.f32 %v1118, %v2340
    %v2342 = vsub.f32 1.0, %v2341
    %v2343 = vmul.f32 %v2340, %v2342
    %v2344 = vadd.f32 %v2340, %v2343
    %vm2345 = vweird.f32 %v1118
    %vm2346 = vweird.f32 %v2340
    %vm2347 = vmor %vm2345, %vm2346
    %v2348 = vsel %vm2347, %v2340, %v2344
    %v2349 = vand.u32 2147483647, %v1118
    %vm2350 = vcmp.eq.f32.partialorder %v2349, 8.507059e+37
    %v2351 = vand.u32 %v1118, 2147483648
    %v2352 = vor.u32 1.1754944e-38, %v2351
    %v2353 = vsel %vm2350, %v2352, %v2348
    %v2354 = vmul.f32 1.0, %v2353
    %v2355 = vrcp.pop %v1119
    %v2356 = vmul.f32 %v1119, %v2355
    %v2357 = vsub.f32 1.0, %v2356
    %v2358 = vmul.f32 %v2355, %v2357
    %v2359 = vadd.f32 %v2355, %v2358
    %vm2360 = vweird.f32 %v1119
    %vm2361 = vweird.f32 %v2355
    %vm2362 = vmor %vm2360, %vm2361
    %v2363 = vsel %vm2362, %v2355, %v2359
    %v2364 = vand.u32 2147483647, %v1119
    %vm2365 = vcmp.eq.f32.partialorder %v2364, 8.507059e+37
    %v2366 = vand.u32 %v1119, 2147483648
    %v2367 = vor.u32 1.1754944e-38, %v2366
    %v2368 = vsel %vm2365, %v2367, %v2363
    %v2369 = vmul.f32 1.0, %v2368
    %v2370 = vrcp.pop %v1120
    %v2371 = vmul.f32 %v1120, %v2370
    %v2372 = vsub.f32 1.0, %v2371
    %v2373 = vmul.f32 %v2370, %v2372
    %v2374 = vadd.f32 %v2370, %v2373
    %vm2375 = vweird.f32 %v1120
    %vm2376 = vweird.f32 %v2370
    %vm2377 = vmor %vm2375, %vm2376
    %v2378 = vsel %vm2377, %v2370, %v2374
    %v2379 = vand.u32 2147483647, %v1120
    %vm2380 = vcmp.eq.f32.partialorder %v2379, 8.507059e+37
    %v2381 = vand.u32 %v1120, 2147483648
    %v2382 = vor.u32 1.1754944e-38, %v2381
    %v2383 = vsel %vm2380, %v2382, %v2378
    %v2384 = vmul.f32 1.0, %v2383
    %v2385 = vrcp.pop %v1121
    %v2386 = vmul.f32 %v1121, %v2385
    %v2387 = vsub.f32 1.0, %v2386
    %v2388 = vmul.f32 %v2385, %v2387
    %v2389 = vadd.f32 %v2385, %v2388
    %vm2390 = vweird.f32 %v1121
    %vm2391 = vweird.f32 %v2385
    %vm2392 = vmor %vm2390, %vm2391
    %v2393 = vsel %vm2392, %v2385, %v2389
    %v2394 = vand.u32 2147483647, %v1121
    %vm2395 = vcmp.eq.f32.partialorder %v2394, 8.507059e+37
    %v2396 = vand.u32 %v1121, 2147483648
    %v2397 = vor.u32 1.1754944e-38, %v2396
    %v2398 = vsel %vm2395, %v2397, %v2393
    %v2399 = vmul.f32 1.0, %v2398
    %v2400 = vrcp.pop %v1122
    %v2401 = vmul.f32 %v1122, %v2400
    %v2402 = vsub.f32 1.0, %v2401
    %v2403 = vmul.f32 %v2400, %v2402
    %v2404 = vadd.f32 %v2400, %v2403
    %vm2405 = vweird.f32 %v1122
    %vm2406 = vweird.f32 %v2400
    %vm2407 = vmor %vm2405, %vm2406
    %v2408 = vsel %vm2407, %v2400, %v2404
    %v2409 = vand.u32 2147483647, %v1122
    %vm2410 = vcmp.eq.f32.partialorder %v2409, 8.507059e+37
    %v2411 = vand.u32 %v1122, 2147483648
    %v2412 = vor.u32 1.1754944e-38, %v2411
    %v2413 = vsel %vm2410, %v2412, %v2408
    %v2414 = vmul.f32 1.0, %v2413
    %v2415 = vrcp.pop %v1123
    %v2416 = vmul.f32 %v1123, %v2415
    %v2417 = vsub.f32 1.0, %v2416
    %v2418 = vmul.f32 %v2415, %v2417
    %v2419 = vadd.f32 %v2415, %v2418
    %vm2420 = vweird.f32 %v1123
    %vm2421 = vweird.f32 %v2415
    %vm2422 = vmor %vm2420, %vm2421
    %v2423 = vsel %vm2422, %v2415, %v2419
    %v2424 = vand.u32 2147483647, %v1123
    %vm2425 = vcmp.eq.f32.partialorder %v2424, 8.507059e+37
    %v2426 = vand.u32 %v1123, 2147483648
    %v2427 = vor.u32 1.1754944e-38, %v2426
    %v2428 = vsel %vm2425, %v2427, %v2423
    %v2429 = vmul.f32 1.0, %v2428
    %v2430 = vrcp.pop %v1124
    %v2431 = vmul.f32 %v1124, %v2430
    %v2432 = vsub.f32 1.0, %v2431
    %v2433 = vmul.f32 %v2430, %v2432
    %v2434 = vadd.f32 %v2430, %v2433
    %vm2435 = vweird.f32 %v1124
    %vm2436 = vweird.f32 %v2430
    %vm2437 = vmor %vm2435, %vm2436
    %v2438 = vsel %vm2437, %v2430, %v2434
    %v2439 = vand.u32 2147483647, %v1124
    %vm2440 = vcmp.eq.f32.partialorder %v2439, 8.507059e+37
    %v2441 = vand.u32 %v1124, 2147483648
    %v2442 = vor.u32 1.1754944e-38, %v2441
    %v2443 = vsel %vm2440, %v2442, %v2438
    %v2444 = vmul.f32 1.0, %v2443
    %v2445 = vrcp.pop %v1125
    %v2446 = vmul.f32 %v1125, %v2445
    %v2447 = vsub.f32 1.0, %v2446
    %v2448 = vmul.f32 %v2445, %v2447
    %v2449 = vadd.f32 %v2445, %v2448
    %vm2450 = vweird.f32 %v1125
    %vm2451 = vweird.f32 %v2445
    %vm2452 = vmor %vm2450, %vm2451
    %v2453 = vsel %vm2452, %v2445, %v2449
    %v2454 = vand.u32 2147483647, %v1125
    %vm2455 = vcmp.eq.f32.partialorder %v2454, 8.507059e+37
    %v2456 = vand.u32 %v1125, 2147483648
    %v2457 = vor.u32 1.1754944e-38, %v2456
    %v2458 = vsel %vm2455, %v2457, %v2453
    %v2459 = vmul.f32 1.0, %v2458
    %v2460 = vrcp.pop %v1126
    %v2461 = vmul.f32 %v1126, %v2460
    %v2462 = vsub.f32 1.0, %v2461
    %v2463 = vmul.f32 %v2460, %v2462
    %v2464 = vadd.f32 %v2460, %v2463
    %vm2465 = vweird.f32 %v1126
    %vm2466 = vweird.f32 %v2460
    %vm2467 = vmor %vm2465, %vm2466
    %v2468 = vsel %vm2467, %v2460, %v2464
    %v2469 = vand.u32 2147483647, %v1126
    %vm2470 = vcmp.eq.f32.partialorder %v2469, 8.507059e+37
    %v2471 = vand.u32 %v1126, 2147483648
    %v2472 = vor.u32 1.1754944e-38, %v2471
    %v2473 = vsel %vm2470, %v2472, %v2468
    %v2474 = vmul.f32 1.0, %v2473
    %v2475 = vrcp.pop %v1127
    %v2476 = vmul.f32 %v1127, %v2475
    %v2477 = vsub.f32 1.0, %v2476
    %v2478 = vmul.f32 %v2475, %v2477
    %v2479 = vadd.f32 %v2475, %v2478
    %vm2480 = vweird.f32 %v1127
    %vm2481 = vweird.f32 %v2475
    %vm2482 = vmor %vm2480, %vm2481
    %v2483 = vsel %vm2482, %v2475, %v2479
    %v2484 = vand.u32 2147483647, %v1127
    %vm2485 = vcmp.eq.f32.partialorder %v2484, 8.507059e+37
    %v2486 = vand.u32 %v1127, 2147483648
    %v2487 = vor.u32 1.1754944e-38, %v2486
    %v2488 = vsel %vm2485, %v2487, %v2483
    %v2489 = vmul.f32 1.0, %v2488
    %v2490 = vrcp.pop %v1128
    %v2491 = vmul.f32 %v1128, %v2490
    %v2492 = vsub.f32 1.0, %v2491
    %v2493 = vmul.f32 %v2490, %v2492
    %v2494 = vadd.f32 %v2490, %v2493
    %vm2495 = vweird.f32 %v1128
    %vm2496 = vweird.f32 %v2490
    %vm2497 = vmor %vm2495, %vm2496
    %v2498 = vsel %vm2497, %v2490, %v2494
    %v2499 = vand.u32 2147483647, %v1128
    %vm2500 = vcmp.eq.f32.partialorder %v2499, 8.507059e+37
    %v2501 = vand.u32 %v1128, 2147483648
    %v2502 = vor.u32 1.1754944e-38, %v2501
    %v2503 = vsel %vm2500, %v2502, %v2498
    %v2504 = vmul.f32 1.0, %v2503
    %v2505 = vrcp.pop %v1129
    %v2506 = vmul.f32 %v1129, %v2505
    %v2507 = vsub.f32 1.0, %v2506
    %v2508 = vmul.f32 %v2505, %v2507
    %v2509 = vadd.f32 %v2505, %v2508
    %vm2510 = vweird.f32 %v1129
    %vm2511 = vweird.f32 %v2505
    %vm2512 = vmor %vm2510, %vm2511
    %v2513 = vsel %vm2512, %v2505, %v2509
    %v2514 = vand.u32 2147483647, %v1129
    %vm2515 = vcmp.eq.f32.partialorder %v2514, 8.507059e+37
    %v2516 = vand.u32 %v1129, 2147483648
    %v2517 = vor.u32 1.1754944e-38, %v2516
    %v2518 = vsel %vm2515, %v2517, %v2513
    %v2519 = vmul.f32 1.0, %v2518
    %v2520 = vrcp.pop %v1130
    %v2521 = vmul.f32 %v1130, %v2520
    %v2522 = vsub.f32 1.0, %v2521
    %v2523 = vmul.f32 %v2520, %v2522
    %v2524 = vadd.f32 %v2520, %v2523
    %vm2525 = vweird.f32 %v1130
    %vm2526 = vweird.f32 %v2520
    %vm2527 = vmor %vm2525, %vm2526
    %v2528 = vsel %vm2527, %v2520, %v2524
    %v2529 = vand.u32 2147483647, %v1130
    %vm2530 = vcmp.eq.f32.partialorder %v2529, 8.507059e+37
    %v2531 = vand.u32 %v1130, 2147483648
    %v2532 = vor.u32 1.1754944e-38, %v2531
    %v2533 = vsel %vm2530, %v2532, %v2528
    %v2534 = vmul.f32 1.0, %v2533
    %v2535 = vrcp.pop %v1131
    %v2536 = vmul.f32 %v1131, %v2535
    %v2537 = vsub.f32 1.0, %v2536
    %v2538 = vmul.f32 %v2535, %v2537
    %v2539 = vadd.f32 %v2535, %v2538
    %vm2540 = vweird.f32 %v1131
    %vm2541 = vweird.f32 %v2535
    %vm2542 = vmor %vm2540, %vm2541
    %v2543 = vsel %vm2542, %v2535, %v2539
    %v2544 = vand.u32 2147483647, %v1131
    %vm2545 = vcmp.eq.f32.partialorder %v2544, 8.507059e+37
    %v2546 = vand.u32 %v1131, 2147483648
    %v2547 = vor.u32 1.1754944e-38, %v2546
    %v2548 = vsel %vm2545, %v2547, %v2543
    %v2549 = vmul.f32 1.0, %v2548
    %v2550 = vrcp.pop %v1132
    %v2551 = vmul.f32 %v1132, %v2550
    %v2552 = vsub.f32 1.0, %v2551
    %v2553 = vmul.f32 %v2550, %v2552
    %v2554 = vadd.f32 %v2550, %v2553
    %vm2555 = vweird.f32 %v1132
    %vm2556 = vweird.f32 %v2550
    %vm2557 = vmor %vm2555, %vm2556
    %v2558 = vsel %vm2557, %v2550, %v2554
    %v2559 = vand.u32 2147483647, %v1132
    %vm2560 = vcmp.eq.f32.partialorder %v2559, 8.507059e+37
    %v2561 = vand.u32 %v1132, 2147483648
    %v2562 = vor.u32 1.1754944e-38, %v2561
    %v2563 = vsel %vm2560, %v2562, %v2558
    %v2564 = vmul.f32 1.0, %v2563
    %v2565 = vrcp.pop %v1133
    %v2566 = vmul.f32 %v1133, %v2565
    %v2567 = vsub.f32 1.0, %v2566
    %v2568 = vmul.f32 %v2565, %v2567
    %v2569 = vadd.f32 %v2565, %v2568
    %vm2570 = vweird.f32 %v1133
    %vm2571 = vweird.f32 %v2565
    %vm2572 = vmor %vm2570, %vm2571
    %v2573 = vsel %vm2572, %v2565, %v2569
    %v2574 = vand.u32 2147483647, %v1133
    %vm2575 = vcmp.eq.f32.partialorder %v2574, 8.507059e+37
    %v2576 = vand.u32 %v1133, 2147483648
    %v2577 = vor.u32 1.1754944e-38, %v2576
    %v2578 = vsel %vm2575, %v2577, %v2573
    %v2579 = vmul.f32 1.0, %v2578
    %v2580 = vrcp.pop %v1134
    %v2581 = vmul.f32 %v1134, %v2580
    %v2582 = vsub.f32 1.0, %v2581
    %v2583 = vmul.f32 %v2580, %v2582
    %v2584 = vadd.f32 %v2580, %v2583
    %vm2585 = vweird.f32 %v1134
    %vm2586 = vweird.f32 %v2580
    %vm2587 = vmor %vm2585, %vm2586
    %v2588 = vsel %vm2587, %v2580, %v2584
    %v2589 = vand.u32 2147483647, %v1134
    %vm2590 = vcmp.eq.f32.partialorder %v2589, 8.507059e+37
    %v2591 = vand.u32 %v1134, 2147483648
    %v2592 = vor.u32 1.1754944e-38, %v2591
    %v2593 = vsel %vm2590, %v2592, %v2588
    %v2594 = vmul.f32 1.0, %v2593
    %v2595 = vrcp.pop %v1135
    %v2596 = vmul.f32 %v1135, %v2595
    %v2597 = vsub.f32 1.0, %v2596
    %v2598 = vmul.f32 %v2595, %v2597
    %v2599 = vadd.f32 %v2595, %v2598
    %vm2600 = vweird.f32 %v1135
    %vm2601 = vweird.f32 %v2595
    %vm2602 = vmor %vm2600, %vm2601
    %v2603 = vsel %vm2602, %v2595, %v2599
    %v2604 = vand.u32 2147483647, %v1135
    %vm2605 = vcmp.eq.f32.partialorder %v2604, 8.507059e+37
    %v2606 = vand.u32 %v1135, 2147483648
    %v2607 = vor.u32 1.1754944e-38, %v2606
    %v2608 = vsel %vm2605, %v2607, %v2603
    %v2609 = vmul.f32 1.0, %v2608
    %v2610 = vrcp.pop %v1136
    %v2611 = vmul.f32 %v1136, %v2610
    %v2612 = vsub.f32 1.0, %v2611
    %v2613 = vmul.f32 %v2610, %v2612
    %v2614 = vadd.f32 %v2610, %v2613
    %vm2615 = vweird.f32 %v1136
    %vm2616 = vweird.f32 %v2610
    %vm2617 = vmor %vm2615, %vm2616
    %v2618 = vsel %vm2617, %v2610, %v2614
    %v2619 = vand.u32 2147483647, %v1136
    %vm2620 = vcmp.eq.f32.partialorder %v2619, 8.507059e+37
    %v2621 = vand.u32 %v1136, 2147483648
    %v2622 = vor.u32 1.1754944e-38, %v2621
    %v2623 = vsel %vm2620, %v2622, %v2618
    %v2624 = vmul.f32 1.0, %v2623
    %v2625 = vrcp.pop %v1137
    %v2626 = vmul.f32 %v1137, %v2625
    %v2627 = vsub.f32 1.0, %v2626
    %v2628 = vmul.f32 %v2625, %v2627
    %v2629 = vadd.f32 %v2625, %v2628
    %vm2630 = vweird.f32 %v1137
    %vm2631 = vweird.f32 %v2625
    %vm2632 = vmor %vm2630, %vm2631
    %v2633 = vsel %vm2632, %v2625, %v2629
    %v2634 = vand.u32 2147483647, %v1137
    %vm2635 = vcmp.eq.f32.partialorder %v2634, 8.507059e+37
    %v2636 = vand.u32 %v1137, 2147483648
    %v2637 = vor.u32 1.1754944e-38, %v2636
    %v2638 = vsel %vm2635, %v2637, %v2633
    %v2639 = vmul.f32 1.0, %v2638
    %v2640 = vrcp.pop %v1138
    %v2641 = vmul.f32 %v1138, %v2640
    %v2642 = vsub.f32 1.0, %v2641
    %v2643 = vmul.f32 %v2640, %v2642
    %v2644 = vadd.f32 %v2640, %v2643
    %vm2645 = vweird.f32 %v1138
    %vm2646 = vweird.f32 %v2640
    %vm2647 = vmor %vm2645, %vm2646
    %v2648 = vsel %vm2647, %v2640, %v2644
    %v2649 = vand.u32 2147483647, %v1138
    %vm2650 = vcmp.eq.f32.partialorder %v2649, 8.507059e+37
    %v2651 = vand.u32 %v1138, 2147483648
    %v2652 = vor.u32 1.1754944e-38, %v2651
    %v2653 = vsel %vm2650, %v2652, %v2648
    %v2654 = vmul.f32 1.0, %v2653
    %v2655 = vrcp.pop %v1139
    %v2656 = vmul.f32 %v1139, %v2655
    %v2657 = vsub.f32 1.0, %v2656
    %v2658 = vmul.f32 %v2655, %v2657
    %v2659 = vadd.f32 %v2655, %v2658
    %vm2660 = vweird.f32 %v1139
    %vm2661 = vweird.f32 %v2655
    %vm2662 = vmor %vm2660, %vm2661
    %v2663 = vsel %vm2662, %v2655, %v2659
    %v2664 = vand.u32 2147483647, %v1139
    %vm2665 = vcmp.eq.f32.partialorder %v2664, 8.507059e+37
    %v2666 = vand.u32 %v1139, 2147483648
    %v2667 = vor.u32 1.1754944e-38, %v2666
    %v2668 = vsel %vm2665, %v2667, %v2663
    %v2669 = vmul.f32 1.0, %v2668
    %v2670 = vrcp.pop %v1140
    %v2671 = vmul.f32 %v1140, %v2670
    %v2672 = vsub.f32 1.0, %v2671
    %v2673 = vmul.f32 %v2670, %v2672
    %v2674 = vadd.f32 %v2670, %v2673
    %vm2675 = vweird.f32 %v1140
    %vm2676 = vweird.f32 %v2670
    %vm2677 = vmor %vm2675, %vm2676
    %v2678 = vsel %vm2677, %v2670, %v2674
    %v2679 = vand.u32 2147483647, %v1140
    %vm2680 = vcmp.eq.f32.partialorder %v2679, 8.507059e+37
    %v2681 = vand.u32 %v1140, 2147483648
    %v2682 = vor.u32 1.1754944e-38, %v2681
    %v2683 = vsel %vm2680, %v2682, %v2678
    %v2684 = vmul.f32 1.0, %v2683
    %v2685 = vrcp.pop %v1141
    %v2686 = vmul.f32 %v1141, %v2685
    %v2687 = vsub.f32 1.0, %v2686
    %v2688 = vmul.f32 %v2685, %v2687
    %v2689 = vadd.f32 %v2685, %v2688
    %vm2690 = vweird.f32 %v1141
    %vm2691 = vweird.f32 %v2685
    %vm2692 = vmor %vm2690, %vm2691
    %v2693 = vsel %vm2692, %v2685, %v2689
    %v2694 = vand.u32 2147483647, %v1141
    %vm2695 = vcmp.eq.f32.partialorder %v2694, 8.507059e+37
    %v2696 = vand.u32 %v1141, 2147483648
    %v2697 = vor.u32 1.1754944e-38, %v2696
    %v2698 = vsel %vm2695, %v2697, %v2693
    %v2699 = vmul.f32 1.0, %v2698
    %v2700 = vrcp.pop %v1142
    %v2701 = vmul.f32 %v1142, %v2700
    %v2702 = vsub.f32 1.0, %v2701
    %v2703 = vmul.f32 %v2700, %v2702
    %v2704 = vadd.f32 %v2700, %v2703
    %vm2705 = vweird.f32 %v1142
    %vm2706 = vweird.f32 %v2700
    %vm2707 = vmor %vm2705, %vm2706
    %v2708 = vsel %vm2707, %v2700, %v2704
    %v2709 = vand.u32 2147483647, %v1142
    %vm2710 = vcmp.eq.f32.partialorder %v2709, 8.507059e+37
    %v2711 = vand.u32 %v1142, 2147483648
    %v2712 = vor.u32 1.1754944e-38, %v2711
    %v2713 = vsel %vm2710, %v2712, %v2708
    %v2714 = vmul.f32 1.0, %v2713
    %v2715 = vrcp.pop %v1143
    %v2716 = vmul.f32 %v1143, %v2715
    %v2717 = vsub.f32 1.0, %v2716
    %v2718 = vmul.f32 %v2715, %v2717
    %v2719 = vadd.f32 %v2715, %v2718
    %vm2720 = vweird.f32 %v1143
    %vm2721 = vweird.f32 %v2715
    %vm2722 = vmor %vm2720, %vm2721
    %v2723 = vsel %vm2722, %v2715, %v2719
    %v2724 = vand.u32 2147483647, %v1143
    %vm2725 = vcmp.eq.f32.partialorder %v2724, 8.507059e+37
    %v2726 = vand.u32 %v1143, 2147483648
    %v2727 = vor.u32 1.1754944e-38, %v2726
    %v2728 = vsel %vm2725, %v2727, %v2723
    %v2729 = vmul.f32 1.0, %v2728
    %v2730 = vrcp.pop %v1144
    %v2731 = vmul.f32 %v1144, %v2730
    %v2732 = vsub.f32 1.0, %v2731
    %v2733 = vmul.f32 %v2730, %v2732
    %v2734 = vadd.f32 %v2730, %v2733
    %vm2735 = vweird.f32 %v1144
    %vm2736 = vweird.f32 %v2730
    %vm2737 = vmor %vm2735, %vm2736
    %v2738 = vsel %vm2737, %v2730, %v2734
    %v2739 = vand.u32 2147483647, %v1144
    %vm2740 = vcmp.eq.f32.partialorder %v2739, 8.507059e+37
    %v2741 = vand.u32 %v1144, 2147483648
    %v2742 = vor.u32 1.1754944e-38, %v2741
    %v2743 = vsel %vm2740, %v2742, %v2738
    %v2744 = vmul.f32 1.0, %v2743
    %v2745 = vrcp.pop %v1145
    %v2746 = vmul.f32 %v1145, %v2745
    %v2747 = vsub.f32 1.0, %v2746
    %v2748 = vmul.f32 %v2745, %v2747
    %v2749 = vadd.f32 %v2745, %v2748
    %vm2750 = vweird.f32 %v1145
    %vm2751 = vweird.f32 %v2745
    %vm2752 = vmor %vm2750, %vm2751
    %v2753 = vsel %vm2752, %v2745, %v2749
    %v2754 = vand.u32 2147483647, %v1145
    %vm2755 = vcmp.eq.f32.partialorder %v2754, 8.507059e+37
    %v2756 = vand.u32 %v1145, 2147483648
    %v2757 = vor.u32 1.1754944e-38, %v2756
    %v2758 = vsel %vm2755, %v2757, %v2753
    %v2759 = vmul.f32 1.0, %v2758
    %v2760 = vrcp.pop %v1146
    %v2761 = vmul.f32 %v1146, %v2760
    %v2762 = vsub.f32 1.0, %v2761
    %v2763 = vmul.f32 %v2760, %v2762
    %v2764 = vadd.f32 %v2760, %v2763
    %vm2765 = vweird.f32 %v1146
    %vm2766 = vweird.f32 %v2760
    %vm2767 = vmor %vm2765, %vm2766
    %v2768 = vsel %vm2767, %v2760, %v2764
    %v2769 = vand.u32 2147483647, %v1146
    %vm2770 = vcmp.eq.f32.partialorder %v2769, 8.507059e+37
    %v2771 = vand.u32 %v1146, 2147483648
    %v2772 = vor.u32 1.1754944e-38, %v2771
    %v2773 = vsel %vm2770, %v2772, %v2768
    %v2774 = vmul.f32 1.0, %v2773
    %v2775 = vrcp.pop %v1147
    %v2776 = vmul.f32 %v1147, %v2775
    %v2777 = vsub.f32 1.0, %v2776
    %v2778 = vmul.f32 %v2775, %v2777
    %v2779 = vadd.f32 %v2775, %v2778
    %vm2780 = vweird.f32 %v1147
    %vm2781 = vweird.f32 %v2775
    %vm2782 = vmor %vm2780, %vm2781
    %v2783 = vsel %vm2782, %v2775, %v2779
    %v2784 = vand.u32 2147483647, %v1147
    %vm2785 = vcmp.eq.f32.partialorder %v2784, 8.507059e+37
    %v2786 = vand.u32 %v1147, 2147483648
    %v2787 = vor.u32 1.1754944e-38, %v2786
    %v2788 = vsel %vm2785, %v2787, %v2783
    %v2789 = vmul.f32 1.0, %v2788
    %v2790 = vrcp.pop %v1148
    %v2791 = vmul.f32 %v1148, %v2790
    %v2792 = vsub.f32 1.0, %v2791
    %v2793 = vmul.f32 %v2790, %v2792
    %v2794 = vadd.f32 %v2790, %v2793
    %vm2795 = vweird.f32 %v1148
    %vm2796 = vweird.f32 %v2790
    %vm2797 = vmor %vm2795, %vm2796
    %v2798 = vsel %vm2797, %v2790, %v2794
    %v2799 = vand.u32 2147483647, %v1148
    %vm2800 = vcmp.eq.f32.partialorder %v2799, 8.507059e+37
    %v2801 = vand.u32 %v1148, 2147483648
    %v2802 = vor.u32 1.1754944e-38, %v2801
    %v2803 = vsel %vm2800, %v2802, %v2798
    %v2804 = vmul.f32 1.0, %v2803
    %v2805 = vrcp.pop %v1149
    %v2806 = vmul.f32 %v1149, %v2805
    %v2807 = vsub.f32 1.0, %v2806
    %v2808 = vmul.f32 %v2805, %v2807
    %v2809 = vadd.f32 %v2805, %v2808
    %vm2810 = vweird.f32 %v1149
    %vm2811 = vweird.f32 %v2805
    %vm2812 = vmor %vm2810, %vm2811
    %v2813 = vsel %vm2812, %v2805, %v2809
    %v2814 = vand.u32 2147483647, %v1149
    %vm2815 = vcmp.eq.f32.partialorder %v2814, 8.507059e+37
    %v2816 = vand.u32 %v1149, 2147483648
    %v2817 = vor.u32 1.1754944e-38, %v2816
    %v2818 = vsel %vm2815, %v2817, %v2813
    %v2819 = vmul.f32 1.0, %v2818
    %v2820 = vrcp.pop %v1150
    %v2821 = vmul.f32 %v1150, %v2820
    %v2822 = vsub.f32 1.0, %v2821
    %v2823 = vmul.f32 %v2820, %v2822
    %v2824 = vadd.f32 %v2820, %v2823
    %vm2825 = vweird.f32 %v1150
    %vm2826 = vweird.f32 %v2820
    %vm2827 = vmor %vm2825, %vm2826
    %v2828 = vsel %vm2827, %v2820, %v2824
    %v2829 = vand.u32 2147483647, %v1150
    %vm2830 = vcmp.eq.f32.partialorder %v2829, 8.507059e+37
    %v2831 = vand.u32 %v1150, 2147483648
    %v2832 = vor.u32 1.1754944e-38, %v2831
    %v2833 = vsel %vm2830, %v2832, %v2828
    %v2834 = vmul.f32 1.0, %v2833
    %v2835 = vrcp.pop %v1151
    %v2836 = vmul.f32 %v1151, %v2835
    %v2837 = vsub.f32 1.0, %v2836
    %v2838 = vmul.f32 %v2835, %v2837
    %v2839 = vadd.f32 %v2835, %v2838
    %vm2840 = vweird.f32 %v1151
    %vm2841 = vweird.f32 %v2835
    %vm2842 = vmor %vm2840, %vm2841
    %v2843 = vsel %vm2842, %v2835, %v2839
    %v2844 = vand.u32 2147483647, %v1151
    %vm2845 = vcmp.eq.f32.partialorder %v2844, 8.507059e+37
    %v2846 = vand.u32 %v1151, 2147483648
    %v2847 = vor.u32 1.1754944e-38, %v2846
    %v2848 = vsel %vm2845, %v2847, %v2843
    %v2849 = vmul.f32 1.0, %v2848
    %v2850 = vrcp.pop %v1152
    %v2851 = vmul.f32 %v1152, %v2850
    %v2852 = vsub.f32 1.0, %v2851
    %v2853 = vmul.f32 %v2850, %v2852
    %v2854 = vadd.f32 %v2850, %v2853
    %vm2855 = vweird.f32 %v1152
    %vm2856 = vweird.f32 %v2850
    %vm2857 = vmor %vm2855, %vm2856
    %v2858 = vsel %vm2857, %v2850, %v2854
    %v2859 = vand.u32 2147483647, %v1152
    %vm2860 = vcmp.eq.f32.partialorder %v2859, 8.507059e+37
    %v2861 = vand.u32 %v1152, 2147483648
    %v2862 = vor.u32 1.1754944e-38, %v2861
    %v2863 = vsel %vm2860, %v2862, %v2858
    %v2864 = vmul.f32 1.0, %v2863
    %v2865 = vrcp.pop %v1153
    %v2866 = vmul.f32 %v1153, %v2865
    %v2867 = vsub.f32 1.0, %v2866
    %v2868 = vmul.f32 %v2865, %v2867
    %v2869 = vadd.f32 %v2865, %v2868
    %vm2870 = vweird.f32 %v1153
    %vm2871 = vweird.f32 %v2865
    %vm2872 = vmor %vm2870, %vm2871
    %v2873 = vsel %vm2872, %v2865, %v2869
    %v2874 = vand.u32 2147483647, %v1153
    %vm2875 = vcmp.eq.f32.partialorder %v2874, 8.507059e+37
    %v2876 = vand.u32 %v1153, 2147483648
    %v2877 = vor.u32 1.1754944e-38, %v2876
    %v2878 = vsel %vm2875, %v2877, %v2873
    %v2879 = vmul.f32 1.0, %v2878
    %v2880 = vrcp.pop %v1154
    %v2881 = vmul.f32 %v1154, %v2880
    %v2882 = vsub.f32 1.0, %v2881
    %v2883 = vmul.f32 %v2880, %v2882
    %v2884 = vadd.f32 %v2880, %v2883
    %vm2885 = vweird.f32 %v1154
    %vm2886 = vweird.f32 %v2880
    %vm2887 = vmor %vm2885, %vm2886
    %v2888 = vsel %vm2887, %v2880, %v2884
    %v2889 = vand.u32 2147483647, %v1154
    %vm2890 = vcmp.eq.f32.partialorder %v2889, 8.507059e+37
    %v2891 = vand.u32 %v1154, 2147483648
    %v2892 = vor.u32 1.1754944e-38, %v2891
    %v2893 = vsel %vm2890, %v2892, %v2888
    %v2894 = vmul.f32 1.0, %v2893
    %v2895 = vrcp.pop %v1155
    %v2896 = vmul.f32 %v1155, %v2895
    %v2897 = vsub.f32 1.0, %v2896
    %v2898 = vmul.f32 %v2895, %v2897
    %v2899 = vadd.f32 %v2895, %v2898
    %vm2900 = vweird.f32 %v1155
    %vm2901 = vweird.f32 %v2895
    %vm2902 = vmor %vm2900, %vm2901
    %v2903 = vsel %vm2902, %v2895, %v2899
    %v2904 = vand.u32 2147483647, %v1155
    %vm2905 = vcmp.eq.f32.partialorder %v2904, 8.507059e+37
    %v2906 = vand.u32 %v1155, 2147483648
    %v2907 = vor.u32 1.1754944e-38, %v2906
    %v2908 = vsel %vm2905, %v2907, %v2903
    %v2909 = vmul.f32 1.0, %v2908
    %v2910 = vrcp.pop %v1156
    %v2911 = vmul.f32 %v1156, %v2910
    %v2912 = vsub.f32 1.0, %v2911
    %v2913 = vmul.f32 %v2910, %v2912
    %v2914 = vadd.f32 %v2910, %v2913
    %vm2915 = vweird.f32 %v1156
    %vm2916 = vweird.f32 %v2910
    %vm2917 = vmor %vm2915, %vm2916
    %v2918 = vsel %vm2917, %v2910, %v2914
    %v2919 = vand.u32 2147483647, %v1156
    %vm2920 = vcmp.eq.f32.partialorder %v2919, 8.507059e+37
    %v2921 = vand.u32 %v1156, 2147483648
    %v2922 = vor.u32 1.1754944e-38, %v2921
    %v2923 = vsel %vm2920, %v2922, %v2918
    %v2924 = vmul.f32 1.0, %v2923
    %v2925 = vrcp.pop %v1157
    %v2926 = vmul.f32 %v1157, %v2925
    %v2927 = vsub.f32 1.0, %v2926
    %v2928 = vmul.f32 %v2925, %v2927
    %v2929 = vadd.f32 %v2925, %v2928
    %vm2930 = vweird.f32 %v1157
    %vm2931 = vweird.f32 %v2925
    %vm2932 = vmor %vm2930, %vm2931
    %v2933 = vsel %vm2932, %v2925, %v2929
    %v2934 = vand.u32 2147483647, %v1157
    %vm2935 = vcmp.eq.f32.partialorder %v2934, 8.507059e+37
    %v2936 = vand.u32 %v1157, 2147483648
    %v2937 = vor.u32 1.1754944e-38, %v2936
    %v2938 = vsel %vm2935, %v2937, %v2933
    %v2939 = vmul.f32 1.0, %v2938
    %v2940 = vrcp.pop %v1158
    %v2941 = vmul.f32 %v1158, %v2940
    %v2942 = vsub.f32 1.0, %v2941
    %v2943 = vmul.f32 %v2940, %v2942
    %v2944 = vadd.f32 %v2940, %v2943
    %vm2945 = vweird.f32 %v1158
    %vm2946 = vweird.f32 %v2940
    %vm2947 = vmor %vm2945, %vm2946
    %v2948 = vsel %vm2947, %v2940, %v2944
    %v2949 = vand.u32 2147483647, %v1158
    %vm2950 = vcmp.eq.f32.partialorder %v2949, 8.507059e+37
    %v2951 = vand.u32 %v1158, 2147483648
    %v2952 = vor.u32 1.1754944e-38, %v2951
    %v2953 = vsel %vm2950, %v2952, %v2948
    %v2954 = vmul.f32 1.0, %v2953
    %v2955 = vrcp.pop %v1159
    %v2956 = vmul.f32 %v1159, %v2955
    %v2957 = vsub.f32 1.0, %v2956
    %v2958 = vmul.f32 %v2955, %v2957
    %v2959 = vadd.f32 %v2955, %v2958
    %vm2960 = vweird.f32 %v1159
    %vm2961 = vweird.f32 %v2955
    %vm2962 = vmor %vm2960, %vm2961
    %v2963 = vsel %vm2962, %v2955, %v2959
    %v2964 = vand.u32 2147483647, %v1159
    %vm2965 = vcmp.eq.f32.partialorder %v2964, 8.507059e+37
    %v2966 = vand.u32 %v1159, 2147483648
    %v2967 = vor.u32 1.1754944e-38, %v2966
    %v2968 = vsel %vm2965, %v2967, %v2963
    %v2969 = vmul.f32 1.0, %v2968
    %v2970 = vrcp.pop %v1160
    %v2971 = vmul.f32 %v1160, %v2970
    %v2972 = vsub.f32 1.0, %v2971
    %v2973 = vmul.f32 %v2970, %v2972
    %v2974 = vadd.f32 %v2970, %v2973
    %vm2975 = vweird.f32 %v1160
    %vm2976 = vweird.f32 %v2970
    %vm2977 = vmor %vm2975, %vm2976
    %v2978 = vsel %vm2977, %v2970, %v2974
    %v2979 = vand.u32 2147483647, %v1160
    %vm2980 = vcmp.eq.f32.partialorder %v2979, 8.507059e+37
    %v2981 = vand.u32 %v1160, 2147483648
    %v2982 = vor.u32 1.1754944e-38, %v2981
    %v2983 = vsel %vm2980, %v2982, %v2978
    %v2984 = vmul.f32 1.0, %v2983
    %v2985 = vrcp.pop %v1161
    %v2986 = vmul.f32 %v1161, %v2985
    %v2987 = vsub.f32 1.0, %v2986
    %v2988 = vmul.f32 %v2985, %v2987
    %v2989 = vadd.f32 %v2985, %v2988
    %vm2990 = vweird.f32 %v1161
    %vm2991 = vweird.f32 %v2985
    %vm2992 = vmor %vm2990, %vm2991
    %v2993 = vsel %vm2992, %v2985, %v2989
    %v2994 = vand.u32 2147483647, %v1161
    %vm2995 = vcmp.eq.f32.partialorder %v2994, 8.507059e+37
    %v2996 = vand.u32 %v1161, 2147483648
    %v2997 = vor.u32 1.1754944e-38, %v2996
    %v2998 = vsel %vm2995, %v2997, %v2993
    %v2999 = vmul.f32 1.0, %v2998
    %v3000 = vrcp.pop %v1162
    %v3001 = vmul.f32 %v1162, %v3000
    %v3002 = vsub.f32 1.0, %v3001
    %v3003 = vmul.f32 %v3000, %v3002
    %v3004 = vadd.f32 %v3000, %v3003
    %vm3005 = vweird.f32 %v1162
    %vm3006 = vweird.f32 %v3000
    %vm3007 = vmor %vm3005, %vm3006
    %v3008 = vsel %vm3007, %v3000, %v3004
    %v3009 = vand.u32 2147483647, %v1162
    %vm3010 = vcmp.eq.f32.partialorder %v3009, 8.507059e+37
    %v3011 = vand.u32 %v1162, 2147483648
    %v3012 = vor.u32 1.1754944e-38, %v3011
    %v3013 = vsel %vm3010, %v3012, %v3008
    %v3014 = vmul.f32 1.0, %v3013
    %v3015 = vrcp.pop %v1163
    %v3016 = vmul.f32 %v1163, %v3015
    %v3017 = vsub.f32 1.0, %v3016
    %v3018 = vmul.f32 %v3015, %v3017
    %v3019 = vadd.f32 %v3015, %v3018
    %vm3020 = vweird.f32 %v1163
    %vm3021 = vweird.f32 %v3015
    %vm3022 = vmor %vm3020, %vm3021
    %v3023 = vsel %vm3022, %v3015, %v3019
    %v3024 = vand.u32 2147483647, %v1163
    %vm3025 = vcmp.eq.f32.partialorder %v3024, 8.507059e+37
    %v3026 = vand.u32 %v1163, 2147483648
    %v3027 = vor.u32 1.1754944e-38, %v3026
    %v3028 = vsel %vm3025, %v3027, %v3023
    %v3029 = vmul.f32 1.0, %v3028
    %v3030 = vrcp.pop %v1164
    %v3031 = vmul.f32 %v1164, %v3030
    %v3032 = vsub.f32 1.0, %v3031
    %v3033 = vmul.f32 %v3030, %v3032
    %v3034 = vadd.f32 %v3030, %v3033
    %vm3035 = vweird.f32 %v1164
    %vm3036 = vweird.f32 %v3030
    %vm3037 = vmor %vm3035, %vm3036
    %v3038 = vsel %vm3037, %v3030, %v3034
    %v3039 = vand.u32 2147483647, %v1164
    %vm3040 = vcmp.eq.f32.partialorder %v3039, 8.507059e+37
    %v3041 = vand.u32 %v1164, 2147483648
    %v3042 = vor.u32 1.1754944e-38, %v3041
    %v3043 = vsel %vm3040, %v3042, %v3038
    %v3044 = vmul.f32 1.0, %v3043
    %v3045 = vrcp.pop %v1165
    %v3046 = vmul.f32 %v1165, %v3045
    %v3047 = vsub.f32 1.0, %v3046
    %v3048 = vmul.f32 %v3045, %v3047
    %v3049 = vadd.f32 %v3045, %v3048
    %vm3050 = vweird.f32 %v1165
    %vm3051 = vweird.f32 %v3045
    %vm3052 = vmor %vm3050, %vm3051
    %v3053 = vsel %vm3052, %v3045, %v3049
    %v3054 = vand.u32 2147483647, %v1165
    %vm3055 = vcmp.eq.f32.partialorder %v3054, 8.507059e+37
    %v3056 = vand.u32 %v1165, 2147483648
    %v3057 = vor.u32 1.1754944e-38, %v3056
    %v3058 = vsel %vm3055, %v3057, %v3053
    %v3059 = vmul.f32 1.0, %v3058
    %v3060 = vrcp.pop %v1166
    %v3061 = vmul.f32 %v1166, %v3060
    %v3062 = vsub.f32 1.0, %v3061
    %v3063 = vmul.f32 %v3060, %v3062
    %v3064 = vadd.f32 %v3060, %v3063
    %vm3065 = vweird.f32 %v1166
    %vm3066 = vweird.f32 %v3060
    %vm3067 = vmor %vm3065, %vm3066
    %v3068 = vsel %vm3067, %v3060, %v3064
    %v3069 = vand.u32 2147483647, %v1166
    %vm3070 = vcmp.eq.f32.partialorder %v3069, 8.507059e+37
    %v3071 = vand.u32 %v1166, 2147483648
    %v3072 = vor.u32 1.1754944e-38, %v3071
    %v3073 = vsel %vm3070, %v3072, %v3068
    %v3074 = vmul.f32 1.0, %v3073
    %v3075 = vrcp.pop %v1167
    %v3076 = vmul.f32 %v1167, %v3075
    %v3077 = vsub.f32 1.0, %v3076
    %v3078 = vmul.f32 %v3075, %v3077
    %v3079 = vadd.f32 %v3075, %v3078
    %vm3080 = vweird.f32 %v1167
    %vm3081 = vweird.f32 %v3075
    %vm3082 = vmor %vm3080, %vm3081
    %v3083 = vsel %vm3082, %v3075, %v3079
    %v3084 = vand.u32 2147483647, %v1167
    %vm3085 = vcmp.eq.f32.partialorder %v3084, 8.507059e+37
    %v3086 = vand.u32 %v1167, 2147483648
    %v3087 = vor.u32 1.1754944e-38, %v3086
    %v3088 = vsel %vm3085, %v3087, %v3083
    %v3089 = vmul.f32 1.0, %v3088
    %v3090 = vrcp.pop %v1168
    %v3091 = vmul.f32 %v1168, %v3090
    %v3092 = vsub.f32 1.0, %v3091
    %v3093 = vmul.f32 %v3090, %v3092
    %v3094 = vadd.f32 %v3090, %v3093
    %vm3095 = vweird.f32 %v1168
    %vm3096 = vweird.f32 %v3090
    %vm3097 = vmor %vm3095, %vm3096
    %v3098 = vsel %vm3097, %v3090, %v3094
    %v3099 = vand.u32 2147483647, %v1168
    %vm3100 = vcmp.eq.f32.partialorder %v3099, 8.507059e+37
    %v3101 = vand.u32 %v1168, 2147483648
    %v3102 = vor.u32 1.1754944e-38, %v3101
    %v3103 = vsel %vm3100, %v3102, %v3098
    %v3104 = vmul.f32 1.0, %v3103
    %v3105 = vrcp.pop %v1169
    %v3106 = vmul.f32 %v1169, %v3105
    %v3107 = vsub.f32 1.0, %v3106
    %v3108 = vmul.f32 %v3105, %v3107
    %v3109 = vadd.f32 %v3105, %v3108
    %vm3110 = vweird.f32 %v1169
    %vm3111 = vweird.f32 %v3105
    %vm3112 = vmor %vm3110, %vm3111
    %v3113 = vsel %vm3112, %v3105, %v3109
    %v3114 = vand.u32 2147483647, %v1169
    %vm3115 = vcmp.eq.f32.partialorder %v3114, 8.507059e+37
    %v3116 = vand.u32 %v1169, 2147483648
    %v3117 = vor.u32 1.1754944e-38, %v3116
    %v3118 = vsel %vm3115, %v3117, %v3113
    %v3119 = vmul.f32 1.0, %v3118
    %v3120 = vrcp.pop %v1170
    %v3121 = vmul.f32 %v1170, %v3120
    %v3122 = vsub.f32 1.0, %v3121
    %v3123 = vmul.f32 %v3120, %v3122
    %v3124 = vadd.f32 %v3120, %v3123
    %vm3125 = vweird.f32 %v1170
    %vm3126 = vweird.f32 %v3120
    %vm3127 = vmor %vm3125, %vm3126
    %v3128 = vsel %vm3127, %v3120, %v3124
    %v3129 = vand.u32 2147483647, %v1170
    %vm3130 = vcmp.eq.f32.partialorder %v3129, 8.507059e+37
    %v3131 = vand.u32 %v1170, 2147483648
    %v3132 = vor.u32 1.1754944e-38, %v3131
    %v3133 = vsel %vm3130, %v3132, %v3128
    %v3134 = vmul.f32 1.0, %v3133
    %v3135 = vrcp.pop %v1171
    %v3136 = vmul.f32 %v1171, %v3135
    %v3137 = vsub.f32 1.0, %v3136
    %v3138 = vmul.f32 %v3135, %v3137
    %v3139 = vadd.f32 %v3135, %v3138
    %vm3140 = vweird.f32 %v1171
    %vm3141 = vweird.f32 %v3135
    %vm3142 = vmor %vm3140, %vm3141
    %v3143 = vsel %vm3142, %v3135, %v3139
    %v3144 = vand.u32 2147483647, %v1171
    %vm3145 = vcmp.eq.f32.partialorder %v3144, 8.507059e+37
    %v3146 = vand.u32 %v1171, 2147483648
    %v3147 = vor.u32 1.1754944e-38, %v3146
    %v3148 = vsel %vm3145, %v3147, %v3143
    %v3149 = vmul.f32 1.0, %v3148
    %v3150 = vrcp.pop %v1172
    %v3151 = vmul.f32 %v1172, %v3150
    %v3152 = vsub.f32 1.0, %v3151
    %v3153 = vmul.f32 %v3150, %v3152
    %v3154 = vadd.f32 %v3150, %v3153
    %vm3155 = vweird.f32 %v1172
    %vm3156 = vweird.f32 %v3150
    %vm3157 = vmor %vm3155, %vm3156
    %v3158 = vsel %vm3157, %v3150, %v3154
    %v3159 = vand.u32 2147483647, %v1172
    %vm3160 = vcmp.eq.f32.partialorder %v3159, 8.507059e+37
    %v3161 = vand.u32 %v1172, 2147483648
    %v3162 = vor.u32 1.1754944e-38, %v3161
    %v3163 = vsel %vm3160, %v3162, %v3158
    %v3164 = vmul.f32 1.0, %v3163
    %v3165 = vrcp.pop %v1173
    %v3166 = vmul.f32 %v1173, %v3165
    %v3167 = vsub.f32 1.0, %v3166
    %v3168 = vmul.f32 %v3165, %v3167
    %v3169 = vadd.f32 %v3165, %v3168
    %vm3170 = vweird.f32 %v1173
    %vm3171 = vweird.f32 %v3165
    %vm3172 = vmor %vm3170, %vm3171
    %v3173 = vsel %vm3172, %v3165, %v3169
    %v3174 = vand.u32 2147483647, %v1173
    %vm3175 = vcmp.eq.f32.partialorder %v3174, 8.507059e+37
    %v3176 = vand.u32 %v1173, 2147483648
    %v3177 = vor.u32 1.1754944e-38, %v3176
    %v3178 = vsel %vm3175, %v3177, %v3173
    %v3179 = vmul.f32 1.0, %v3178
    %v3180 = vrcp.pop %v1174
    %v3181 = vmul.f32 %v1174, %v3180
    %v3182 = vsub.f32 1.0, %v3181
    %v3183 = vmul.f32 %v3180, %v3182
    %v3184 = vadd.f32 %v3180, %v3183
    %vm3185 = vweird.f32 %v1174
    %vm3186 = vweird.f32 %v3180
    %vm3187 = vmor %vm3185, %vm3186
    %v3188 = vsel %vm3187, %v3180, %v3184
    %v3189 = vand.u32 2147483647, %v1174
    %vm3190 = vcmp.eq.f32.partialorder %v3189, 8.507059e+37
    %v3191 = vand.u32 %v1174, 2147483648
    %v3192 = vor.u32 1.1754944e-38, %v3191
    %v3193 = vsel %vm3190, %v3192, %v3188
    %v3194 = vmul.f32 1.0, %v3193
    %v3195 = vrcp.pop %v1175
    %v3196 = vmul.f32 %v1175, %v3195
    %v3197 = vsub.f32 1.0, %v3196
    %v3198 = vmul.f32 %v3195, %v3197
    %v3199 = vadd.f32 %v3195, %v3198
    %vm3200 = vweird.f32 %v1175
    %vm3201 = vweird.f32 %v3195
    %vm3202 = vmor %vm3200, %vm3201
    %v3203 = vsel %vm3202, %v3195, %v3199
    %v3204 = vand.u32 2147483647, %v1175
    %vm3205 = vcmp.eq.f32.partialorder %v3204, 8.507059e+37
    %v3206 = vand.u32 %v1175, 2147483648
    %v3207 = vor.u32 1.1754944e-38, %v3206
    %v3208 = vsel %vm3205, %v3207, %v3203
    %v3209 = vmul.f32 1.0, %v3208
    %v3210 = vrcp.pop %v1176
    %v3211 = vmul.f32 %v1176, %v3210
    %v3212 = vsub.f32 1.0, %v3211
    %v3213 = vmul.f32 %v3210, %v3212
    %v3214 = vadd.f32 %v3210, %v3213
    %vm3215 = vweird.f32 %v1176
    %vm3216 = vweird.f32 %v3210
    %vm3217 = vmor %vm3215, %vm3216
    %v3218 = vsel %vm3217, %v3210, %v3214
    %v3219 = vand.u32 2147483647, %v1176
    %vm3220 = vcmp.eq.f32.partialorder %v3219, 8.507059e+37
    %v3221 = vand.u32 %v1176, 2147483648
    %v3222 = vor.u32 1.1754944e-38, %v3221
    %v3223 = vsel %vm3220, %v3222, %v3218
    %v3224 = vmul.f32 1.0, %v3223
    %v3225 = vrcp.pop %v1177
    %v3226 = vmul.f32 %v1177, %v3225
    %v3227 = vsub.f32 1.0, %v3226
    %v3228 = vmul.f32 %v3225, %v3227
    %v3229 = vadd.f32 %v3225, %v3228
    %vm3230 = vweird.f32 %v1177
    %vm3231 = vweird.f32 %v3225
    %vm3232 = vmor %vm3230, %vm3231
    %v3233 = vsel %vm3232, %v3225, %v3229
    %v3234 = vand.u32 2147483647, %v1177
    %vm3235 = vcmp.eq.f32.partialorder %v3234, 8.507059e+37
    %v3236 = vand.u32 %v1177, 2147483648
    %v3237 = vor.u32 1.1754944e-38, %v3236
    %v3238 = vsel %vm3235, %v3237, %v3233
    %v3239 = vmul.f32 1.0, %v3238
    %v3240 = vrcp.pop %v1178
    %v3241 = vmul.f32 %v1178, %v3240
    %v3242 = vsub.f32 1.0, %v3241
    %v3243 = vmul.f32 %v3240, %v3242
    %v3244 = vadd.f32 %v3240, %v3243
    %vm3245 = vweird.f32 %v1178
    %vm3246 = vweird.f32 %v3240
    %vm3247 = vmor %vm3245, %vm3246
    %v3248 = vsel %vm3247, %v3240, %v3244
    %v3249 = vand.u32 2147483647, %v1178
    %vm3250 = vcmp.eq.f32.partialorder %v3249, 8.507059e+37
    %v3251 = vand.u32 %v1178, 2147483648
    %v3252 = vor.u32 1.1754944e-38, %v3251
    %v3253 = vsel %vm3250, %v3252, %v3248
    %v3254 = vmul.f32 1.0, %v3253
    %v3255 = vrcp.pop %v1179
    %v3256 = vmul.f32 %v1179, %v3255
    %v3257 = vsub.f32 1.0, %v3256
    %v3258 = vmul.f32 %v3255, %v3257
    %v3259 = vadd.f32 %v3255, %v3258
    %vm3260 = vweird.f32 %v1179
    %vm3261 = vweird.f32 %v3255
    %vm3262 = vmor %vm3260, %vm3261
    %v3263 = vsel %vm3262, %v3255, %v3259
    %v3264 = vand.u32 2147483647, %v1179
    %vm3265 = vcmp.eq.f32.partialorder %v3264, 8.507059e+37
    %v3266 = vand.u32 %v1179, 2147483648
    %v3267 = vor.u32 1.1754944e-38, %v3266
    %v3268 = vsel %vm3265, %v3267, %v3263
    %v3269 = vmul.f32 1.0, %v3268
    %v3270 = vrcp.pop %v1180
    %v3271 = vmul.f32 %v1180, %v3270
    %v3272 = vsub.f32 1.0, %v3271
    %v3273 = vmul.f32 %v3270, %v3272
    %v3274 = vadd.f32 %v3270, %v3273
    %vm3275 = vweird.f32 %v1180
    %vm3276 = vweird.f32 %v3270
    %vm3277 = vmor %vm3275, %vm3276
    %v3278 = vsel %vm3277, %v3270, %v3274
    %v3279 = vand.u32 2147483647, %v1180
    %vm3280 = vcmp.eq.f32.partialorder %v3279, 8.507059e+37
    %v3281 = vand.u32 %v1180, 2147483648
    %v3282 = vor.u32 1.1754944e-38, %v3281
    %v3283 = vsel %vm3280, %v3282, %v3278
    %v3284 = vmul.f32 1.0, %v3283
    %v3285 = vrcp.pop %v1181
    %v3286 = vmul.f32 %v1181, %v3285
    %v3287 = vsub.f32 1.0, %v3286
    %v3288 = vmul.f32 %v3285, %v3287
    %v3289 = vadd.f32 %v3285, %v3288
    %vm3290 = vweird.f32 %v1181
    %vm3291 = vweird.f32 %v3285
    %vm3292 = vmor %vm3290, %vm3291
    %v3293 = vsel %vm3292, %v3285, %v3289
    %v3294 = vand.u32 2147483647, %v1181
    %vm3295 = vcmp.eq.f32.partialorder %v3294, 8.507059e+37
    %v3296 = vand.u32 %v1181, 2147483648
    %v3297 = vor.u32 1.1754944e-38, %v3296
    %v3298 = vsel %vm3295, %v3297, %v3293
    %v3299 = vmul.f32 1.0, %v3298
    %v3300 = vrcp.pop %v1182
    %v3301 = vmul.f32 %v1182, %v3300
    %v3302 = vsub.f32 1.0, %v3301
    %v3303 = vmul.f32 %v3300, %v3302
    %v3304 = vadd.f32 %v3300, %v3303
    %vm3305 = vweird.f32 %v1182
    %vm3306 = vweird.f32 %v3300
    %vm3307 = vmor %vm3305, %vm3306
    %v3308 = vsel %vm3307, %v3300, %v3304
    %v3309 = vand.u32 2147483647, %v1182
    %vm3310 = vcmp.eq.f32.partialorder %v3309, 8.507059e+37
    %v3311 = vand.u32 %v1182, 2147483648
    %v3312 = vor.u32 1.1754944e-38, %v3311
    %v3313 = vsel %vm3310, %v3312, %v3308
    %v3314 = vmul.f32 1.0, %v3313
    %v3315 = vrcp.pop %v1183
    %v3316 = vmul.f32 %v1183, %v3315
    %v3317 = vsub.f32 1.0, %v3316
    %v3318 = vmul.f32 %v3315, %v3317
    %v3319 = vadd.f32 %v3315, %v3318
    %vm3320 = vweird.f32 %v1183
    %vm3321 = vweird.f32 %v3315
    %vm3322 = vmor %vm3320, %vm3321
    %v3323 = vsel %vm3322, %v3315, %v3319
    %v3324 = vand.u32 2147483647, %v1183
    %vm3325 = vcmp.eq.f32.partialorder %v3324, 8.507059e+37
    %v3326 = vand.u32 %v1183, 2147483648
    %v3327 = vor.u32 1.1754944e-38, %v3326
    %v3328 = vsel %vm3325, %v3327, %v3323
    %v3329 = vmul.f32 1.0, %v3328
    %v3330 = vrcp.pop %v1184
    %v3331 = vmul.f32 %v1184, %v3330
    %v3332 = vsub.f32 1.0, %v3331
    %v3333 = vmul.f32 %v3330, %v3332
    %v3334 = vadd.f32 %v3330, %v3333
    %vm3335 = vweird.f32 %v1184
    %vm3336 = vweird.f32 %v3330
    %vm3337 = vmor %vm3335, %vm3336
    %v3338 = vsel %vm3337, %v3330, %v3334
    %v3339 = vand.u32 2147483647, %v1184
    %vm3340 = vcmp.eq.f32.partialorder %v3339, 8.507059e+37
    %v3341 = vand.u32 %v1184, 2147483648
    %v3342 = vor.u32 1.1754944e-38, %v3341
    %v3343 = vsel %vm3340, %v3342, %v3338
    %v3344 = vmul.f32 1.0, %v3343
    %v3345 = vrcp.pop %v1185
    %v3346 = vmul.f32 %v1185, %v3345
    %v3347 = vsub.f32 1.0, %v3346
    %v3348 = vmul.f32 %v3345, %v3347
    %v3349 = vadd.f32 %v3345, %v3348
    %vm3350 = vweird.f32 %v1185
    %vm3351 = vweird.f32 %v3345
    %vm3352 = vmor %vm3350, %vm3351
    %v3353 = vsel %vm3352, %v3345, %v3349
    %v3354 = vand.u32 2147483647, %v1185
    %vm3355 = vcmp.eq.f32.partialorder %v3354, 8.507059e+37
    %v3356 = vand.u32 %v1185, 2147483648
    %v3357 = vor.u32 1.1754944e-38, %v3356
    %v3358 = vsel %vm3355, %v3357, %v3353
    %v3359 = vmul.f32 1.0, %v3358
    %v3360 = vrcp.pop %v1186
    %v3361 = vmul.f32 %v1186, %v3360
    %v3362 = vsub.f32 1.0, %v3361
    %v3363 = vmul.f32 %v3360, %v3362
    %v3364 = vadd.f32 %v3360, %v3363
    %vm3365 = vweird.f32 %v1186
    %vm3366 = vweird.f32 %v3360
    %vm3367 = vmor %vm3365, %vm3366
    %v3368 = vsel %vm3367, %v3360, %v3364
    %v3369 = vand.u32 2147483647, %v1186
    %vm3370 = vcmp.eq.f32.partialorder %v3369, 8.507059e+37
    %v3371 = vand.u32 %v1186, 2147483648
    %v3372 = vor.u32 1.1754944e-38, %v3371
    %v3373 = vsel %vm3370, %v3372, %v3368
    %v3374 = vmul.f32 1.0, %v3373
    %v3375 = vrcp.pop %v1187
    %v3376 = vmul.f32 %v1187, %v3375
    %v3377 = vsub.f32 1.0, %v3376
    %v3378 = vmul.f32 %v3375, %v3377
    %v3379 = vadd.f32 %v3375, %v3378
    %vm3380 = vweird.f32 %v1187
    %vm3381 = vweird.f32 %v3375
    %vm3382 = vmor %vm3380, %vm3381
    %v3383 = vsel %vm3382, %v3375, %v3379
    %v3384 = vand.u32 2147483647, %v1187
    %vm3385 = vcmp.eq.f32.partialorder %v3384, 8.507059e+37
    %v3386 = vand.u32 %v1187, 2147483648
    %v3387 = vor.u32 1.1754944e-38, %v3386
    %v3388 = vsel %vm3385, %v3387, %v3383
    %v3389 = vmul.f32 1.0, %v3388
    %v3390 = vrcp.pop %v1188
    %v3391 = vmul.f32 %v1188, %v3390
    %v3392 = vsub.f32 1.0, %v3391
    %v3393 = vmul.f32 %v3390, %v3392
    %v3394 = vadd.f32 %v3390, %v3393
    %vm3395 = vweird.f32 %v1188
    %vm3396 = vweird.f32 %v3390
    %vm3397 = vmor %vm3395, %vm3396
    %v3398 = vsel %vm3397, %v3390, %v3394
    %v3399 = vand.u32 2147483647, %v1188
    %vm3400 = vcmp.eq.f32.partialorder %v3399, 8.507059e+37
    %v3401 = vand.u32 %v1188, 2147483648
    %v3402 = vor.u32 1.1754944e-38, %v3401
    %v3403 = vsel %vm3400, %v3402, %v3398
    %v3404 = vmul.f32 1.0, %v3403
    %v3405 = vrcp.pop %v1189
    %v3406 = vmul.f32 %v1189, %v3405
    %v3407 = vsub.f32 1.0, %v3406
    %v3408 = vmul.f32 %v3405, %v3407
    %v3409 = vadd.f32 %v3405, %v3408
    %vm3410 = vweird.f32 %v1189
    %vm3411 = vweird.f32 %v3405
    %vm3412 = vmor %vm3410, %vm3411
    %v3413 = vsel %vm3412, %v3405, %v3409
    %v3414 = vand.u32 2147483647, %v1189
    %vm3415 = vcmp.eq.f32.partialorder %v3414, 8.507059e+37
    %v3416 = vand.u32 %v1189, 2147483648
    %v3417 = vor.u32 1.1754944e-38, %v3416
    %v3418 = vsel %vm3415, %v3417, %v3413
    %v3419 = vmul.f32 1.0, %v3418
    %v3420 = vrcp.pop %v1190
    %v3421 = vmul.f32 %v1190, %v3420
    %v3422 = vsub.f32 1.0, %v3421
    %v3423 = vmul.f32 %v3420, %v3422
    %v3424 = vadd.f32 %v3420, %v3423
    %vm3425 = vweird.f32 %v1190
    %vm3426 = vweird.f32 %v3420
    %vm3427 = vmor %vm3425, %vm3426
    %v3428 = vsel %vm3427, %v3420, %v3424
    %v3429 = vand.u32 2147483647, %v1190
    %vm3430 = vcmp.eq.f32.partialorder %v3429, 8.507059e+37
    %v3431 = vand.u32 %v1190, 2147483648
    %v3432 = vor.u32 1.1754944e-38, %v3431
    %v3433 = vsel %vm3430, %v3432, %v3428
    %v3434 = vmul.f32 1.0, %v3433
    %v3435 = vrcp.pop %v1191
    %v3436 = vmul.f32 %v1191, %v3435
    %v3437 = vsub.f32 1.0, %v3436
    %v3438 = vmul.f32 %v3435, %v3437
    %v3439 = vadd.f32 %v3435, %v3438
    %vm3440 = vweird.f32 %v1191
    %vm3441 = vweird.f32 %v3435
    %vm3442 = vmor %vm3440, %vm3441
    %v3443 = vsel %vm3442, %v3435, %v3439
    %v3444 = vand.u32 2147483647, %v1191
    %vm3445 = vcmp.eq.f32.partialorder %v3444, 8.507059e+37
    %v3446 = vand.u32 %v1191, 2147483648
    %v3447 = vor.u32 1.1754944e-38, %v3446
    %v3448 = vsel %vm3445, %v3447, %v3443
    %v3449 = vmul.f32 1.0, %v3448
    %v3450 = vrcp.pop %v1192
    %v3451 = vmul.f32 %v1192, %v3450
    %v3452 = vsub.f32 1.0, %v3451
    %v3453 = vmul.f32 %v3450, %v3452
    %v3454 = vadd.f32 %v3450, %v3453
    %vm3455 = vweird.f32 %v1192
    %vm3456 = vweird.f32 %v3450
    %vm3457 = vmor %vm3455, %vm3456
    %v3458 = vsel %vm3457, %v3450, %v3454
    %v3459 = vand.u32 2147483647, %v1192
    %vm3460 = vcmp.eq.f32.partialorder %v3459, 8.507059e+37
    %v3461 = vand.u32 %v1192, 2147483648
    %v3462 = vor.u32 1.1754944e-38, %v3461
    %v3463 = vsel %vm3460, %v3462, %v3458
    %v3464 = vmul.f32 1.0, %v3463
    %v3465 = vrcp.pop %v1193
    %v3466 = vmul.f32 %v1193, %v3465
    %v3467 = vsub.f32 1.0, %v3466
    %v3468 = vmul.f32 %v3465, %v3467
    %v3469 = vadd.f32 %v3465, %v3468
    %vm3470 = vweird.f32 %v1193
    %vm3471 = vweird.f32 %v3465
    %vm3472 = vmor %vm3470, %vm3471
    %v3473 = vsel %vm3472, %v3465, %v3469
    %v3474 = vand.u32 2147483647, %v1193
    %vm3475 = vcmp.eq.f32.partialorder %v3474, 8.507059e+37
    %v3476 = vand.u32 %v1193, 2147483648
    %v3477 = vor.u32 1.1754944e-38, %v3476
    %v3478 = vsel %vm3475, %v3477, %v3473
    %v3479 = vmul.f32 1.0, %v3478
    %v3480 = vrcp.pop %v1194
    %v3481 = vmul.f32 %v1194, %v3480
    %v3482 = vsub.f32 1.0, %v3481
    %v3483 = vmul.f32 %v3480, %v3482
    %v3484 = vadd.f32 %v3480, %v3483
    %vm3485 = vweird.f32 %v1194
    %vm3486 = vweird.f32 %v3480
    %vm3487 = vmor %vm3485, %vm3486
    %v3488 = vsel %vm3487, %v3480, %v3484
    %v3489 = vand.u32 2147483647, %v1194
    %vm3490 = vcmp.eq.f32.partialorder %v3489, 8.507059e+37
    %v3491 = vand.u32 %v1194, 2147483648
    %v3492 = vor.u32 1.1754944e-38, %v3491
    %v3493 = vsel %vm3490, %v3492, %v3488
    %v3494 = vmul.f32 1.0, %v3493
    %v3495 = vrcp.pop %v1195
    %v3496 = vmul.f32 %v1195, %v3495
    %v3497 = vsub.f32 1.0, %v3496
    %v3498 = vmul.f32 %v3495, %v3497
    %v3499 = vadd.f32 %v3495, %v3498
    %vm3500 = vweird.f32 %v1195
    %vm3501 = vweird.f32 %v3495
    %vm3502 = vmor %vm3500, %vm3501
    %v3503 = vsel %vm3502, %v3495, %v3499
    %v3504 = vand.u32 2147483647, %v1195
    %vm3505 = vcmp.eq.f32.partialorder %v3504, 8.507059e+37
    %v3506 = vand.u32 %v1195, 2147483648
    %v3507 = vor.u32 1.1754944e-38, %v3506
    %v3508 = vsel %vm3505, %v3507, %v3503
    %v3509 = vmul.f32 1.0, %v3508
    %v3510 = vrcp.pop %v1196
    %v3511 = vmul.f32 %v1196, %v3510
    %v3512 = vsub.f32 1.0, %v3511
    %v3513 = vmul.f32 %v3510, %v3512
    %v3514 = vadd.f32 %v3510, %v3513
    %vm3515 = vweird.f32 %v1196
    %vm3516 = vweird.f32 %v3510
    %vm3517 = vmor %vm3515, %vm3516
    %v3518 = vsel %vm3517, %v3510, %v3514
    %v3519 = vand.u32 2147483647, %v1196
    %vm3520 = vcmp.eq.f32.partialorder %v3519, 8.507059e+37
    %v3521 = vand.u32 %v1196, 2147483648
    %v3522 = vor.u32 1.1754944e-38, %v3521
    %v3523 = vsel %vm3520, %v3522, %v3518
    %v3524 = vmul.f32 1.0, %v3523
    %v3525 = vrcp.pop %v1197
    %v3526 = vmul.f32 %v1197, %v3525
    %v3527 = vsub.f32 1.0, %v3526
    %v3528 = vmul.f32 %v3525, %v3527
    %v3529 = vadd.f32 %v3525, %v3528
    %vm3530 = vweird.f32 %v1197
    %vm3531 = vweird.f32 %v3525
    %vm3532 = vmor %vm3530, %vm3531
    %v3533 = vsel %vm3532, %v3525, %v3529
    %v3534 = vand.u32 2147483647, %v1197
    %vm3535 = vcmp.eq.f32.partialorder %v3534, 8.507059e+37
    %v3536 = vand.u32 %v1197, 2147483648
    %v3537 = vor.u32 1.1754944e-38, %v3536
    %v3538 = vsel %vm3535, %v3537, %v3533
    %v3539 = vmul.f32 1.0, %v3538
    %v3540 = vrcp.pop %v1198
    %v3541 = vmul.f32 %v1198, %v3540
    %v3542 = vsub.f32 1.0, %v3541
    %v3543 = vmul.f32 %v3540, %v3542
    %v3544 = vadd.f32 %v3540, %v3543
    %vm3545 = vweird.f32 %v1198
    %vm3546 = vweird.f32 %v3540
    %vm3547 = vmor %vm3545, %vm3546
    %v3548 = vsel %vm3547, %v3540, %v3544
    %v3549 = vand.u32 2147483647, %v1198
    %vm3550 = vcmp.eq.f32.partialorder %v3549, 8.507059e+37
    %v3551 = vand.u32 %v1198, 2147483648
    %v3552 = vor.u32 1.1754944e-38, %v3551
    %v3553 = vsel %vm3550, %v3552, %v3548
    %v3554 = vmul.f32 1.0, %v3553
    %v3555 = vrcp.pop %v1199
    %v3556 = vmul.f32 %v1199, %v3555
    %v3557 = vsub.f32 1.0, %v3556
    %v3558 = vmul.f32 %v3555, %v3557
    %v3559 = vadd.f32 %v3555, %v3558
    %vm3560 = vweird.f32 %v1199
    %vm3561 = vweird.f32 %v3555
    %vm3562 = vmor %vm3560, %vm3561
    %v3563 = vsel %vm3562, %v3555, %v3559
    %v3564 = vand.u32 2147483647, %v1199
    %vm3565 = vcmp.eq.f32.partialorder %v3564, 8.507059e+37
    %v3566 = vand.u32 %v1199, 2147483648
    %v3567 = vor.u32 1.1754944e-38, %v3566
    %v3568 = vsel %vm3565, %v3567, %v3563
    %v3569 = vmul.f32 1.0, %v3568
    %v3570 = vrcp.pop %v1200
    %v3571 = vmul.f32 %v1200, %v3570
    %v3572 = vsub.f32 1.0, %v3571
    %v3573 = vmul.f32 %v3570, %v3572
    %v3574 = vadd.f32 %v3570, %v3573
    %vm3575 = vweird.f32 %v1200
    %vm3576 = vweird.f32 %v3570
    %vm3577 = vmor %vm3575, %vm3576
    %v3578 = vsel %vm3577, %v3570, %v3574
    %v3579 = vand.u32 2147483647, %v1200
    %vm3580 = vcmp.eq.f32.partialorder %v3579, 8.507059e+37
    %v3581 = vand.u32 %v1200, 2147483648
    %v3582 = vor.u32 1.1754944e-38, %v3581
    %v3583 = vsel %vm3580, %v3582, %v3578
    %v3584 = vmul.f32 1.0, %v3583
    %v3585 = vrcp.pop %v1201
    %v3586 = vmul.f32 %v1201, %v3585
    %v3587 = vsub.f32 1.0, %v3586
    %v3588 = vmul.f32 %v3585, %v3587
    %v3589 = vadd.f32 %v3585, %v3588
    %vm3590 = vweird.f32 %v1201
    %vm3591 = vweird.f32 %v3585
    %vm3592 = vmor %vm3590, %vm3591
    %v3593 = vsel %vm3592, %v3585, %v3589
    %v3594 = vand.u32 2147483647, %v1201
    %vm3595 = vcmp.eq.f32.partialorder %v3594, 8.507059e+37
    %v3596 = vand.u32 %v1201, 2147483648
    %v3597 = vor.u32 1.1754944e-38, %v3596
    %v3598 = vsel %vm3595, %v3597, %v3593
    %v3599 = vmul.f32 1.0, %v3598
    %v3600 = vrcp.pop %v1202
    %v3601 = vmul.f32 %v1202, %v3600
    %v3602 = vsub.f32 1.0, %v3601
    %v3603 = vmul.f32 %v3600, %v3602
    %v3604 = vadd.f32 %v3600, %v3603
    %vm3605 = vweird.f32 %v1202
    %vm3606 = vweird.f32 %v3600
    %vm3607 = vmor %vm3605, %vm3606
    %v3608 = vsel %vm3607, %v3600, %v3604
    %v3609 = vand.u32 2147483647, %v1202
    %vm3610 = vcmp.eq.f32.partialorder %v3609, 8.507059e+37
    %v3611 = vand.u32 %v1202, 2147483648
    %v3612 = vor.u32 1.1754944e-38, %v3611
    %v3613 = vsel %vm3610, %v3612, %v3608
    %v3614 = vmul.f32 1.0, %v3613
    %v3615 = vrcp.pop %v1203
    %v3616 = vmul.f32 %v1203, %v3615
    %v3617 = vsub.f32 1.0, %v3616
    %v3618 = vmul.f32 %v3615, %v3617
    %v3619 = vadd.f32 %v3615, %v3618
    %vm3620 = vweird.f32 %v1203
    %vm3621 = vweird.f32 %v3615
    %vm3622 = vmor %vm3620, %vm3621
    %v3623 = vsel %vm3622, %v3615, %v3619
    %v3624 = vand.u32 2147483647, %v1203
    %vm3625 = vcmp.eq.f32.partialorder %v3624, 8.507059e+37
    %v3626 = vand.u32 %v1203, 2147483648
    %v3627 = vor.u32 1.1754944e-38, %v3626
    %v3628 = vsel %vm3625, %v3627, %v3623
    %v3629 = vmul.f32 1.0, %v3628
    %v3630 = vrcp.pop %v1204
    %v3631 = vmul.f32 %v1204, %v3630
    %v3632 = vsub.f32 1.0, %v3631
    %v3633 = vmul.f32 %v3630, %v3632
    %v3634 = vadd.f32 %v3630, %v3633
    %vm3635 = vweird.f32 %v1204
    %vm3636 = vweird.f32 %v3630
    %vm3637 = vmor %vm3635, %vm3636
    %v3638 = vsel %vm3637, %v3630, %v3634
    %v3639 = vand.u32 2147483647, %v1204
    %vm3640 = vcmp.eq.f32.partialorder %v3639, 8.507059e+37
    %v3641 = vand.u32 %v1204, 2147483648
    %v3642 = vor.u32 1.1754944e-38, %v3641
    %v3643 = vsel %vm3640, %v3642, %v3638
    %v3644 = vmul.f32 1.0, %v3643
    %v3645 = vrcp.pop %v1205
    %v3646 = vmul.f32 %v1205, %v3645
    %v3647 = vsub.f32 1.0, %v3646
    %v3648 = vmul.f32 %v3645, %v3647
    %v3649 = vadd.f32 %v3645, %v3648
    %vm3650 = vweird.f32 %v1205
    %vm3651 = vweird.f32 %v3645
    %vm3652 = vmor %vm3650, %vm3651
    %v3653 = vsel %vm3652, %v3645, %v3649
    %v3654 = vand.u32 2147483647, %v1205
    %vm3655 = vcmp.eq.f32.partialorder %v3654, 8.507059e+37
    %v3656 = vand.u32 %v1205, 2147483648
    %v3657 = vor.u32 1.1754944e-38, %v3656
    %v3658 = vsel %vm3655, %v3657, %v3653
    %v3659 = vmul.f32 1.0, %v3658
    %v3660 = vrcp.pop %v1206
    %v3661 = vmul.f32 %v1206, %v3660
    %v3662 = vsub.f32 1.0, %v3661
    %v3663 = vmul.f32 %v3660, %v3662
    %v3664 = vadd.f32 %v3660, %v3663
    %vm3665 = vweird.f32 %v1206
    %vm3666 = vweird.f32 %v3660
    %vm3667 = vmor %vm3665, %vm3666
    %v3668 = vsel %vm3667, %v3660, %v3664
    %v3669 = vand.u32 2147483647, %v1206
    %vm3670 = vcmp.eq.f32.partialorder %v3669, 8.507059e+37
    %v3671 = vand.u32 %v1206, 2147483648
    %v3672 = vor.u32 1.1754944e-38, %v3671
    %v3673 = vsel %vm3670, %v3672, %v3668
    %v3674 = vmul.f32 1.0, %v3673
    %v3675 = vrcp.pop %v1207
    %v3676 = vmul.f32 %v1207, %v3675
    %v3677 = vsub.f32 1.0, %v3676
    %v3678 = vmul.f32 %v3675, %v3677
    %v3679 = vadd.f32 %v3675, %v3678
    %vm3680 = vweird.f32 %v1207
    %vm3681 = vweird.f32 %v3675
    %vm3682 = vmor %vm3680, %vm3681
    %v3683 = vsel %vm3682, %v3675, %v3679
    %v3684 = vand.u32 2147483647, %v1207
    %vm3685 = vcmp.eq.f32.partialorder %v3684, 8.507059e+37
    %v3686 = vand.u32 %v1207, 2147483648
    %v3687 = vor.u32 1.1754944e-38, %v3686
    %v3688 = vsel %vm3685, %v3687, %v3683
    %v3689 = vmul.f32 1.0, %v3688
    %v3690 = vrcp.pop %v1208
    %v3691 = vmul.f32 %v1208, %v3690
    %v3692 = vsub.f32 1.0, %v3691
    %v3693 = vmul.f32 %v3690, %v3692
    %v3694 = vadd.f32 %v3690, %v3693
    %vm3695 = vweird.f32 %v1208
    %vm3696 = vweird.f32 %v3690
    %vm3697 = vmor %vm3695, %vm3696
    %v3698 = vsel %vm3697, %v3690, %v3694
    %v3699 = vand.u32 2147483647, %v1208
    %vm3700 = vcmp.eq.f32.partialorder %v3699, 8.507059e+37
    %v3701 = vand.u32 %v1208, 2147483648
    %v3702 = vor.u32 1.1754944e-38, %v3701
    %v3703 = vsel %vm3700, %v3702, %v3698
    %v3704 = vmul.f32 1.0, %v3703
    %v3705 = vrcp.pop %v1209
    %v3706 = vmul.f32 %v1209, %v3705
    %v3707 = vsub.f32 1.0, %v3706
    %v3708 = vmul.f32 %v3705, %v3707
    %v3709 = vadd.f32 %v3705, %v3708
    %vm3710 = vweird.f32 %v1209
    %vm3711 = vweird.f32 %v3705
    %vm3712 = vmor %vm3710, %vm3711
    %v3713 = vsel %vm3712, %v3705, %v3709
    %v3714 = vand.u32 2147483647, %v1209
    %vm3715 = vcmp.eq.f32.partialorder %v3714, 8.507059e+37
    %v3716 = vand.u32 %v1209, 2147483648
    %v3717 = vor.u32 1.1754944e-38, %v3716
    %v3718 = vsel %vm3715, %v3717, %v3713
    %v3719 = vmul.f32 1.0, %v3718
    %v3720 = vrcp.pop %v1210
    %v3721 = vmul.f32 %v1210, %v3720
    %v3722 = vsub.f32 1.0, %v3721
    %v3723 = vmul.f32 %v3720, %v3722
    %v3724 = vadd.f32 %v3720, %v3723
    %vm3725 = vweird.f32 %v1210
    %vm3726 = vweird.f32 %v3720
    %vm3727 = vmor %vm3725, %vm3726
    %v3728 = vsel %vm3727, %v3720, %v3724
    %v3729 = vand.u32 2147483647, %v1210
    %vm3730 = vcmp.eq.f32.partialorder %v3729, 8.507059e+37
    %v3731 = vand.u32 %v1210, 2147483648
    %v3732 = vor.u32 1.1754944e-38, %v3731
    %v3733 = vsel %vm3730, %v3732, %v3728
    %v3734 = vmul.f32 1.0, %v3733
    %v3735 = vrcp.pop %v1211
    %v3736 = vmul.f32 %v1211, %v3735
    %v3737 = vsub.f32 1.0, %v3736
    %v3738 = vmul.f32 %v3735, %v3737
    %v3739 = vadd.f32 %v3735, %v3738
    %vm3740 = vweird.f32 %v1211
    %vm3741 = vweird.f32 %v3735
    %vm3742 = vmor %vm3740, %vm3741
    %v3743 = vsel %vm3742, %v3735, %v3739
    %v3744 = vand.u32 2147483647, %v1211
    %vm3745 = vcmp.eq.f32.partialorder %v3744, 8.507059e+37
    %v3746 = vand.u32 %v1211, 2147483648
    %v3747 = vor.u32 1.1754944e-38, %v3746
    %v3748 = vsel %vm3745, %v3747, %v3743
    %v3749 = vmul.f32 1.0, %v3748
    %v3750 = vrcp.pop %v1212
    %v3751 = vmul.f32 %v1212, %v3750
    %v3752 = vsub.f32 1.0, %v3751
    %v3753 = vmul.f32 %v3750, %v3752
    %v3754 = vadd.f32 %v3750, %v3753
    %vm3755 = vweird.f32 %v1212
    %vm3756 = vweird.f32 %v3750
    %vm3757 = vmor %vm3755, %vm3756
    %v3758 = vsel %vm3757, %v3750, %v3754
    %v3759 = vand.u32 2147483647, %v1212
    %vm3760 = vcmp.eq.f32.partialorder %v3759, 8.507059e+37
    %v3761 = vand.u32 %v1212, 2147483648
    %v3762 = vor.u32 1.1754944e-38, %v3761
    %v3763 = vsel %vm3760, %v3762, %v3758
    %v3764 = vmul.f32 1.0, %v3763
    %v3765 = vrcp.pop %v1213
    %v3766 = vmul.f32 %v1213, %v3765
    %v3767 = vsub.f32 1.0, %v3766
    %v3768 = vmul.f32 %v3765, %v3767
    %v3769 = vadd.f32 %v3765, %v3768
    %vm3770 = vweird.f32 %v1213
    %vm3771 = vweird.f32 %v3765
    %vm3772 = vmor %vm3770, %vm3771
    %v3773 = vsel %vm3772, %v3765, %v3769
    %v3774 = vand.u32 2147483647, %v1213
    %vm3775 = vcmp.eq.f32.partialorder %v3774, 8.507059e+37
    %v3776 = vand.u32 %v1213, 2147483648
    %v3777 = vor.u32 1.1754944e-38, %v3776
    %v3778 = vsel %vm3775, %v3777, %v3773
    %v3779 = vmul.f32 1.0, %v3778
    %v3780 = vrcp.pop %v1214
    %v3781 = vmul.f32 %v1214, %v3780
    %v3782 = vsub.f32 1.0, %v3781
    %v3783 = vmul.f32 %v3780, %v3782
    %v3784 = vadd.f32 %v3780, %v3783
    %vm3785 = vweird.f32 %v1214
    %vm3786 = vweird.f32 %v3780
    %vm3787 = vmor %vm3785, %vm3786
    %v3788 = vsel %vm3787, %v3780, %v3784
    %v3789 = vand.u32 2147483647, %v1214
    %vm3790 = vcmp.eq.f32.partialorder %v3789, 8.507059e+37
    %v3791 = vand.u32 %v1214, 2147483648
    %v3792 = vor.u32 1.1754944e-38, %v3791
    %v3793 = vsel %vm3790, %v3792, %v3788
    %v3794 = vmul.f32 1.0, %v3793
    %v3795 = vrcp.pop %v1215
    %v3796 = vmul.f32 %v1215, %v3795
    %v3797 = vsub.f32 1.0, %v3796
    %v3798 = vmul.f32 %v3795, %v3797
    %v3799 = vadd.f32 %v3795, %v3798
    %vm3800 = vweird.f32 %v1215
    %vm3801 = vweird.f32 %v3795
    %vm3802 = vmor %vm3800, %vm3801
    %v3803 = vsel %vm3802, %v3795, %v3799
    %v3804 = vand.u32 2147483647, %v1215
    %vm3805 = vcmp.eq.f32.partialorder %v3804, 8.507059e+37
    %v3806 = vand.u32 %v1215, 2147483648
    %v3807 = vor.u32 1.1754944e-38, %v3806
    %v3808 = vsel %vm3805, %v3807, %v3803
    %v3809 = vmul.f32 1.0, %v3808
    %v3810 = vrcp.pop %v1216
    %v3811 = vmul.f32 %v1216, %v3810
    %v3812 = vsub.f32 1.0, %v3811
    %v3813 = vmul.f32 %v3810, %v3812
    %v3814 = vadd.f32 %v3810, %v3813
    %vm3815 = vweird.f32 %v1216
    %vm3816 = vweird.f32 %v3810
    %vm3817 = vmor %vm3815, %vm3816
    %v3818 = vsel %vm3817, %v3810, %v3814
    %v3819 = vand.u32 2147483647, %v1216
    %vm3820 = vcmp.eq.f32.partialorder %v3819, 8.507059e+37
    %v3821 = vand.u32 %v1216, 2147483648
    %v3822 = vor.u32 1.1754944e-38, %v3821
    %v3823 = vsel %vm3820, %v3822, %v3818
    %v3824 = vmul.f32 1.0, %v3823
    %v3825 = vrcp.pop %v1217
    %v3826 = vmul.f32 %v1217, %v3825
    %v3827 = vsub.f32 1.0, %v3826
    %v3828 = vmul.f32 %v3825, %v3827
    %v3829 = vadd.f32 %v3825, %v3828
    %vm3830 = vweird.f32 %v1217
    %vm3831 = vweird.f32 %v3825
    %vm3832 = vmor %vm3830, %vm3831
    %v3833 = vsel %vm3832, %v3825, %v3829
    %v3834 = vand.u32 2147483647, %v1217
    %vm3835 = vcmp.eq.f32.partialorder %v3834, 8.507059e+37
    %v3836 = vand.u32 %v1217, 2147483648
    %v3837 = vor.u32 1.1754944e-38, %v3836
    %v3838 = vsel %vm3835, %v3837, %v3833
    %v3839 = vmul.f32 1.0, %v3838
    %v3840 = vrcp.pop %v1218
    %v3841 = vmul.f32 %v1218, %v3840
    %v3842 = vsub.f32 1.0, %v3841
    %v3843 = vmul.f32 %v3840, %v3842
    %v3844 = vadd.f32 %v3840, %v3843
    %vm3845 = vweird.f32 %v1218
    %vm3846 = vweird.f32 %v3840
    %vm3847 = vmor %vm3845, %vm3846
    %v3848 = vsel %vm3847, %v3840, %v3844
    %v3849 = vand.u32 2147483647, %v1218
    %vm3850 = vcmp.eq.f32.partialorder %v3849, 8.507059e+37
    %v3851 = vand.u32 %v1218, 2147483648
    %v3852 = vor.u32 1.1754944e-38, %v3851
    %v3853 = vsel %vm3850, %v3852, %v3848
    %v3854 = vmul.f32 1.0, %v3853
    %v3855 = vrcp.pop %v1219
    %v3856 = vmul.f32 %v1219, %v3855
    %v3857 = vsub.f32 1.0, %v3856
    %v3858 = vmul.f32 %v3855, %v3857
    %v3859 = vadd.f32 %v3855, %v3858
    %vm3860 = vweird.f32 %v1219
    %vm3861 = vweird.f32 %v3855
    %vm3862 = vmor %vm3860, %vm3861
    %v3863 = vsel %vm3862, %v3855, %v3859
    %v3864 = vand.u32 2147483647, %v1219
    %vm3865 = vcmp.eq.f32.partialorder %v3864, 8.507059e+37
    %v3866 = vand.u32 %v1219, 2147483648
    %v3867 = vor.u32 1.1754944e-38, %v3866
    %v3868 = vsel %vm3865, %v3867, %v3863
    %v3869 = vmul.f32 1.0, %v3868
    %v3870 = vrcp.pop %v1220
    %v3871 = vmul.f32 %v1220, %v3870
    %v3872 = vsub.f32 1.0, %v3871
    %v3873 = vmul.f32 %v3870, %v3872
    %v3874 = vadd.f32 %v3870, %v3873
    %vm3875 = vweird.f32 %v1220
    %vm3876 = vweird.f32 %v3870
    %vm3877 = vmor %vm3875, %vm3876
    %v3878 = vsel %vm3877, %v3870, %v3874
    %v3879 = vand.u32 2147483647, %v1220
    %vm3880 = vcmp.eq.f32.partialorder %v3879, 8.507059e+37
    %v3881 = vand.u32 %v1220, 2147483648
    %v3882 = vor.u32 1.1754944e-38, %v3881
    %v3883 = vsel %vm3880, %v3882, %v3878
    %v3884 = vmul.f32 1.0, %v3883
    %v3885 = vrcp.pop %v1221
    %v3886 = vmul.f32 %v1221, %v3885
    %v3887 = vsub.f32 1.0, %v3886
    %v3888 = vmul.f32 %v3885, %v3887
    %v3889 = vadd.f32 %v3885, %v3888
    %vm3890 = vweird.f32 %v1221
    %vm3891 = vweird.f32 %v3885
    %vm3892 = vmor %vm3890, %vm3891
    %v3893 = vsel %vm3892, %v3885, %v3889
    %v3894 = vand.u32 2147483647, %v1221
    %vm3895 = vcmp.eq.f32.partialorder %v3894, 8.507059e+37
    %v3896 = vand.u32 %v1221, 2147483648
    %v3897 = vor.u32 1.1754944e-38, %v3896
    %v3898 = vsel %vm3895, %v3897, %v3893
    %v3899 = vmul.f32 1.0, %v3898
    %v3900 = vrcp.pop %v1222
    %v3901 = vmul.f32 %v1222, %v3900
    %v3902 = vsub.f32 1.0, %v3901
    %v3903 = vmul.f32 %v3900, %v3902
    %v3904 = vadd.f32 %v3900, %v3903
    %vm3905 = vweird.f32 %v1222
    %vm3906 = vweird.f32 %v3900
    %vm3907 = vmor %vm3905, %vm3906
    %v3908 = vsel %vm3907, %v3900, %v3904
    %v3909 = vand.u32 2147483647, %v1222
    %vm3910 = vcmp.eq.f32.partialorder %v3909, 8.507059e+37
    %v3911 = vand.u32 %v1222, 2147483648
    %v3912 = vor.u32 1.1754944e-38, %v3911
    %v3913 = vsel %vm3910, %v3912, %v3908
    %v3914 = vmul.f32 1.0, %v3913
    %v3915 = vrcp.pop %v1223
    %v3916 = vmul.f32 %v1223, %v3915
    %v3917 = vsub.f32 1.0, %v3916
    %v3918 = vmul.f32 %v3915, %v3917
    %v3919 = vadd.f32 %v3915, %v3918
    %vm3920 = vweird.f32 %v1223
    %vm3921 = vweird.f32 %v3915
    %vm3922 = vmor %vm3920, %vm3921
    %v3923 = vsel %vm3922, %v3915, %v3919
    %v3924 = vand.u32 2147483647, %v1223
    %vm3925 = vcmp.eq.f32.partialorder %v3924, 8.507059e+37
    %v3926 = vand.u32 %v1223, 2147483648
    %v3927 = vor.u32 1.1754944e-38, %v3926
    %v3928 = vsel %vm3925, %v3927, %v3923
    %v3929 = vmul.f32 1.0, %v3928
    %v3930 = vrcp.pop %v1224
    %v3931 = vmul.f32 %v1224, %v3930
    %v3932 = vsub.f32 1.0, %v3931
    %v3933 = vmul.f32 %v3930, %v3932
    %v3934 = vadd.f32 %v3930, %v3933
    %vm3935 = vweird.f32 %v1224
    %vm3936 = vweird.f32 %v3930
    %vm3937 = vmor %vm3935, %vm3936
    %v3938 = vsel %vm3937, %v3930, %v3934
    %v3939 = vand.u32 2147483647, %v1224
    %vm3940 = vcmp.eq.f32.partialorder %v3939, 8.507059e+37
    %v3941 = vand.u32 %v1224, 2147483648
    %v3942 = vor.u32 1.1754944e-38, %v3941
    %v3943 = vsel %vm3940, %v3942, %v3938
    %v3944 = vmul.f32 1.0, %v3943
    %v3945 = vrcp.pop %v1225
    %v3946 = vmul.f32 %v1225, %v3945
    %v3947 = vsub.f32 1.0, %v3946
    %v3948 = vmul.f32 %v3945, %v3947
    %v3949 = vadd.f32 %v3945, %v3948
    %vm3950 = vweird.f32 %v1225
    %vm3951 = vweird.f32 %v3945
    %vm3952 = vmor %vm3950, %vm3951
    %v3953 = vsel %vm3952, %v3945, %v3949
    %v3954 = vand.u32 2147483647, %v1225
    %vm3955 = vcmp.eq.f32.partialorder %v3954, 8.507059e+37
    %v3956 = vand.u32 %v1225, 2147483648
    %v3957 = vor.u32 1.1754944e-38, %v3956
    %v3958 = vsel %vm3955, %v3957, %v3953
    %v3959 = vmul.f32 1.0, %v3958
    %v3960 = vrcp.pop %v1226
    %v3961 = vmul.f32 %v1226, %v3960
    %v3962 = vsub.f32 1.0, %v3961
    %v3963 = vmul.f32 %v3960, %v3962
    %v3964 = vadd.f32 %v3960, %v3963
    %vm3965 = vweird.f32 %v1226
    %vm3966 = vweird.f32 %v3960
    %vm3967 = vmor %vm3965, %vm3966
    %v3968 = vsel %vm3967, %v3960, %v3964
    %v3969 = vand.u32 2147483647, %v1226
    %vm3970 = vcmp.eq.f32.partialorder %v3969, 8.507059e+37
    %v3971 = vand.u32 %v1226, 2147483648
    %v3972 = vor.u32 1.1754944e-38, %v3971
    %v3973 = vsel %vm3970, %v3972, %v3968
    %v3974 = vmul.f32 1.0, %v3973
    %v3975 = vrcp.pop %v1227
    %v3976 = vmul.f32 %v1227, %v3975
    %v3977 = vsub.f32 1.0, %v3976
    %v3978 = vmul.f32 %v3975, %v3977
    %v3979 = vadd.f32 %v3975, %v3978
    %vm3980 = vweird.f32 %v1227
    %vm3981 = vweird.f32 %v3975
    %vm3982 = vmor %vm3980, %vm3981
    %v3983 = vsel %vm3982, %v3975, %v3979
    %v3984 = vand.u32 2147483647, %v1227
    %vm3985 = vcmp.eq.f32.partialorder %v3984, 8.507059e+37
    %v3986 = vand.u32 %v1227, 2147483648
    %v3987 = vor.u32 1.1754944e-38, %v3986
    %v3988 = vsel %vm3985, %v3987, %v3983
    %v3989 = vmul.f32 1.0, %v3988
    %v3990 = vrcp.pop %v1228
    %v3991 = vmul.f32 %v1228, %v3990
    %v3992 = vsub.f32 1.0, %v3991
    %v3993 = vmul.f32 %v3990, %v3992
    %v3994 = vadd.f32 %v3990, %v3993
    %vm3995 = vweird.f32 %v1228
    %vm3996 = vweird.f32 %v3990
    %vm3997 = vmor %vm3995, %vm3996
    %v3998 = vsel %vm3997, %v3990, %v3994
    %v3999 = vand.u32 2147483647, %v1228
    %vm4000 = vcmp.eq.f32.partialorder %v3999, 8.507059e+37
    %v4001 = vand.u32 %v1228, 2147483648
    %v4002 = vor.u32 1.1754944e-38, %v4001
    %v4003 = vsel %vm4000, %v4002, %v3998
    %v4004 = vmul.f32 1.0, %v4003
    %v4005 = vrcp.pop %v1229
    %v4006 = vmul.f32 %v1229, %v4005
    %v4007 = vsub.f32 1.0, %v4006
    %v4008 = vmul.f32 %v4005, %v4007
    %v4009 = vadd.f32 %v4005, %v4008
    %vm4010 = vweird.f32 %v1229
    %vm4011 = vweird.f32 %v4005
    %vm4012 = vmor %vm4010, %vm4011
    %v4013 = vsel %vm4012, %v4005, %v4009
    %v4014 = vand.u32 2147483647, %v1229
    %vm4015 = vcmp.eq.f32.partialorder %v4014, 8.507059e+37
    %v4016 = vand.u32 %v1229, 2147483648
    %v4017 = vor.u32 1.1754944e-38, %v4016
    %v4018 = vsel %vm4015, %v4017, %v4013
    %v4019 = vmul.f32 1.0, %v4018
    %v4020 = vrcp.pop %v1230
    %v4021 = vmul.f32 %v1230, %v4020
    %v4022 = vsub.f32 1.0, %v4021
    %v4023 = vmul.f32 %v4020, %v4022
    %v4024 = vadd.f32 %v4020, %v4023
    %vm4025 = vweird.f32 %v1230
    %vm4026 = vweird.f32 %v4020
    %vm4027 = vmor %vm4025, %vm4026
    %v4028 = vsel %vm4027, %v4020, %v4024
    %v4029 = vand.u32 2147483647, %v1230
    %vm4030 = vcmp.eq.f32.partialorder %v4029, 8.507059e+37
    %v4031 = vand.u32 %v1230, 2147483648
    %v4032 = vor.u32 1.1754944e-38, %v4031
    %v4033 = vsel %vm4030, %v4032, %v4028
    %v4034 = vmul.f32 1.0, %v4033
    %v4035 = vrcp.pop %v1231
    %v4036 = vmul.f32 %v1231, %v4035
    %v4037 = vsub.f32 1.0, %v4036
    %v4038 = vmul.f32 %v4035, %v4037
    %v4039 = vadd.f32 %v4035, %v4038
    %vm4040 = vweird.f32 %v1231
    %vm4041 = vweird.f32 %v4035
    %vm4042 = vmor %vm4040, %vm4041
    %v4043 = vsel %vm4042, %v4035, %v4039
    %v4044 = vand.u32 2147483647, %v1231
    %vm4045 = vcmp.eq.f32.partialorder %v4044, 8.507059e+37
    %v4046 = vand.u32 %v1231, 2147483648
    %v4047 = vor.u32 1.1754944e-38, %v4046
    %v4048 = vsel %vm4045, %v4047, %v4043
    %v4049 = vmul.f32 1.0, %v4048
    %v4050 = vrcp.pop %v1232
    %v4051 = vmul.f32 %v1232, %v4050
    %v4052 = vsub.f32 1.0, %v4051
    %v4053 = vmul.f32 %v4050, %v4052
    %v4054 = vadd.f32 %v4050, %v4053
    %vm4055 = vweird.f32 %v1232
    %vm4056 = vweird.f32 %v4050
    %vm4057 = vmor %vm4055, %vm4056
    %v4058 = vsel %vm4057, %v4050, %v4054
    %v4059 = vand.u32 2147483647, %v1232
    %vm4060 = vcmp.eq.f32.partialorder %v4059, 8.507059e+37
    %v4061 = vand.u32 %v1232, 2147483648
    %v4062 = vor.u32 1.1754944e-38, %v4061
    %v4063 = vsel %vm4060, %v4062, %v4058
    %v4064 = vmul.f32 1.0, %v4063
    %v4065 = vrcp.pop %v1233
    %v4066 = vmul.f32 %v1233, %v4065
    %v4067 = vsub.f32 1.0, %v4066
    %v4068 = vmul.f32 %v4065, %v4067
    %v4069 = vadd.f32 %v4065, %v4068
    %vm4070 = vweird.f32 %v1233
    %vm4071 = vweird.f32 %v4065
    %vm4072 = vmor %vm4070, %vm4071
    %v4073 = vsel %vm4072, %v4065, %v4069
    %v4074 = vand.u32 2147483647, %v1233
    %vm4075 = vcmp.eq.f32.partialorder %v4074, 8.507059e+37
    %v4076 = vand.u32 %v1233, 2147483648
    %v4077 = vor.u32 1.1754944e-38, %v4076
    %v4078 = vsel %vm4075, %v4077, %v4073
    %v4079 = vmul.f32 1.0, %v4078
    %v4080 = vrcp.pop %v1234
    %v4081 = vmul.f32 %v1234, %v4080
    %v4082 = vsub.f32 1.0, %v4081
    %v4083 = vmul.f32 %v4080, %v4082
    %v4084 = vadd.f32 %v4080, %v4083
    %vm4085 = vweird.f32 %v1234
    %vm4086 = vweird.f32 %v4080
    %vm4087 = vmor %vm4085, %vm4086
    %v4088 = vsel %vm4087, %v4080, %v4084
    %v4089 = vand.u32 2147483647, %v1234
    %vm4090 = vcmp.eq.f32.partialorder %v4089, 8.507059e+37
    %v4091 = vand.u32 %v1234, 2147483648
    %v4092 = vor.u32 1.1754944e-38, %v4091
    %v4093 = vsel %vm4090, %v4092, %v4088
    %v4094 = vmul.f32 1.0, %v4093
    %v4095 = vrcp.pop %v1235
    %v4096 = vmul.f32 %v1235, %v4095
    %v4097 = vsub.f32 1.0, %v4096
    %v4098 = vmul.f32 %v4095, %v4097
    %v4099 = vadd.f32 %v4095, %v4098
    %vm4100 = vweird.f32 %v1235
    %vm4101 = vweird.f32 %v4095
    %vm4102 = vmor %vm4100, %vm4101
    %v4103 = vsel %vm4102, %v4095, %v4099
    %v4104 = vand.u32 2147483647, %v1235
    %vm4105 = vcmp.eq.f32.partialorder %v4104, 8.507059e+37
    %v4106 = vand.u32 %v1235, 2147483648
    %v4107 = vor.u32 1.1754944e-38, %v4106
    %v4108 = vsel %vm4105, %v4107, %v4103
    %v4109 = vmul.f32 1.0, %v4108
    %v4110 = vrcp.pop %v1236
    %v4111 = vmul.f32 %v1236, %v4110
    %v4112 = vsub.f32 1.0, %v4111
    %v4113 = vmul.f32 %v4110, %v4112
    %v4114 = vadd.f32 %v4110, %v4113
    %vm4115 = vweird.f32 %v1236
    %vm4116 = vweird.f32 %v4110
    %vm4117 = vmor %vm4115, %vm4116
    %v4118 = vsel %vm4117, %v4110, %v4114
    %v4119 = vand.u32 2147483647, %v1236
    %vm4120 = vcmp.eq.f32.partialorder %v4119, 8.507059e+37
    %v4121 = vand.u32 %v1236, 2147483648
    %v4122 = vor.u32 1.1754944e-38, %v4121
    %v4123 = vsel %vm4120, %v4122, %v4118
    %v4124 = vmul.f32 1.0, %v4123
    %v4125 = vrcp.pop %v1237
    %v4126 = vmul.f32 %v1237, %v4125
    %v4127 = vsub.f32 1.0, %v4126
    %v4128 = vmul.f32 %v4125, %v4127
    %v4129 = vadd.f32 %v4125, %v4128
    %vm4130 = vweird.f32 %v1237
    %vm4131 = vweird.f32 %v4125
    %vm4132 = vmor %vm4130, %vm4131
    %v4133 = vsel %vm4132, %v4125, %v4129
    %v4134 = vand.u32 2147483647, %v1237
    %vm4135 = vcmp.eq.f32.partialorder %v4134, 8.507059e+37
    %v4136 = vand.u32 %v1237, 2147483648
    %v4137 = vor.u32 1.1754944e-38, %v4136
    %v4138 = vsel %vm4135, %v4137, %v4133
    %v4139 = vmul.f32 1.0, %v4138
    %v4140 = vrcp.pop %v1238
    %v4141 = vmul.f32 %v1238, %v4140
    %v4142 = vsub.f32 1.0, %v4141
    %v4143 = vmul.f32 %v4140, %v4142
    %v4144 = vadd.f32 %v4140, %v4143
    %vm4145 = vweird.f32 %v1238
    %vm4146 = vweird.f32 %v4140
    %vm4147 = vmor %vm4145, %vm4146
    %v4148 = vsel %vm4147, %v4140, %v4144
    %v4149 = vand.u32 2147483647, %v1238
    %vm4150 = vcmp.eq.f32.partialorder %v4149, 8.507059e+37
    %v4151 = vand.u32 %v1238, 2147483648
    %v4152 = vor.u32 1.1754944e-38, %v4151
    %v4153 = vsel %vm4150, %v4152, %v4148
    %v4154 = vmul.f32 1.0, %v4153
    %v4155 = vrcp.pop %v1239
    %v4156 = vmul.f32 %v1239, %v4155
    %v4157 = vsub.f32 1.0, %v4156
    %v4158 = vmul.f32 %v4155, %v4157
    %v4159 = vadd.f32 %v4155, %v4158
    %vm4160 = vweird.f32 %v1239
    %vm4161 = vweird.f32 %v4155
    %vm4162 = vmor %vm4160, %vm4161
    %v4163 = vsel %vm4162, %v4155, %v4159
    %v4164 = vand.u32 2147483647, %v1239
    %vm4165 = vcmp.eq.f32.partialorder %v4164, 8.507059e+37
    %v4166 = vand.u32 %v1239, 2147483648
    %v4167 = vor.u32 1.1754944e-38, %v4166
    %v4168 = vsel %vm4165, %v4167, %v4163
    %v4169 = vmul.f32 1.0, %v4168
    %v4170 = vrcp.pop %v1240
    %v4171 = vmul.f32 %v1240, %v4170
    %v4172 = vsub.f32 1.0, %v4171
    %v4173 = vmul.f32 %v4170, %v4172
    %v4174 = vadd.f32 %v4170, %v4173
    %vm4175 = vweird.f32 %v1240
    %vm4176 = vweird.f32 %v4170
    %vm4177 = vmor %vm4175, %vm4176
    %v4178 = vsel %vm4177, %v4170, %v4174
    %v4179 = vand.u32 2147483647, %v1240
    %vm4180 = vcmp.eq.f32.partialorder %v4179, 8.507059e+37
    %v4181 = vand.u32 %v1240, 2147483648
    %v4182 = vor.u32 1.1754944e-38, %v4181
    %v4183 = vsel %vm4180, %v4182, %v4178
    %v4184 = vmul.f32 1.0, %v4183
    %v4185 = vrcp.pop %v1241
    %v4186 = vmul.f32 %v1241, %v4185
    %v4187 = vsub.f32 1.0, %v4186
    %v4188 = vmul.f32 %v4185, %v4187
    %v4189 = vadd.f32 %v4185, %v4188
    %vm4190 = vweird.f32 %v1241
    %vm4191 = vweird.f32 %v4185
    %vm4192 = vmor %vm4190, %vm4191
    %v4193 = vsel %vm4192, %v4185, %v4189
    %v4194 = vand.u32 2147483647, %v1241
    %vm4195 = vcmp.eq.f32.partialorder %v4194, 8.507059e+37
    %v4196 = vand.u32 %v1241, 2147483648
    %v4197 = vor.u32 1.1754944e-38, %v4196
    %v4198 = vsel %vm4195, %v4197, %v4193
    %v4199 = vmul.f32 1.0, %v4198
    %v4200 = vrcp.pop %v1242
    %v4201 = vmul.f32 %v1242, %v4200
    %v4202 = vsub.f32 1.0, %v4201
    %v4203 = vmul.f32 %v4200, %v4202
    %v4204 = vadd.f32 %v4200, %v4203
    %vm4205 = vweird.f32 %v1242
    %vm4206 = vweird.f32 %v4200
    %vm4207 = vmor %vm4205, %vm4206
    %v4208 = vsel %vm4207, %v4200, %v4204
    %v4209 = vand.u32 2147483647, %v1242
    %vm4210 = vcmp.eq.f32.partialorder %v4209, 8.507059e+37
    %v4211 = vand.u32 %v1242, 2147483648
    %v4212 = vor.u32 1.1754944e-38, %v4211
    %v4213 = vsel %vm4210, %v4212, %v4208
    %v4214 = vmul.f32 1.0, %v4213
    %v4215 = vrcp.pop %v1243
    %v4216 = vmul.f32 %v1243, %v4215
    %v4217 = vsub.f32 1.0, %v4216
    %v4218 = vmul.f32 %v4215, %v4217
    %v4219 = vadd.f32 %v4215, %v4218
    %vm4220 = vweird.f32 %v1243
    %vm4221 = vweird.f32 %v4215
    %vm4222 = vmor %vm4220, %vm4221
    %v4223 = vsel %vm4222, %v4215, %v4219
    %v4224 = vand.u32 2147483647, %v1243
    %vm4225 = vcmp.eq.f32.partialorder %v4224, 8.507059e+37
    %v4226 = vand.u32 %v1243, 2147483648
    %v4227 = vor.u32 1.1754944e-38, %v4226
    %v4228 = vsel %vm4225, %v4227, %v4223
    %v4229 = vmul.f32 1.0, %v4228
    %v4230 = vrcp.pop %v1244
    %v4231 = vmul.f32 %v1244, %v4230
    %v4232 = vsub.f32 1.0, %v4231
    %v4233 = vmul.f32 %v4230, %v4232
    %v4234 = vadd.f32 %v4230, %v4233
    %vm4235 = vweird.f32 %v1244
    %vm4236 = vweird.f32 %v4230
    %vm4237 = vmor %vm4235, %vm4236
    %v4238 = vsel %vm4237, %v4230, %v4234
    %v4239 = vand.u32 2147483647, %v1244
    %vm4240 = vcmp.eq.f32.partialorder %v4239, 8.507059e+37
    %v4241 = vand.u32 %v1244, 2147483648
    %v4242 = vor.u32 1.1754944e-38, %v4241
    %v4243 = vsel %vm4240, %v4242, %v4238
    %v4244 = vmul.f32 1.0, %v4243
    %v4245 = vrcp.pop %v1245
    %v4246 = vmul.f32 %v1245, %v4245
    %v4247 = vsub.f32 1.0, %v4246
    %v4248 = vmul.f32 %v4245, %v4247
    %v4249 = vadd.f32 %v4245, %v4248
    %vm4250 = vweird.f32 %v1245
    %vm4251 = vweird.f32 %v4245
    %vm4252 = vmor %vm4250, %vm4251
    %v4253 = vsel %vm4252, %v4245, %v4249
    %v4254 = vand.u32 2147483647, %v1245
    %vm4255 = vcmp.eq.f32.partialorder %v4254, 8.507059e+37
    %v4256 = vand.u32 %v1245, 2147483648
    %v4257 = vor.u32 1.1754944e-38, %v4256
    %v4258 = vsel %vm4255, %v4257, %v4253
    %v4259 = vmul.f32 1.0, %v4258
    %v4260 = vrcp.pop %v1246
    %v4261 = vmul.f32 %v1246, %v4260
    %v4262 = vsub.f32 1.0, %v4261
    %v4263 = vmul.f32 %v4260, %v4262
    %v4264 = vadd.f32 %v4260, %v4263
    %vm4265 = vweird.f32 %v1246
    %vm4266 = vweird.f32 %v4260
    %vm4267 = vmor %vm4265, %vm4266
    %v4268 = vsel %vm4267, %v4260, %v4264
    %v4269 = vand.u32 2147483647, %v1246
    %vm4270 = vcmp.eq.f32.partialorder %v4269, 8.507059e+37
    %v4271 = vand.u32 %v1246, 2147483648
    %v4272 = vor.u32 1.1754944e-38, %v4271
    %v4273 = vsel %vm4270, %v4272, %v4268
    %v4274 = vmul.f32 1.0, %v4273
    %v4275 = vrcp.pop %v1247
    %v4276 = vmul.f32 %v1247, %v4275
    %v4277 = vsub.f32 1.0, %v4276
    %v4278 = vmul.f32 %v4275, %v4277
    %v4279 = vadd.f32 %v4275, %v4278
    %vm4280 = vweird.f32 %v1247
    %vm4281 = vweird.f32 %v4275
    %vm4282 = vmor %vm4280, %vm4281
    %v4283 = vsel %vm4282, %v4275, %v4279
    %v4284 = vand.u32 2147483647, %v1247
    %vm4285 = vcmp.eq.f32.partialorder %v4284, 8.507059e+37
    %v4286 = vand.u32 %v1247, 2147483648
    %v4287 = vor.u32 1.1754944e-38, %v4286
    %v4288 = vsel %vm4285, %v4287, %v4283
    %v4289 = vmul.f32 1.0, %v4288
    %v4290 = vrcp.pop %v1248
    %v4291 = vmul.f32 %v1248, %v4290
    %v4292 = vsub.f32 1.0, %v4291
    %v4293 = vmul.f32 %v4290, %v4292
    %v4294 = vadd.f32 %v4290, %v4293
    %vm4295 = vweird.f32 %v1248
    %vm4296 = vweird.f32 %v4290
    %vm4297 = vmor %vm4295, %vm4296
    %v4298 = vsel %vm4297, %v4290, %v4294
    %v4299 = vand.u32 2147483647, %v1248
    %vm4300 = vcmp.eq.f32.partialorder %v4299, 8.507059e+37
    %v4301 = vand.u32 %v1248, 2147483648
    %v4302 = vor.u32 1.1754944e-38, %v4301
    %v4303 = vsel %vm4300, %v4302, %v4298
    %v4304 = vmul.f32 1.0, %v4303
    %v4305 = vrcp.pop %v1249
    %v4306 = vmul.f32 %v1249, %v4305
    %v4307 = vsub.f32 1.0, %v4306
    %v4308 = vmul.f32 %v4305, %v4307
    %v4309 = vadd.f32 %v4305, %v4308
    %vm4310 = vweird.f32 %v1249
    %vm4311 = vweird.f32 %v4305
    %vm4312 = vmor %vm4310, %vm4311
    %v4313 = vsel %vm4312, %v4305, %v4309
    %v4314 = vand.u32 2147483647, %v1249
    %vm4315 = vcmp.eq.f32.partialorder %v4314, 8.507059e+37
    %v4316 = vand.u32 %v1249, 2147483648
    %v4317 = vor.u32 1.1754944e-38, %v4316
    %v4318 = vsel %vm4315, %v4317, %v4313
    %v4319 = vmul.f32 1.0, %v4318
    %v4320 = vrcp.pop %v1250
    %v4321 = vmul.f32 %v1250, %v4320
    %v4322 = vsub.f32 1.0, %v4321
    %v4323 = vmul.f32 %v4320, %v4322
    %v4324 = vadd.f32 %v4320, %v4323
    %vm4325 = vweird.f32 %v1250
    %vm4326 = vweird.f32 %v4320
    %vm4327 = vmor %vm4325, %vm4326
    %v4328 = vsel %vm4327, %v4320, %v4324
    %v4329 = vand.u32 2147483647, %v1250
    %vm4330 = vcmp.eq.f32.partialorder %v4329, 8.507059e+37
    %v4331 = vand.u32 %v1250, 2147483648
    %v4332 = vor.u32 1.1754944e-38, %v4331
    %v4333 = vsel %vm4330, %v4332, %v4328
    %v4334 = vmul.f32 1.0, %v4333
    %v4335 = vrcp.pop %v1251
    %v4336 = vmul.f32 %v1251, %v4335
    %v4337 = vsub.f32 1.0, %v4336
    %v4338 = vmul.f32 %v4335, %v4337
    %v4339 = vadd.f32 %v4335, %v4338
    %vm4340 = vweird.f32 %v1251
    %vm4341 = vweird.f32 %v4335
    %vm4342 = vmor %vm4340, %vm4341
    %v4343 = vsel %vm4342, %v4335, %v4339
    %v4344 = vand.u32 2147483647, %v1251
    %vm4345 = vcmp.eq.f32.partialorder %v4344, 8.507059e+37
    %v4346 = vand.u32 %v1251, 2147483648
    %v4347 = vor.u32 1.1754944e-38, %v4346
    %v4348 = vsel %vm4345, %v4347, %v4343
    %v4349 = vmul.f32 1.0, %v4348
    %v4350 = vrcp.pop %v1252
    %v4351 = vmul.f32 %v1252, %v4350
    %v4352 = vsub.f32 1.0, %v4351
    %v4353 = vmul.f32 %v4350, %v4352
    %v4354 = vadd.f32 %v4350, %v4353
    %vm4355 = vweird.f32 %v1252
    %vm4356 = vweird.f32 %v4350
    %vm4357 = vmor %vm4355, %vm4356
    %v4358 = vsel %vm4357, %v4350, %v4354
    %v4359 = vand.u32 2147483647, %v1252
    %vm4360 = vcmp.eq.f32.partialorder %v4359, 8.507059e+37
    %v4361 = vand.u32 %v1252, 2147483648
    %v4362 = vor.u32 1.1754944e-38, %v4361
    %v4363 = vsel %vm4360, %v4362, %v4358
    %v4364 = vmul.f32 1.0, %v4363
    %v4365 = vrcp.pop %v1253
    %v4366 = vmul.f32 %v1253, %v4365
    %v4367 = vsub.f32 1.0, %v4366
    %v4368 = vmul.f32 %v4365, %v4367
    %v4369 = vadd.f32 %v4365, %v4368
    %vm4370 = vweird.f32 %v1253
    %vm4371 = vweird.f32 %v4365
    %vm4372 = vmor %vm4370, %vm4371
    %v4373 = vsel %vm4372, %v4365, %v4369
    %v4374 = vand.u32 2147483647, %v1253
    %vm4375 = vcmp.eq.f32.partialorder %v4374, 8.507059e+37
    %v4376 = vand.u32 %v1253, 2147483648
    %v4377 = vor.u32 1.1754944e-38, %v4376
    %v4378 = vsel %vm4375, %v4377, %v4373
    %v4379 = vmul.f32 1.0, %v4378
    %v4380 = vrcp.pop %v1254
    %v4381 = vmul.f32 %v1254, %v4380
    %v4382 = vsub.f32 1.0, %v4381
    %v4383 = vmul.f32 %v4380, %v4382
    %v4384 = vadd.f32 %v4380, %v4383
    %vm4385 = vweird.f32 %v1254
    %vm4386 = vweird.f32 %v4380
    %vm4387 = vmor %vm4385, %vm4386
    %v4388 = vsel %vm4387, %v4380, %v4384
    %v4389 = vand.u32 2147483647, %v1254
    %vm4390 = vcmp.eq.f32.partialorder %v4389, 8.507059e+37
    %v4391 = vand.u32 %v1254, 2147483648
    %v4392 = vor.u32 1.1754944e-38, %v4391
    %v4393 = vsel %vm4390, %v4392, %v4388
    %v4394 = vmul.f32 1.0, %v4393
    %v4395 = vrcp.pop %v1255
    %v4396 = vmul.f32 %v1255, %v4395
    %v4397 = vsub.f32 1.0, %v4396
    %v4398 = vmul.f32 %v4395, %v4397
    %v4399 = vadd.f32 %v4395, %v4398
    %vm4400 = vweird.f32 %v1255
    %vm4401 = vweird.f32 %v4395
    %vm4402 = vmor %vm4400, %vm4401
    %v4403 = vsel %vm4402, %v4395, %v4399
    %v4404 = vand.u32 2147483647, %v1255
    %vm4405 = vcmp.eq.f32.partialorder %v4404, 8.507059e+37
    %v4406 = vand.u32 %v1255, 2147483648
    %v4407 = vor.u32 1.1754944e-38, %v4406
    %v4408 = vsel %vm4405, %v4407, %v4403
    %v4409 = vmul.f32 1.0, %v4408
    %v4410 = vrcp.pop %v1256
    %v4411 = vmul.f32 %v1256, %v4410
    %v4412 = vsub.f32 1.0, %v4411
    %v4413 = vmul.f32 %v4410, %v4412
    %v4414 = vadd.f32 %v4410, %v4413
    %vm4415 = vweird.f32 %v1256
    %vm4416 = vweird.f32 %v4410
    %vm4417 = vmor %vm4415, %vm4416
    %v4418 = vsel %vm4417, %v4410, %v4414
    %v4419 = vand.u32 2147483647, %v1256
    %vm4420 = vcmp.eq.f32.partialorder %v4419, 8.507059e+37
    %v4421 = vand.u32 %v1256, 2147483648
    %v4422 = vor.u32 1.1754944e-38, %v4421
    %v4423 = vsel %vm4420, %v4422, %v4418
    %v4424 = vmul.f32 1.0, %v4423
    %v4425 = vrcp.pop %v1257
    %v4426 = vmul.f32 %v1257, %v4425
    %v4427 = vsub.f32 1.0, %v4426
    %v4428 = vmul.f32 %v4425, %v4427
    %v4429 = vadd.f32 %v4425, %v4428
    %vm4430 = vweird.f32 %v1257
    %vm4431 = vweird.f32 %v4425
    %vm4432 = vmor %vm4430, %vm4431
    %v4433 = vsel %vm4432, %v4425, %v4429
    %v4434 = vand.u32 2147483647, %v1257
    %vm4435 = vcmp.eq.f32.partialorder %v4434, 8.507059e+37
    %v4436 = vand.u32 %v1257, 2147483648
    %v4437 = vor.u32 1.1754944e-38, %v4436
    %v4438 = vsel %vm4435, %v4437, %v4433
    %v4439 = vmul.f32 1.0, %v4438
    %v4440 = vrcp.pop %v1258
    %v4441 = vmul.f32 %v1258, %v4440
    %v4442 = vsub.f32 1.0, %v4441
    %v4443 = vmul.f32 %v4440, %v4442
    %v4444 = vadd.f32 %v4440, %v4443
    %vm4445 = vweird.f32 %v1258
    %vm4446 = vweird.f32 %v4440
    %vm4447 = vmor %vm4445, %vm4446
    %v4448 = vsel %vm4447, %v4440, %v4444
    %v4449 = vand.u32 2147483647, %v1258
    %vm4450 = vcmp.eq.f32.partialorder %v4449, 8.507059e+37
    %v4451 = vand.u32 %v1258, 2147483648
    %v4452 = vor.u32 1.1754944e-38, %v4451
    %v4453 = vsel %vm4450, %v4452, %v4448
    %v4454 = vmul.f32 1.0, %v4453
    %v4455 = vrcp.pop %v1259
    %v4456 = vmul.f32 %v1259, %v4455
    %v4457 = vsub.f32 1.0, %v4456
    %v4458 = vmul.f32 %v4455, %v4457
    %v4459 = vadd.f32 %v4455, %v4458
    %vm4460 = vweird.f32 %v1259
    %vm4461 = vweird.f32 %v4455
    %vm4462 = vmor %vm4460, %vm4461
    %v4463 = vsel %vm4462, %v4455, %v4459
    %v4464 = vand.u32 2147483647, %v1259
    %vm4465 = vcmp.eq.f32.partialorder %v4464, 8.507059e+37
    %v4466 = vand.u32 %v1259, 2147483648
    %v4467 = vor.u32 1.1754944e-38, %v4466
    %v4468 = vsel %vm4465, %v4467, %v4463
    %v4469 = vmul.f32 1.0, %v4468
    %v4470 = vrcp.pop %v1260
    %v4471 = vmul.f32 %v1260, %v4470
    %v4472 = vsub.f32 1.0, %v4471
    %v4473 = vmul.f32 %v4470, %v4472
    %v4474 = vadd.f32 %v4470, %v4473
    %vm4475 = vweird.f32 %v1260
    %vm4476 = vweird.f32 %v4470
    %vm4477 = vmor %vm4475, %vm4476
    %v4478 = vsel %vm4477, %v4470, %v4474
    %v4479 = vand.u32 2147483647, %v1260
    %vm4480 = vcmp.eq.f32.partialorder %v4479, 8.507059e+37
    %v4481 = vand.u32 %v1260, 2147483648
    %v4482 = vor.u32 1.1754944e-38, %v4481
    %v4483 = vsel %vm4480, %v4482, %v4478
    %v4484 = vmul.f32 1.0, %v4483
    %v4485 = vrcp.pop %v1261
    %v4486 = vmul.f32 %v1261, %v4485
    %v4487 = vsub.f32 1.0, %v4486
    %v4488 = vmul.f32 %v4485, %v4487
    %v4489 = vadd.f32 %v4485, %v4488
    %vm4490 = vweird.f32 %v1261
    %vm4491 = vweird.f32 %v4485
    %vm4492 = vmor %vm4490, %vm4491
    %v4493 = vsel %vm4492, %v4485, %v4489
    %v4494 = vand.u32 2147483647, %v1261
    %vm4495 = vcmp.eq.f32.partialorder %v4494, 8.507059e+37
    %v4496 = vand.u32 %v1261, 2147483648
    %v4497 = vor.u32 1.1754944e-38, %v4496
    %v4498 = vsel %vm4495, %v4497, %v4493
    %v4499 = vmul.f32 1.0, %v4498
    %v4500 = vrcp.pop %v1262
    %v4501 = vmul.f32 %v1262, %v4500
    %v4502 = vsub.f32 1.0, %v4501
    %v4503 = vmul.f32 %v4500, %v4502
    %v4504 = vadd.f32 %v4500, %v4503
    %vm4505 = vweird.f32 %v1262
    %vm4506 = vweird.f32 %v4500
    %vm4507 = vmor %vm4505, %vm4506
    %v4508 = vsel %vm4507, %v4500, %v4504
    %v4509 = vand.u32 2147483647, %v1262
    %vm4510 = vcmp.eq.f32.partialorder %v4509, 8.507059e+37
    %v4511 = vand.u32 %v1262, 2147483648
    %v4512 = vor.u32 1.1754944e-38, %v4511
    %v4513 = vsel %vm4510, %v4512, %v4508
    %v4514 = vmul.f32 1.0, %v4513
    %v4515 = vrcp.pop %v1263
    %v4516 = vmul.f32 %v1263, %v4515
    %v4517 = vsub.f32 1.0, %v4516
    %v4518 = vmul.f32 %v4515, %v4517
    %v4519 = vadd.f32 %v4515, %v4518
    %vm4520 = vweird.f32 %v1263
    %vm4521 = vweird.f32 %v4515
    %vm4522 = vmor %vm4520, %vm4521
    %v4523 = vsel %vm4522, %v4515, %v4519
    %v4524 = vand.u32 2147483647, %v1263
    %vm4525 = vcmp.eq.f32.partialorder %v4524, 8.507059e+37
    %v4526 = vand.u32 %v1263, 2147483648
    %v4527 = vor.u32 1.1754944e-38, %v4526
    %v4528 = vsel %vm4525, %v4527, %v4523
    %v4529 = vmul.f32 1.0, %v4528
    %v4530 = vrcp.pop %v1264
    %v4531 = vmul.f32 %v1264, %v4530
    %v4532 = vsub.f32 1.0, %v4531
    %v4533 = vmul.f32 %v4530, %v4532
    %v4534 = vadd.f32 %v4530, %v4533
    %vm4535 = vweird.f32 %v1264
    %vm4536 = vweird.f32 %v4530
    %vm4537 = vmor %vm4535, %vm4536
    %v4538 = vsel %vm4537, %v4530, %v4534
    %v4539 = vand.u32 2147483647, %v1264
    %vm4540 = vcmp.eq.f32.partialorder %v4539, 8.507059e+37
    %v4541 = vand.u32 %v1264, 2147483648
    %v4542 = vor.u32 1.1754944e-38, %v4541
    %v4543 = vsel %vm4540, %v4542, %v4538
    %v4544 = vmul.f32 1.0, %v4543
    %v4545 = vrcp.pop %v1265
    %v4546 = vmul.f32 %v1265, %v4545
    %v4547 = vsub.f32 1.0, %v4546
    %v4548 = vmul.f32 %v4545, %v4547
    %v4549 = vadd.f32 %v4545, %v4548
    %vm4550 = vweird.f32 %v1265
    %vm4551 = vweird.f32 %v4545
    %vm4552 = vmor %vm4550, %vm4551
    %v4553 = vsel %vm4552, %v4545, %v4549
    %v4554 = vand.u32 2147483647, %v1265
    %vm4555 = vcmp.eq.f32.partialorder %v4554, 8.507059e+37
    %v4556 = vand.u32 %v1265, 2147483648
    %v4557 = vor.u32 1.1754944e-38, %v4556
    %v4558 = vsel %vm4555, %v4557, %v4553
    %v4559 = vmul.f32 1.0, %v4558
    %v4560 = vrcp.pop %v1266
    %v4561 = vmul.f32 %v1266, %v4560
    %v4562 = vsub.f32 1.0, %v4561
    %v4563 = vmul.f32 %v4560, %v4562
    %v4564 = vadd.f32 %v4560, %v4563
    %vm4565 = vweird.f32 %v1266
    %vm4566 = vweird.f32 %v4560
    %vm4567 = vmor %vm4565, %vm4566
    %v4568 = vsel %vm4567, %v4560, %v4564
    %v4569 = vand.u32 2147483647, %v1266
    %vm4570 = vcmp.eq.f32.partialorder %v4569, 8.507059e+37
    %v4571 = vand.u32 %v1266, 2147483648
    %v4572 = vor.u32 1.1754944e-38, %v4571
    %v4573 = vsel %vm4570, %v4572, %v4568
    %v4574 = vmul.f32 1.0, %v4573
    %v4575 = vrcp.pop %v1267
    %v4576 = vmul.f32 %v1267, %v4575
    %v4577 = vsub.f32 1.0, %v4576
    %v4578 = vmul.f32 %v4575, %v4577
    %v4579 = vadd.f32 %v4575, %v4578
    %vm4580 = vweird.f32 %v1267
    %vm4581 = vweird.f32 %v4575
    %vm4582 = vmor %vm4580, %vm4581
    %v4583 = vsel %vm4582, %v4575, %v4579
    %v4584 = vand.u32 2147483647, %v1267
    %vm4585 = vcmp.eq.f32.partialorder %v4584, 8.507059e+37
    %v4586 = vand.u32 %v1267, 2147483648
    %v4587 = vor.u32 1.1754944e-38, %v4586
    %v4588 = vsel %vm4585, %v4587, %v4583
    %v4589 = vmul.f32 1.0, %v4588
    %v4590 = vrcp.pop %v1268
    %v4591 = vmul.f32 %v1268, %v4590
    %v4592 = vsub.f32 1.0, %v4591
    %v4593 = vmul.f32 %v4590, %v4592
    %v4594 = vadd.f32 %v4590, %v4593
    %vm4595 = vweird.f32 %v1268
    %vm4596 = vweird.f32 %v4590
    %vm4597 = vmor %vm4595, %vm4596
    %v4598 = vsel %vm4597, %v4590, %v4594
    %v4599 = vand.u32 2147483647, %v1268
    %vm4600 = vcmp.eq.f32.partialorder %v4599, 8.507059e+37
    %v4601 = vand.u32 %v1268, 2147483648
    %v4602 = vor.u32 1.1754944e-38, %v4601
    %v4603 = vsel %vm4600, %v4602, %v4598
    %v4604 = vmul.f32 1.0, %v4603
    %v4605 = vrcp.pop %v1269
    %v4606 = vmul.f32 %v1269, %v4605
    %v4607 = vsub.f32 1.0, %v4606
    %v4608 = vmul.f32 %v4605, %v4607
    %v4609 = vadd.f32 %v4605, %v4608
    %vm4610 = vweird.f32 %v1269
    %vm4611 = vweird.f32 %v4605
    %vm4612 = vmor %vm4610, %vm4611
    %v4613 = vsel %vm4612, %v4605, %v4609
    %v4614 = vand.u32 2147483647, %v1269
    %vm4615 = vcmp.eq.f32.partialorder %v4614, 8.507059e+37
    %v4616 = vand.u32 %v1269, 2147483648
    %v4617 = vor.u32 1.1754944e-38, %v4616
    %v4618 = vsel %vm4615, %v4617, %v4613
    %v4619 = vmul.f32 1.0, %v4618
    %v4620 = vrcp.pop %v1270
    %v4621 = vmul.f32 %v1270, %v4620
    %v4622 = vsub.f32 1.0, %v4621
    %v4623 = vmul.f32 %v4620, %v4622
    %v4624 = vadd.f32 %v4620, %v4623
    %vm4625 = vweird.f32 %v1270
    %vm4626 = vweird.f32 %v4620
    %vm4627 = vmor %vm4625, %vm4626
    %v4628 = vsel %vm4627, %v4620, %v4624
    %v4629 = vand.u32 2147483647, %v1270
    %vm4630 = vcmp.eq.f32.partialorder %v4629, 8.507059e+37
    %v4631 = vand.u32 %v1270, 2147483648
    %v4632 = vor.u32 1.1754944e-38, %v4631
    %v4633 = vsel %vm4630, %v4632, %v4628
    %v4634 = vmul.f32 1.0, %v4633
    %v4635 = vrcp.pop %v1271
    %v4636 = vmul.f32 %v1271, %v4635
    %v4637 = vsub.f32 1.0, %v4636
    %v4638 = vmul.f32 %v4635, %v4637
    %v4639 = vadd.f32 %v4635, %v4638
    %vm4640 = vweird.f32 %v1271
    %vm4641 = vweird.f32 %v4635
    %vm4642 = vmor %vm4640, %vm4641
    %v4643 = vsel %vm4642, %v4635, %v4639
    %v4644 = vand.u32 2147483647, %v1271
    %vm4645 = vcmp.eq.f32.partialorder %v4644, 8.507059e+37
    %v4646 = vand.u32 %v1271, 2147483648
    %v4647 = vor.u32 1.1754944e-38, %v4646
    %v4648 = vsel %vm4645, %v4647, %v4643
    %v4649 = vmul.f32 1.0, %v4648
    %v4650 = vrcp.pop %v1272
    %v4651 = vmul.f32 %v1272, %v4650
    %v4652 = vsub.f32 1.0, %v4651
    %v4653 = vmul.f32 %v4650, %v4652
    %v4654 = vadd.f32 %v4650, %v4653
    %vm4655 = vweird.f32 %v1272
    %vm4656 = vweird.f32 %v4650
    %vm4657 = vmor %vm4655, %vm4656
    %v4658 = vsel %vm4657, %v4650, %v4654
    %v4659 = vand.u32 2147483647, %v1272
    %vm4660 = vcmp.eq.f32.partialorder %v4659, 8.507059e+37
    %v4661 = vand.u32 %v1272, 2147483648
    %v4662 = vor.u32 1.1754944e-38, %v4661
    %v4663 = vsel %vm4660, %v4662, %v4658
    %v4664 = vmul.f32 1.0, %v4663
    %v4665 = vrcp.pop %v1273
    %v4666 = vmul.f32 %v1273, %v4665
    %v4667 = vsub.f32 1.0, %v4666
    %v4668 = vmul.f32 %v4665, %v4667
    %v4669 = vadd.f32 %v4665, %v4668
    %vm4670 = vweird.f32 %v1273
    %vm4671 = vweird.f32 %v4665
    %vm4672 = vmor %vm4670, %vm4671
    %v4673 = vsel %vm4672, %v4665, %v4669
    %v4674 = vand.u32 2147483647, %v1273
    %vm4675 = vcmp.eq.f32.partialorder %v4674, 8.507059e+37
    %v4676 = vand.u32 %v1273, 2147483648
    %v4677 = vor.u32 1.1754944e-38, %v4676
    %v4678 = vsel %vm4675, %v4677, %v4673
    %v4679 = vmul.f32 1.0, %v4678
    %v4680 = vrcp.pop %v1274
    %v4681 = vmul.f32 %v1274, %v4680
    %v4682 = vsub.f32 1.0, %v4681
    %v4683 = vmul.f32 %v4680, %v4682
    %v4684 = vadd.f32 %v4680, %v4683
    %vm4685 = vweird.f32 %v1274
    %vm4686 = vweird.f32 %v4680
    %vm4687 = vmor %vm4685, %vm4686
    %v4688 = vsel %vm4687, %v4680, %v4684
    %v4689 = vand.u32 2147483647, %v1274
    %vm4690 = vcmp.eq.f32.partialorder %v4689, 8.507059e+37
    %v4691 = vand.u32 %v1274, 2147483648
    %v4692 = vor.u32 1.1754944e-38, %v4691
    %v4693 = vsel %vm4690, %v4692, %v4688
    %v4694 = vmul.f32 1.0, %v4693
    %v4695 = vrcp.pop %v1275
    %v4696 = vmul.f32 %v1275, %v4695
    %v4697 = vsub.f32 1.0, %v4696
    %v4698 = vmul.f32 %v4695, %v4697
    %v4699 = vadd.f32 %v4695, %v4698
    %vm4700 = vweird.f32 %v1275
    %vm4701 = vweird.f32 %v4695
    %vm4702 = vmor %vm4700, %vm4701
    %v4703 = vsel %vm4702, %v4695, %v4699
    %v4704 = vand.u32 2147483647, %v1275
    %vm4705 = vcmp.eq.f32.partialorder %v4704, 8.507059e+37
    %v4706 = vand.u32 %v1275, 2147483648
    %v4707 = vor.u32 1.1754944e-38, %v4706
    %v4708 = vsel %vm4705, %v4707, %v4703
    %v4709 = vmul.f32 1.0, %v4708
    %v4710 = vrcp.pop %v1276
    %v4711 = vmul.f32 %v1276, %v4710
    %v4712 = vsub.f32 1.0, %v4711
    %v4713 = vmul.f32 %v4710, %v4712
    %v4714 = vadd.f32 %v4710, %v4713
    %vm4715 = vweird.f32 %v1276
    %vm4716 = vweird.f32 %v4710
    %vm4717 = vmor %vm4715, %vm4716
    %v4718 = vsel %vm4717, %v4710, %v4714
    %v4719 = vand.u32 2147483647, %v1276
    %vm4720 = vcmp.eq.f32.partialorder %v4719, 8.507059e+37
    %v4721 = vand.u32 %v1276, 2147483648
    %v4722 = vor.u32 1.1754944e-38, %v4721
    %v4723 = vsel %vm4720, %v4722, %v4718
    %v4724 = vmul.f32 1.0, %v4723
    %v4725 = vrcp.pop %v1277
    %v4726 = vmul.f32 %v1277, %v4725
    %v4727 = vsub.f32 1.0, %v4726
    %v4728 = vmul.f32 %v4725, %v4727
    %v4729 = vadd.f32 %v4725, %v4728
    %vm4730 = vweird.f32 %v1277
    %vm4731 = vweird.f32 %v4725
    %vm4732 = vmor %vm4730, %vm4731
    %v4733 = vsel %vm4732, %v4725, %v4729
    %v4734 = vand.u32 2147483647, %v1277
    %vm4735 = vcmp.eq.f32.partialorder %v4734, 8.507059e+37
    %v4736 = vand.u32 %v1277, 2147483648
    %v4737 = vor.u32 1.1754944e-38, %v4736
    %v4738 = vsel %vm4735, %v4737, %v4733
    %v4739 = vmul.f32 1.0, %v4738
    %v4740 = vrcp.pop %v1278
    %v4741 = vmul.f32 %v1278, %v4740
    %v4742 = vsub.f32 1.0, %v4741
    %v4743 = vmul.f32 %v4740, %v4742
    %v4744 = vadd.f32 %v4740, %v4743
    %vm4745 = vweird.f32 %v1278
    %vm4746 = vweird.f32 %v4740
    %vm4747 = vmor %vm4745, %vm4746
    %v4748 = vsel %vm4747, %v4740, %v4744
    %v4749 = vand.u32 2147483647, %v1278
    %vm4750 = vcmp.eq.f32.partialorder %v4749, 8.507059e+37
    %v4751 = vand.u32 %v1278, 2147483648
    %v4752 = vor.u32 1.1754944e-38, %v4751
    %v4753 = vsel %vm4750, %v4752, %v4748
    %v4754 = vmul.f32 1.0, %v4753
    %v4755 = vrcp.pop %v1279
    %v4756 = vmul.f32 %v1279, %v4755
    %v4757 = vsub.f32 1.0, %v4756
    %v4758 = vmul.f32 %v4755, %v4757
    %v4759 = vadd.f32 %v4755, %v4758
    %vm4760 = vweird.f32 %v1279
    %vm4761 = vweird.f32 %v4755
    %vm4762 = vmor %vm4760, %vm4761
    %v4763 = vsel %vm4762, %v4755, %v4759
    %v4764 = vand.u32 2147483647, %v1279
    %vm4765 = vcmp.eq.f32.partialorder %v4764, 8.507059e+37
    %v4766 = vand.u32 %v1279, 2147483648
    %v4767 = vor.u32 1.1754944e-38, %v4766
    %v4768 = vsel %vm4765, %v4767, %v4763
    %v4769 = vmul.f32 1.0, %v4768
    %v4770 = vrcp.pop %v1280
    %v4771 = vmul.f32 %v1280, %v4770
    %v4772 = vsub.f32 1.0, %v4771
    %v4773 = vmul.f32 %v4770, %v4772
    %v4774 = vadd.f32 %v4770, %v4773
    %vm4775 = vweird.f32 %v1280
    %vm4776 = vweird.f32 %v4770
    %vm4777 = vmor %vm4775, %vm4776
    %v4778 = vsel %vm4777, %v4770, %v4774
    %v4779 = vand.u32 2147483647, %v1280
    %vm4780 = vcmp.eq.f32.partialorder %v4779, 8.507059e+37
    %v4781 = vand.u32 %v1280, 2147483648
    %v4782 = vor.u32 1.1754944e-38, %v4781
    %v4783 = vsel %vm4780, %v4782, %v4778
    %v4784 = vmul.f32 1.0, %v4783
    %v4785 = vrcp.pop %v1281
    %v4786 = vmul.f32 %v1281, %v4785
    %v4787 = vsub.f32 1.0, %v4786
    %v4788 = vmul.f32 %v4785, %v4787
    %v4789 = vadd.f32 %v4785, %v4788
    %vm4790 = vweird.f32 %v1281
    %vm4791 = vweird.f32 %v4785
    %vm4792 = vmor %vm4790, %vm4791
    %v4793 = vsel %vm4792, %v4785, %v4789
    %v4794 = vand.u32 2147483647, %v1281
    %vm4795 = vcmp.eq.f32.partialorder %v4794, 8.507059e+37
    %v4796 = vand.u32 %v1281, 2147483648
    %v4797 = vor.u32 1.1754944e-38, %v4796
    %v4798 = vsel %vm4795, %v4797, %v4793
    %v4799 = vmul.f32 1.0, %v4798
    %v4800 = vrcp.pop %v1282
    %v4801 = vmul.f32 %v1282, %v4800
    %v4802 = vsub.f32 1.0, %v4801
    %v4803 = vmul.f32 %v4800, %v4802
    %v4804 = vadd.f32 %v4800, %v4803
    %vm4805 = vweird.f32 %v1282
    %vm4806 = vweird.f32 %v4800
    %vm4807 = vmor %vm4805, %vm4806
    %v4808 = vsel %vm4807, %v4800, %v4804
    %v4809 = vand.u32 2147483647, %v1282
    %vm4810 = vcmp.eq.f32.partialorder %v4809, 8.507059e+37
    %v4811 = vand.u32 %v1282, 2147483648
    %v4812 = vor.u32 1.1754944e-38, %v4811
    %v4813 = vsel %vm4810, %v4812, %v4808
    %v4814 = vmul.f32 1.0, %v4813
    %v4815 = vrcp.pop %v1283
    %v4816 = vmul.f32 %v1283, %v4815
    %v4817 = vsub.f32 1.0, %v4816
    %v4818 = vmul.f32 %v4815, %v4817
    %v4819 = vadd.f32 %v4815, %v4818
    %vm4820 = vweird.f32 %v1283
    %vm4821 = vweird.f32 %v4815
    %vm4822 = vmor %vm4820, %vm4821
    %v4823 = vsel %vm4822, %v4815, %v4819
    %v4824 = vand.u32 2147483647, %v1283
    %vm4825 = vcmp.eq.f32.partialorder %v4824, 8.507059e+37
    %v4826 = vand.u32 %v1283, 2147483648
    %v4827 = vor.u32 1.1754944e-38, %v4826
    %v4828 = vsel %vm4825, %v4827, %v4823
    %v4829 = vmul.f32 1.0, %v4828
    %v4830 = vrcp.pop %v1284
    %v4831 = vmul.f32 %v1284, %v4830
    %v4832 = vsub.f32 1.0, %v4831
    %v4833 = vmul.f32 %v4830, %v4832
    %v4834 = vadd.f32 %v4830, %v4833
    %vm4835 = vweird.f32 %v1284
    %vm4836 = vweird.f32 %v4830
    %vm4837 = vmor %vm4835, %vm4836
    %v4838 = vsel %vm4837, %v4830, %v4834
    %v4839 = vand.u32 2147483647, %v1284
    %vm4840 = vcmp.eq.f32.partialorder %v4839, 8.507059e+37
    %v4841 = vand.u32 %v1284, 2147483648
    %v4842 = vor.u32 1.1754944e-38, %v4841
    %v4843 = vsel %vm4840, %v4842, %v4838
    %v4844 = vmul.f32 1.0, %v4843
    %v4845 = vrcp.pop %v1285
    %v4846 = vmul.f32 %v1285, %v4845
    %v4847 = vsub.f32 1.0, %v4846
    %v4848 = vmul.f32 %v4845, %v4847
    %v4849 = vadd.f32 %v4845, %v4848
    %vm4850 = vweird.f32 %v1285
    %vm4851 = vweird.f32 %v4845
    %vm4852 = vmor %vm4850, %vm4851
    %v4853 = vsel %vm4852, %v4845, %v4849
    %v4854 = vand.u32 2147483647, %v1285
    %vm4855 = vcmp.eq.f32.partialorder %v4854, 8.507059e+37
    %v4856 = vand.u32 %v1285, 2147483648
    %v4857 = vor.u32 1.1754944e-38, %v4856
    %v4858 = vsel %vm4855, %v4857, %v4853
    %v4859 = vmul.f32 1.0, %v4858
    %v4860 = vrcp.pop %v1286
    %v4861 = vmul.f32 %v1286, %v4860
    %v4862 = vsub.f32 1.0, %v4861
    %v4863 = vmul.f32 %v4860, %v4862
    %v4864 = vadd.f32 %v4860, %v4863
    %vm4865 = vweird.f32 %v1286
    %vm4866 = vweird.f32 %v4860
    %vm4867 = vmor %vm4865, %vm4866
    %v4868 = vsel %vm4867, %v4860, %v4864
    %v4869 = vand.u32 2147483647, %v1286
    %vm4870 = vcmp.eq.f32.partialorder %v4869, 8.507059e+37
    %v4871 = vand.u32 %v1286, 2147483648
    %v4872 = vor.u32 1.1754944e-38, %v4871
    %v4873 = vsel %vm4870, %v4872, %v4868
    %v4874 = vmul.f32 1.0, %v4873
    %v4875 = vrcp.pop %v1287
    %v4876 = vmul.f32 %v1287, %v4875
    %v4877 = vsub.f32 1.0, %v4876
    %v4878 = vmul.f32 %v4875, %v4877
    %v4879 = vadd.f32 %v4875, %v4878
    %vm4880 = vweird.f32 %v1287
    %vm4881 = vweird.f32 %v4875
    %vm4882 = vmor %vm4880, %vm4881
    %v4883 = vsel %vm4882, %v4875, %v4879
    %v4884 = vand.u32 2147483647, %v1287
    %vm4885 = vcmp.eq.f32.partialorder %v4884, 8.507059e+37
    %v4886 = vand.u32 %v1287, 2147483648
    %v4887 = vor.u32 1.1754944e-38, %v4886
    %v4888 = vsel %vm4885, %v4887, %v4883
    %v4889 = vmul.f32 1.0, %v4888
    %v4890 = vrcp.pop %v1288
    %v4891 = vmul.f32 %v1288, %v4890
    %v4892 = vsub.f32 1.0, %v4891
    %v4893 = vmul.f32 %v4890, %v4892
    %v4894 = vadd.f32 %v4890, %v4893
    %vm4895 = vweird.f32 %v1288
    %vm4896 = vweird.f32 %v4890
    %vm4897 = vmor %vm4895, %vm4896
    %v4898 = vsel %vm4897, %v4890, %v4894
    %v4899 = vand.u32 2147483647, %v1288
    %vm4900 = vcmp.eq.f32.partialorder %v4899, 8.507059e+37
    %v4901 = vand.u32 %v1288, 2147483648
    %v4902 = vor.u32 1.1754944e-38, %v4901
    %v4903 = vsel %vm4900, %v4902, %v4898
    %v4904 = vmul.f32 1.0, %v4903
    %v4905 = vrcp.pop %v1289
    %v4906 = vmul.f32 %v1289, %v4905
    %v4907 = vsub.f32 1.0, %v4906
    %v4908 = vmul.f32 %v4905, %v4907
    %v4909 = vadd.f32 %v4905, %v4908
    %vm4910 = vweird.f32 %v1289
    %vm4911 = vweird.f32 %v4905
    %vm4912 = vmor %vm4910, %vm4911
    %v4913 = vsel %vm4912, %v4905, %v4909
    %v4914 = vand.u32 2147483647, %v1289
    %vm4915 = vcmp.eq.f32.partialorder %v4914, 8.507059e+37
    %v4916 = vand.u32 %v1289, 2147483648
    %v4917 = vor.u32 1.1754944e-38, %v4916
    %v4918 = vsel %vm4915, %v4917, %v4913
    %v4919 = vmul.f32 1.0, %v4918
    %v4920 = vrcp.pop %v1290
    %v4921 = vmul.f32 %v1290, %v4920
    %v4922 = vsub.f32 1.0, %v4921
    %v4923 = vmul.f32 %v4920, %v4922
    %v4924 = vadd.f32 %v4920, %v4923
    %vm4925 = vweird.f32 %v1290
    %vm4926 = vweird.f32 %v4920
    %vm4927 = vmor %vm4925, %vm4926
    %v4928 = vsel %vm4927, %v4920, %v4924
    %v4929 = vand.u32 2147483647, %v1290
    %vm4930 = vcmp.eq.f32.partialorder %v4929, 8.507059e+37
    %v4931 = vand.u32 %v1290, 2147483648
    %v4932 = vor.u32 1.1754944e-38, %v4931
    %v4933 = vsel %vm4930, %v4932, %v4928
    %v4934 = vmul.f32 1.0, %v4933
    %v4935 = vrcp.pop %v1291
    %v4936 = vmul.f32 %v1291, %v4935
    %v4937 = vsub.f32 1.0, %v4936
    %v4938 = vmul.f32 %v4935, %v4937
    %v4939 = vadd.f32 %v4935, %v4938
    %vm4940 = vweird.f32 %v1291
    %vm4941 = vweird.f32 %v4935
    %vm4942 = vmor %vm4940, %vm4941
    %v4943 = vsel %vm4942, %v4935, %v4939
    %v4944 = vand.u32 2147483647, %v1291
    %vm4945 = vcmp.eq.f32.partialorder %v4944, 8.507059e+37
    %v4946 = vand.u32 %v1291, 2147483648
    %v4947 = vor.u32 1.1754944e-38, %v4946
    %v4948 = vsel %vm4945, %v4947, %v4943
    %v4949 = vmul.f32 1.0, %v4948
    %v4950 = vrcp.pop %v1292
    %v4951 = vmul.f32 %v1292, %v4950
    %v4952 = vsub.f32 1.0, %v4951
    %v4953 = vmul.f32 %v4950, %v4952
    %v4954 = vadd.f32 %v4950, %v4953
    %vm4955 = vweird.f32 %v1292
    %vm4956 = vweird.f32 %v4950
    %vm4957 = vmor %vm4955, %vm4956
    %v4958 = vsel %vm4957, %v4950, %v4954
    %v4959 = vand.u32 2147483647, %v1292
    %vm4960 = vcmp.eq.f32.partialorder %v4959, 8.507059e+37
    %v4961 = vand.u32 %v1292, 2147483648
    %v4962 = vor.u32 1.1754944e-38, %v4961
    %v4963 = vsel %vm4960, %v4962, %v4958
    %v4964 = vmul.f32 1.0, %v4963
    %v4965 = vrcp.pop %v1293
    %v4966 = vmul.f32 %v1293, %v4965
    %v4967 = vsub.f32 1.0, %v4966
    %v4968 = vmul.f32 %v4965, %v4967
    %v4969 = vadd.f32 %v4965, %v4968
    %vm4970 = vweird.f32 %v1293
    %vm4971 = vweird.f32 %v4965
    %vm4972 = vmor %vm4970, %vm4971
    %v4973 = vsel %vm4972, %v4965, %v4969
    %v4974 = vand.u32 2147483647, %v1293
    %vm4975 = vcmp.eq.f32.partialorder %v4974, 8.507059e+37
    %v4976 = vand.u32 %v1293, 2147483648
    %v4977 = vor.u32 1.1754944e-38, %v4976
    %v4978 = vsel %vm4975, %v4977, %v4973
    %v4979 = vmul.f32 1.0, %v4978
    %v4980 = vrcp.pop %v1294
    %v4981 = vmul.f32 %v1294, %v4980
    %v4982 = vsub.f32 1.0, %v4981
    %v4983 = vmul.f32 %v4980, %v4982
    %v4984 = vadd.f32 %v4980, %v4983
    %vm4985 = vweird.f32 %v1294
    %vm4986 = vweird.f32 %v4980
    %vm4987 = vmor %vm4985, %vm4986
    %v4988 = vsel %vm4987, %v4980, %v4984
    %v4989 = vand.u32 2147483647, %v1294
    %vm4990 = vcmp.eq.f32.partialorder %v4989, 8.507059e+37
    %v4991 = vand.u32 %v1294, 2147483648
    %v4992 = vor.u32 1.1754944e-38, %v4991
    %v4993 = vsel %vm4990, %v4992, %v4988
    %v4994 = vmul.f32 1.0, %v4993
    %v4995 = vrcp.pop %v1295
    %v4996 = vmul.f32 %v1295, %v4995
    %v4997 = vsub.f32 1.0, %v4996
    %v4998 = vmul.f32 %v4995, %v4997
    %v4999 = vadd.f32 %v4995, %v4998
    %vm5000 = vweird.f32 %v1295
    %vm5001 = vweird.f32 %v4995
    %vm5002 = vmor %vm5000, %vm5001
    %v5003 = vsel %vm5002, %v4995, %v4999
    %v5004 = vand.u32 2147483647, %v1295
    %vm5005 = vcmp.eq.f32.partialorder %v5004, 8.507059e+37
    %v5006 = vand.u32 %v1295, 2147483648
    %v5007 = vor.u32 1.1754944e-38, %v5006
    %v5008 = vsel %vm5005, %v5007, %v5003
    %v5009 = vmul.f32 1.0, %v5008
    %v5010 = vrcp.pop %v1296
    %v5011 = vmul.f32 %v1296, %v5010
    %v5012 = vsub.f32 1.0, %v5011
    %v5013 = vmul.f32 %v5010, %v5012
    %v5014 = vadd.f32 %v5010, %v5013
    %vm5015 = vweird.f32 %v1296
    %vm5016 = vweird.f32 %v5010
    %vm5017 = vmor %vm5015, %vm5016
    %v5018 = vsel %vm5017, %v5010, %v5014
    %v5019 = vand.u32 2147483647, %v1296
    %vm5020 = vcmp.eq.f32.partialorder %v5019, 8.507059e+37
    %v5021 = vand.u32 %v1296, 2147483648
    %v5022 = vor.u32 1.1754944e-38, %v5021
    %v5023 = vsel %vm5020, %v5022, %v5018
    %v5024 = vmul.f32 1.0, %v5023
    %v5025 = vrcp.pop %v1297
    %v5026 = vmul.f32 %v1297, %v5025
    %v5027 = vsub.f32 1.0, %v5026
    %v5028 = vmul.f32 %v5025, %v5027
    %v5029 = vadd.f32 %v5025, %v5028
    %vm5030 = vweird.f32 %v1297
    %vm5031 = vweird.f32 %v5025
    %vm5032 = vmor %vm5030, %vm5031
    %v5033 = vsel %vm5032, %v5025, %v5029
    %v5034 = vand.u32 2147483647, %v1297
    %vm5035 = vcmp.eq.f32.partialorder %v5034, 8.507059e+37
    %v5036 = vand.u32 %v1297, 2147483648
    %v5037 = vor.u32 1.1754944e-38, %v5036
    %v5038 = vsel %vm5035, %v5037, %v5033
    %v5039 = vmul.f32 1.0, %v5038
    %v5040 = vrcp.pop %v1298
    %v5041 = vmul.f32 %v1298, %v5040
    %v5042 = vsub.f32 1.0, %v5041
    %v5043 = vmul.f32 %v5040, %v5042
    %v5044 = vadd.f32 %v5040, %v5043
    %vm5045 = vweird.f32 %v1298
    %vm5046 = vweird.f32 %v5040
    %vm5047 = vmor %vm5045, %vm5046
    %v5048 = vsel %vm5047, %v5040, %v5044
    %v5049 = vand.u32 2147483647, %v1298
    %vm5050 = vcmp.eq.f32.partialorder %v5049, 8.507059e+37
    %v5051 = vand.u32 %v1298, 2147483648
    %v5052 = vor.u32 1.1754944e-38, %v5051
    %v5053 = vsel %vm5050, %v5052, %v5048
    %v5054 = vmul.f32 1.0, %v5053
    %v5055 = vrcp.pop %v1299
    %v5056 = vmul.f32 %v1299, %v5055
    %v5057 = vsub.f32 1.0, %v5056
    %v5058 = vmul.f32 %v5055, %v5057
    %v5059 = vadd.f32 %v5055, %v5058
    %vm5060 = vweird.f32 %v1299
    %vm5061 = vweird.f32 %v5055
    %vm5062 = vmor %vm5060, %vm5061
    %v5063 = vsel %vm5062, %v5055, %v5059
    %v5064 = vand.u32 2147483647, %v1299
    %vm5065 = vcmp.eq.f32.partialorder %v5064, 8.507059e+37
    %v5066 = vand.u32 %v1299, 2147483648
    %v5067 = vor.u32 1.1754944e-38, %v5066
    %v5068 = vsel %vm5065, %v5067, %v5063
    %v5069 = vmul.f32 1.0, %v5068
    %v5070 = vrcp.pop %v1300
    %v5071 = vmul.f32 %v1300, %v5070
    %v5072 = vsub.f32 1.0, %v5071
    %v5073 = vmul.f32 %v5070, %v5072
    %v5074 = vadd.f32 %v5070, %v5073
    %vm5075 = vweird.f32 %v1300
    %vm5076 = vweird.f32 %v5070
    %vm5077 = vmor %vm5075, %vm5076
    %v5078 = vsel %vm5077, %v5070, %v5074
    %v5079 = vand.u32 2147483647, %v1300
    %vm5080 = vcmp.eq.f32.partialorder %v5079, 8.507059e+37
    %v5081 = vand.u32 %v1300, 2147483648
    %v5082 = vor.u32 1.1754944e-38, %v5081
    %v5083 = vsel %vm5080, %v5082, %v5078
    %v5084 = vmul.f32 1.0, %v5083
    %v5085 = vrcp.pop %v1301
    %v5086 = vmul.f32 %v1301, %v5085
    %v5087 = vsub.f32 1.0, %v5086
    %v5088 = vmul.f32 %v5085, %v5087
    %v5089 = vadd.f32 %v5085, %v5088
    %vm5090 = vweird.f32 %v1301
    %vm5091 = vweird.f32 %v5085
    %vm5092 = vmor %vm5090, %vm5091
    %v5093 = vsel %vm5092, %v5085, %v5089
    %v5094 = vand.u32 2147483647, %v1301
    %vm5095 = vcmp.eq.f32.partialorder %v5094, 8.507059e+37
    %v5096 = vand.u32 %v1301, 2147483648
    %v5097 = vor.u32 1.1754944e-38, %v5096
    %v5098 = vsel %vm5095, %v5097, %v5093
    %v5099 = vmul.f32 1.0, %v5098
    %v5100 = vrcp.pop %v1302
    %v5101 = vmul.f32 %v1302, %v5100
    %v5102 = vsub.f32 1.0, %v5101
    %v5103 = vmul.f32 %v5100, %v5102
    %v5104 = vadd.f32 %v5100, %v5103
    %vm5105 = vweird.f32 %v1302
    %vm5106 = vweird.f32 %v5100
    %vm5107 = vmor %vm5105, %vm5106
    %v5108 = vsel %vm5107, %v5100, %v5104
    %v5109 = vand.u32 2147483647, %v1302
    %vm5110 = vcmp.eq.f32.partialorder %v5109, 8.507059e+37
    %v5111 = vand.u32 %v1302, 2147483648
    %v5112 = vor.u32 1.1754944e-38, %v5111
    %v5113 = vsel %vm5110, %v5112, %v5108
    %v5114 = vmul.f32 1.0, %v5113
    %v5115 = vrcp.pop %v1303
    %v5116 = vmul.f32 %v1303, %v5115
    %v5117 = vsub.f32 1.0, %v5116
    %v5118 = vmul.f32 %v5115, %v5117
    %v5119 = vadd.f32 %v5115, %v5118
    %vm5120 = vweird.f32 %v1303
    %vm5121 = vweird.f32 %v5115
    %vm5122 = vmor %vm5120, %vm5121
    %v5123 = vsel %vm5122, %v5115, %v5119
    %v5124 = vand.u32 2147483647, %v1303
    %vm5125 = vcmp.eq.f32.partialorder %v5124, 8.507059e+37
    %v5126 = vand.u32 %v1303, 2147483648
    %v5127 = vor.u32 1.1754944e-38, %v5126
    %v5128 = vsel %vm5125, %v5127, %v5123
    %v5129 = vmul.f32 1.0, %v5128
    %v5130 = vrcp.pop %v1304
    %v5131 = vmul.f32 %v1304, %v5130
    %v5132 = vsub.f32 1.0, %v5131
    %v5133 = vmul.f32 %v5130, %v5132
    %v5134 = vadd.f32 %v5130, %v5133
    %vm5135 = vweird.f32 %v1304
    %vm5136 = vweird.f32 %v5130
    %vm5137 = vmor %vm5135, %vm5136
    %v5138 = vsel %vm5137, %v5130, %v5134
    %v5139 = vand.u32 2147483647, %v1304
    %vm5140 = vcmp.eq.f32.partialorder %v5139, 8.507059e+37
    %v5141 = vand.u32 %v1304, 2147483648
    %v5142 = vor.u32 1.1754944e-38, %v5141
    %v5143 = vsel %vm5140, %v5142, %v5138
    %v5144 = vmul.f32 1.0, %v5143
    %5145 = vst [vmem:[#allocation5] sm:$0xff] %v1319
    %5146 = vst [vmem:[#allocation5 + $0x8] sm:$0xff] %v1334
    %5147 = vst [vmem:[#allocation5 + $0x10] sm:$0xff] %v1349
    %5148 = vst [vmem:[#allocation5 + $0x18] sm:$0xff] %v1364
    %5149 = vst [vmem:[#allocation5 + $0x20] sm:$0xff] %v1379
    %5150 = vst [vmem:[#allocation5 + $0x28] sm:$0xff] %v1394
    %5151 = vst [vmem:[#allocation5 + $0x30] sm:$0xff] %v1409
    %5152 = vst [vmem:[#allocation5 + $0x38] sm:$0xff] %v1424
    %5153 = vst [vmem:[#allocation5 + $0x40] sm:$0xff] %v1439
    %5154 = vst [vmem:[#allocation5 + $0x48] sm:$0xff] %v1454
    %5155 = vst [vmem:[#allocation5 + $0x50] sm:$0xff] %v1469
    %5156 = vst [vmem:[#allocation5 + $0x58] sm:$0xff] %v1484
    %5157 = vst [vmem:[#allocation5 + $0x60] sm:$0xff] %v1499
    %5158 = vst [vmem:[#allocation5 + $0x68] sm:$0xff] %v1514
    %5159 = vst [vmem:[#allocation5 + $0x70] sm:$0xff] %v1529
    %5160 = vst [vmem:[#allocation5 + $0x78] sm:$0xff] %v1544
    %5161 = vst [vmem:[#allocation5 + $0x80] sm:$0xff] %v1559
    %5162 = vst [vmem:[#allocation5 + $0x88] sm:$0xff] %v1574
    %5163 = vst [vmem:[#allocation5 + $0x90] sm:$0xff] %v1589
    %5164 = vst [vmem:[#allocation5 + $0x98] sm:$0xff] %v1604
    %5165 = vst [vmem:[#allocation5 + $0xa0] sm:$0xff] %v1619
    %5166 = vst [vmem:[#allocation5 + $0xa8] sm:$0xff] %v1634
    %5167 = vst [vmem:[#allocation5 + $0xb0] sm:$0xff] %v1649
    %5168 = vst [vmem:[#allocation5 + $0xb8] sm:$0xff] %v1664
    %5169 = vst [vmem:[#allocation5 + $0xc0] sm:$0xff] %v1679
    %5170 = vst [vmem:[#allocation5 + $0xc8] sm:$0xff] %v1694
    %5171 = vst [vmem:[#allocation5 + $0xd0] sm:$0xff] %v1709
    %5172 = vst [vmem:[#allocation5 + $0xd8] sm:$0xff] %v1724
    %5173 = vst [vmem:[#allocation5 + $0xe0] sm:$0xff] %v1739
    %5174 = vst [vmem:[#allocation5 + $0xe8] sm:$0xff] %v1754
    %5175 = vst [vmem:[#allocation5 + $0xf0] sm:$0xff] %v1769
    %5176 = vst [vmem:[#allocation5 + $0xf8] sm:$0xff] %v1784
    %5177 = vst [vmem:[#allocation5 + $0x100] sm:$0xff] %v1799
    %5178 = vst [vmem:[#allocation5 + $0x108] sm:$0xff] %v1814
    %5179 = vst [vmem:[#allocation5 + $0x110] sm:$0xff] %v1829
    %5180 = vst [vmem:[#allocation5 + $0x118] sm:$0xff] %v1844
    %5181 = vst [vmem:[#allocation5 + $0x120] sm:$0xff] %v1859
    %5182 = vst [vmem:[#allocation5 + $0x128] sm:$0xff] %v1874
    %5183 = vst [vmem:[#allocation5 + $0x130] sm:$0xff] %v1889
    %5184 = vst [vmem:[#allocation5 + $0x138] sm:$0xff] %v1904
    %5185 = vst [vmem:[#allocation5 + $0x140] sm:$0xff] %v1919
    %5186 = vst [vmem:[#allocation5 + $0x148] sm:$0xff] %v1934
    %5187 = vst [vmem:[#allocation5 + $0x150] sm:$0xff] %v1949
    %5188 = vst [vmem:[#allocation5 + $0x158] sm:$0xff] %v1964
    %5189 = vst [vmem:[#allocation5 + $0x160] sm:$0xff] %v1979
    %5190 = vst [vmem:[#allocation5 + $0x168] sm:$0xff] %v1994
    %5191 = vst [vmem:[#allocation5 + $0x170] sm:$0xff] %v2009
    %5192 = vst [vmem:[#allocation5 + $0x178] sm:$0xff] %v2024
    %5193 = vst [vmem:[#allocation5 + $0x180] sm:$0xff] %v2039
    %5194 = vst [vmem:[#allocation5 + $0x188] sm:$0xff] %v2054
    %5195 = vst [vmem:[#allocation5 + $0x190] sm:$0xff] %v2069
    %5196 = vst [vmem:[#allocation5 + $0x198] sm:$0xff] %v2084
    %5197 = vst [vmem:[#allocation5 + $0x1a0] sm:$0xff] %v2099
    %5198 = vst [vmem:[#allocation5 + $0x1a8] sm:$0xff] %v2114
    %5199 = vst [vmem:[#allocation5 + $0x1b0] sm:$0xff] %v2129
    %5200 = vst [vmem:[#allocation5 + $0x1b8] sm:$0xff] %v2144
    %5201 = vst [vmem:[#allocation5 + $0x1c0] sm:$0xff] %v2159
    %5202 = vst [vmem:[#allocation5 + $0x1c8] sm:$0xff] %v2174
    %5203 = vst [vmem:[#allocation5 + $0x1d0] sm:$0xff] %v2189
    %5204 = vst [vmem:[#allocation5 + $0x1d8] sm:$0xff] %v2204
    %5205 = vst [vmem:[#allocation5 + $0x1e0] sm:$0xff] %v2219
    %5206 = vst [vmem:[#allocation5 + $0x1e8] sm:$0xff] %v2234
    %5207 = vst [vmem:[#allocation5 + $0x1f0] sm:$0xff] %v2249
    %5208 = vst [vmem:[#allocation5 + $0x1f8] sm:$0xff] %v2264
    %5209 = vst [vmem:[#allocation5 + $0x200] sm:$0xff] %v2279
    %5210 = vst [vmem:[#allocation5 + $0x208] sm:$0xff] %v2294
    %5211 = vst [vmem:[#allocation5 + $0x210] sm:$0xff] %v2309
    %5212 = vst [vmem:[#allocation5 + $0x218] sm:$0xff] %v2324
    %5213 = vst [vmem:[#allocation5 + $0x220] sm:$0xff] %v2339
    %5214 = vst [vmem:[#allocation5 + $0x228] sm:$0xff] %v2354
    %5215 = vst [vmem:[#allocation5 + $0x230] sm:$0xff] %v2369
    %5216 = vst [vmem:[#allocation5 + $0x238] sm:$0xff] %v2384
    %5217 = vst [vmem:[#allocation5 + $0x240] sm:$0xff] %v2399
    %5218 = vst [vmem:[#allocation5 + $0x248] sm:$0xff] %v2414
    %5219 = vst [vmem:[#allocation5 + $0x250] sm:$0xff] %v2429
    %5220 = vst [vmem:[#allocation5 + $0x258] sm:$0xff] %v2444
    %5221 = vst [vmem:[#allocation5 + $0x260] sm:$0xff] %v2459
    %5222 = vst [vmem:[#allocation5 + $0x268] sm:$0xff] %v2474
    %5223 = vst [vmem:[#allocation5 + $0x270] sm:$0xff] %v2489
    %5224 = vst [vmem:[#allocation5 + $0x278] sm:$0xff] %v2504
    %5225 = vst [vmem:[#allocation5 + $0x280] sm:$0xff] %v2519
    %5226 = vst [vmem:[#allocation5 + $0x288] sm:$0xff] %v2534
    %5227 = vst [vmem:[#allocation5 + $0x290] sm:$0xff] %v2549
    %5228 = vst [vmem:[#allocation5 + $0x298] sm:$0xff] %v2564
    %5229 = vst [vmem:[#allocation5 + $0x2a0] sm:$0xff] %v2579
    %5230 = vst [vmem:[#allocation5 + $0x2a8] sm:$0xff] %v2594
    %5231 = vst [vmem:[#allocation5 + $0x2b0] sm:$0xff] %v2609
    %5232 = vst [vmem:[#allocation5 + $0x2b8] sm:$0xff] %v2624
    %5233 = vst [vmem:[#allocation5 + $0x2c0] sm:$0xff] %v2639
    %5234 = vst [vmem:[#allocation5 + $0x2c8] sm:$0xff] %v2654
    %5235 = vst [vmem:[#allocation5 + $0x2d0] sm:$0xff] %v2669
    %5236 = vst [vmem:[#allocation5 + $0x2d8] sm:$0xff] %v2684
    %5237 = vst [vmem:[#allocation5 + $0x2e0] sm:$0xff] %v2699
    %5238 = vst [vmem:[#allocation5 + $0x2e8] sm:$0xff] %v2714
    %5239 = vst [vmem:[#allocation5 + $0x2f0] sm:$0xff] %v2729
    %5240 = vst [vmem:[#allocation5 + $0x2f8] sm:$0xff] %v2744
    %5241 = vst [vmem:[#allocation5 + $0x300] sm:$0xff] %v2759
    %5242 = vst [vmem:[#allocation5 + $0x308] sm:$0xff] %v2774
    %5243 = vst [vmem:[#allocation5 + $0x310] sm:$0xff] %v2789
    %5244 = vst [vmem:[#allocation5 + $0x318] sm:$0xff] %v2804
    %5245 = vst [vmem:[#allocation5 + $0x320] sm:$0xff] %v2819
    %5246 = vst [vmem:[#allocation5 + $0x328] sm:$0xff] %v2834
    %5247 = vst [vmem:[#allocation5 + $0x330] sm:$0xff] %v2849
    %5248 = vst [vmem:[#allocation5 + $0x338] sm:$0xff] %v2864
    %5249 = vst [vmem:[#allocation5 + $0x340] sm:$0xff] %v2879
    %5250 = vst [vmem:[#allocation5 + $0x348] sm:$0xff] %v2894
    %5251 = vst [vmem:[#allocation5 + $0x350] sm:$0xff] %v2909
    %5252 = vst [vmem:[#allocation5 + $0x358] sm:$0xff] %v2924
    %5253 = vst [vmem:[#allocation5 + $0x360] sm:$0xff] %v2939
    %5254 = vst [vmem:[#allocation5 + $0x368] sm:$0xff] %v2954
    %5255 = vst [vmem:[#allocation5 + $0x370] sm:$0xff] %v2969
    %5256 = vst [vmem:[#allocation5 + $0x378] sm:$0xff] %v2984
    %5257 = vst [vmem:[#allocation5 + $0x380] sm:$0xff] %v2999
    %5258 = vst [vmem:[#allocation5 + $0x388] sm:$0xff] %v3014
    %5259 = vst [vmem:[#allocation5 + $0x390] sm:$0xff] %v3029
    %5260 = vst [vmem:[#allocation5 + $0x398] sm:$0xff] %v3044
    %5261 = vst [vmem:[#allocation5 + $0x3a0] sm:$0xff] %v3059
    %5262 = vst [vmem:[#allocation5 + $0x3a8] sm:$0xff] %v3074
    %5263 = vst [vmem:[#allocation5 + $0x3b0] sm:$0xff] %v3089
    %5264 = vst [vmem:[#allocation5 + $0x3b8] sm:$0xff] %v3104
    %5265 = vst [vmem:[#allocation5 + $0x3c0] sm:$0xff] %v3119
    %5266 = vst [vmem:[#allocation5 + $0x3c8] sm:$0xff] %v3134
    %5267 = vst [vmem:[#allocation5 + $0x3d0] sm:$0xff] %v3149
    %5268 = vst [vmem:[#allocation5 + $0x3d8] sm:$0xff] %v3164
    %5269 = vst [vmem:[#allocation5 + $0x3e0] sm:$0xff] %v3179
    %5270 = vst [vmem:[#allocation5 + $0x3e8] sm:$0xff] %v3194
    %5271 = vst [vmem:[#allocation5 + $0x3f0] sm:$0xff] %v3209
    %5272 = vst [vmem:[#allocation5 + $0x3f8] sm:$0xff] %v3224
    %5273 = vst [vmem:[#allocation5 + $0x400] sm:$0xff] %v3239
    %5274 = vst [vmem:[#allocation5 + $0x408] sm:$0xff] %v3254
    %5275 = vst [vmem:[#allocation5 + $0x410] sm:$0xff] %v3269
    %5276 = vst [vmem:[#allocation5 + $0x418] sm:$0xff] %v3284
    %5277 = vst [vmem:[#allocation5 + $0x420] sm:$0xff] %v3299
    %5278 = vst [vmem:[#allocation5 + $0x428] sm:$0xff] %v3314
    %5279 = vst [vmem:[#allocation5 + $0x430] sm:$0xff] %v3329
    %5280 = vst [vmem:[#allocation5 + $0x438] sm:$0xff] %v3344
    %5281 = vst [vmem:[#allocation5 + $0x440] sm:$0xff] %v3359
    %5282 = vst [vmem:[#allocation5 + $0x448] sm:$0xff] %v3374
    %5283 = vst [vmem:[#allocation5 + $0x450] sm:$0xff] %v3389
    %5284 = vst [vmem:[#allocation5 + $0x458] sm:$0xff] %v3404
    %5285 = vst [vmem:[#allocation5 + $0x460] sm:$0xff] %v3419
    %5286 = vst [vmem:[#allocation5 + $0x468] sm:$0xff] %v3434
    %5287 = vst [vmem:[#allocation5 + $0x470] sm:$0xff] %v3449
    %5288 = vst [vmem:[#allocation5 + $0x478] sm:$0xff] %v3464
    %5289 = vst [vmem:[#allocation5 + $0x480] sm:$0xff] %v3479
    %5290 = vst [vmem:[#allocation5 + $0x488] sm:$0xff] %v3494
    %5291 = vst [vmem:[#allocation5 + $0x490] sm:$0xff] %v3509
    %5292 = vst [vmem:[#allocation5 + $0x498] sm:$0xff] %v3524
    %5293 = vst [vmem:[#allocation5 + $0x4a0] sm:$0xff] %v3539
    %5294 = vst [vmem:[#allocation5 + $0x4a8] sm:$0xff] %v3554
    %5295 = vst [vmem:[#allocation5 + $0x4b0] sm:$0xff] %v3569
    %5296 = vst [vmem:[#allocation5 + $0x4b8] sm:$0xff] %v3584
    %5297 = vst [vmem:[#allocation5 + $0x4c0] sm:$0xff] %v3599
    %5298 = vst [vmem:[#allocation5 + $0x4c8] sm:$0xff] %v3614
    %5299 = vst [vmem:[#allocation5 + $0x4d0] sm:$0xff] %v3629
    %5300 = vst [vmem:[#allocation5 + $0x4d8] sm:$0xff] %v3644
    %5301 = vst [vmem:[#allocation5 + $0x4e0] sm:$0xff] %v3659
    %5302 = vst [vmem:[#allocation5 + $0x4e8] sm:$0xff] %v3674
    %5303 = vst [vmem:[#allocation5 + $0x4f0] sm:$0xff] %v3689
    %5304 = vst [vmem:[#allocation5 + $0x4f8] sm:$0xff] %v3704
    %5305 = vst [vmem:[#allocation5 + $0x500] sm:$0xff] %v3719
    %5306 = vst [vmem:[#allocation5 + $0x508] sm:$0xff] %v3734
    %5307 = vst [vmem:[#allocation5 + $0x510] sm:$0xff] %v3749
    %5308 = vst [vmem:[#allocation5 + $0x518] sm:$0xff] %v3764
    %5309 = vst [vmem:[#allocation5 + $0x520] sm:$0xff] %v3779
    %5310 = vst [vmem:[#allocation5 + $0x528] sm:$0xff] %v3794
    %5311 = vst [vmem:[#allocation5 + $0x530] sm:$0xff] %v3809
    %5312 = vst [vmem:[#allocation5 + $0x538] sm:$0xff] %v3824
    %5313 = vst [vmem:[#allocation5 + $0x540] sm:$0xff] %v3839
    %5314 = vst [vmem:[#allocation5 + $0x548] sm:$0xff] %v3854
    %5315 = vst [vmem:[#allocation5 + $0x550] sm:$0xff] %v3869
    %5316 = vst [vmem:[#allocation5 + $0x558] sm:$0xff] %v3884
    %5317 = vst [vmem:[#allocation5 + $0x560] sm:$0xff] %v3899
    %5318 = vst [vmem:[#allocation5 + $0x568] sm:$0xff] %v3914
    %5319 = vst [vmem:[#allocation5 + $0x570] sm:$0xff] %v3929
    %5320 = vst [vmem:[#allocation5 + $0x578] sm:$0xff] %v3944
    %5321 = vst [vmem:[#allocation5 + $0x580] sm:$0xff] %v3959
    %5322 = vst [vmem:[#allocation5 + $0x588] sm:$0xff] %v3974
    %5323 = vst [vmem:[#allocation5 + $0x590] sm:$0xff] %v3989
    %5324 = vst [vmem:[#allocation5 + $0x598] sm:$0xff] %v4004
    %5325 = vst [vmem:[#allocation5 + $0x5a0] sm:$0xff] %v4019
    %5326 = vst [vmem:[#allocation5 + $0x5a8] sm:$0xff] %v4034
    %5327 = vst [vmem:[#allocation5 + $0x5b0] sm:$0xff] %v4049
    %5328 = vst [vmem:[#allocation5 + $0x5b8] sm:$0xff] %v4064
    %5329 = vst [vmem:[#allocation5 + $0x5c0] sm:$0xff] %v4079
    %5330 = vst [vmem:[#allocation5 + $0x5c8] sm:$0xff] %v4094
    %5331 = vst [vmem:[#allocation5 + $0x5d0] sm:$0xff] %v4109
    %5332 = vst [vmem:[#allocation5 + $0x5d8] sm:$0xff] %v4124
    %5333 = vst [vmem:[#allocation5 + $0x5e0] sm:$0xff] %v4139
    %5334 = vst [vmem:[#allocation5 + $0x5e8] sm:$0xff] %v4154
    %5335 = vst [vmem:[#allocation5 + $0x5f0] sm:$0xff] %v4169
    %5336 = vst [vmem:[#allocation5 + $0x5f8] sm:$0xff] %v4184
    %5337 = vst [vmem:[#allocation5 + $0x600] sm:$0xff] %v4199
    %5338 = vst [vmem:[#allocation5 + $0x608] sm:$0xff] %v4214
    %5339 = vst [vmem:[#allocation5 + $0x610] sm:$0xff] %v4229
    %5340 = vst [vmem:[#allocation5 + $0x618] sm:$0xff] %v4244
    %5341 = vst [vmem:[#allocation5 + $0x620] sm:$0xff] %v4259
    %5342 = vst [vmem:[#allocation5 + $0x628] sm:$0xff] %v4274
    %5343 = vst [vmem:[#allocation5 + $0x630] sm:$0xff] %v4289
    %5344 = vst [vmem:[#allocation5 + $0x638] sm:$0xff] %v4304
    %5345 = vst [vmem:[#allocation5 + $0x640] sm:$0xff] %v4319
    %5346 = vst [vmem:[#allocation5 + $0x648] sm:$0xff] %v4334
    %5347 = vst [vmem:[#allocation5 + $0x650] sm:$0xff] %v4349
    %5348 = vst [vmem:[#allocation5 + $0x658] sm:$0xff] %v4364
    %5349 = vst [vmem:[#allocation5 + $0x660] sm:$0xff] %v4379
    %5350 = vst [vmem:[#allocation5 + $0x668] sm:$0xff] %v4394
    %5351 = vst [vmem:[#allocation5 + $0x670] sm:$0xff] %v4409
    %5352 = vst [vmem:[#allocation5 + $0x678] sm:$0xff] %v4424
    %5353 = vst [vmem:[#allocation5 + $0x680] sm:$0xff] %v4439
    %5354 = vst [vmem:[#allocation5 + $0x688] sm:$0xff] %v4454
    %5355 = vst [vmem:[#allocation5 + $0x690] sm:$0xff] %v4469
    %5356 = vst [vmem:[#allocation5 + $0x698] sm:$0xff] %v4484
    %5357 = vst [vmem:[#allocation5 + $0x6a0] sm:$0xff] %v4499
    %5358 = vst [vmem:[#allocation5 + $0x6a8] sm:$0xff] %v4514
    %5359 = vst [vmem:[#allocation5 + $0x6b0] sm:$0xff] %v4529
    %5360 = vst [vmem:[#allocation5 + $0x6b8] sm:$0xff] %v4544
    %5361 = vst [vmem:[#allocation5 + $0x6c0] sm:$0xff] %v4559
    %5362 = vst [vmem:[#allocation5 + $0x6c8] sm:$0xff] %v4574
    %5363 = vst [vmem:[#allocation5 + $0x6d0] sm:$0xff] %v4589
    %5364 = vst [vmem:[#allocation5 + $0x6d8] sm:$0xff] %v4604
    %5365 = vst [vmem:[#allocation5 + $0x6e0] sm:$0xff] %v4619
    %5366 = vst [vmem:[#allocation5 + $0x6e8] sm:$0xff] %v4634
    %5367 = vst [vmem:[#allocation5 + $0x6f0] sm:$0xff] %v4649
    %5368 = vst [vmem:[#allocation5 + $0x6f8] sm:$0xff] %v4664
    %5369 = vst [vmem:[#allocation5 + $0x700] sm:$0xff] %v4679
    %5370 = vst [vmem:[#allocation5 + $0x708] sm:$0xff] %v4694
    %5371 = vst [vmem:[#allocation5 + $0x710] sm:$0xff] %v4709
    %5372 = vst [vmem:[#allocation5 + $0x718] sm:$0xff] %v4724
    %5373 = vst [vmem:[#allocation5 + $0x720] sm:$0xff] %v4739
    %5374 = vst [vmem:[#allocation5 + $0x728] sm:$0xff] %v4754
    %5375 = vst [vmem:[#allocation5 + $0x730] sm:$0xff] %v4769
    %5376 = vst [vmem:[#allocation5 + $0x738] sm:$0xff] %v4784
    %5377 = vst [vmem:[#allocation5 + $0x740] sm:$0xff] %v4799
    %5378 = vst [vmem:[#allocation5 + $0x748] sm:$0xff] %v4814
    %5379 = vst [vmem:[#allocation5 + $0x750] sm:$0xff] %v4829
    %5380 = vst [vmem:[#allocation5 + $0x758] sm:$0xff] %v4844
    %5381 = vst [vmem:[#allocation5 + $0x760] sm:$0xff] %v4859
    %5382 = vst [vmem:[#allocation5 + $0x768] sm:$0xff] %v4874
    %5383 = vst [vmem:[#allocation5 + $0x770] sm:$0xff] %v4889
    %5384 = vst [vmem:[#allocation5 + $0x778] sm:$0xff] %v4904
    %5385 = vst [vmem:[#allocation5 + $0x780] sm:$0xff] %v4919
    %5386 = vst [vmem:[#allocation5 + $0x788] sm:$0xff] %v4934
    %5387 = vst [vmem:[#allocation5 + $0x790] sm:$0xff] %v4949
    %5388 = vst [vmem:[#allocation5 + $0x798] sm:$0xff] %v4964
    %5389 = vst [vmem:[#allocation5 + $0x7a0] sm:$0xff] %v4979
    %5390 = vst [vmem:[#allocation5 + $0x7a8] sm:$0xff] %v4994
    %5391 = vst [vmem:[#allocation5 + $0x7b0] sm:$0xff] %v5009
    %5392 = vst [vmem:[#allocation5 + $0x7b8] sm:$0xff] %v5024
    %5393 = vst [vmem:[#allocation5 + $0x7c0] sm:$0xff] %v5039
    %5394 = vst [vmem:[#allocation5 + $0x7c8] sm:$0xff] %v5054
    %5395 = vst [vmem:[#allocation5 + $0x7d0] sm:$0xff] %v5069
    %5396 = vst [vmem:[#allocation5 + $0x7d8] sm:$0xff] %v5084
    %5397 = vst [vmem:[#allocation5 + $0x7e0] sm:$0xff] %v5099
    %5398 = vst [vmem:[#allocation5 + $0x7e8] sm:$0xff] %v5114
    %5399 = vst [vmem:[#allocation5 + $0x7f0] sm:$0xff] %v5129
    %5400 = vst [vmem:[#allocation5 + $0x7f8] sm:$0xff] %v5144
    // Predicated region
    $region10: #{tpu_custom_call.1} parent=1 // pred_check
      _
    $region11: #{tpu_custom_call.1} parent=1 // pred_check_branch
      %5402 = sbr.rel (0) target = $region13
    $region12: #{tpu_custom_call.1} parent=1 // pred_region
      %5404 = vsyncadd [#allocation4], 0
      %s5405 = sshll.u32 [#allocation5], 4
      %s5406 = int_to_ptr.vmem [resolvable:$true] %s5405
      %s5407 = sshll.u32 %s1, 4
      %s5408 = int_to_ptr.hbm [resolvable:$true] %s5407
      %5413 = dma.vmem_to_hbm [thread:$0]  %s5406, 32768, %s5408, [#allocation4], 1024, 1024, 64
    $region13: #{tpu_custom_call.1} parent=1 // pred_fallthru
      _
    // Predicated region
    $region14: #{tpu_custom_call.1} parent=1 // pred_check
      _
    $region15: #{tpu_custom_call.1} parent=1 // pred_check_branch
      %5415 = sbr.rel (0) target = $region17
    $region16: #{tpu_custom_call.1} parent=1 // pred_region
      %5417 = dma.done [#allocation4], 32768
    $region17: #{tpu_custom_call.1} parent=1 // pred_fallthru
      _
    %5418 = vsyncpa [#allocation3], 1
    %5419 = vsyncpa [#allocation4], 1

</llo_original>
